<compile_context>
chip_gen: v6e
topology: v6e:2x2x1
jax: 0.10.0
libtpu: 0.0.40
codegen_flags: <defaults>
</compile_context>

<pallas_src>
import functools
import math

import jax
import jax.numpy as jnp
import numpy as np
from jax.experimental import pallas as pl
from jax.experimental.pallas import tpu as pltpu

# Tap order t = (ky+1)*3 + (kx+1), matching the (kh, kw) flattening of weights.
_TAPS = tuple((ky, kx) for ky in (-1, 0, 1) for kx in (-1, 0, 1))


def _make_tap_masks(H, W):
    """(9, H*W) f32 {0,1} masks: mask[t, p] == 1 iff tap t at flattened spatial
    position p reads an in-bounds pixel (implements the conv's zero padding)."""
    P = H * W
    p = np.arange(P)
    h, w = p // W, p % W
    masks = np.zeros((9, P), dtype=np.float32)
    for t, (ky, kx) in enumerate(_TAPS):
        valid = (h + ky >= 0) & (h + ky < H) & (w + kx >= 0) & (w + kx < W)
        masks[t] = valid.astype(np.float32)
    return masks


def _residual_block_kernel(x_ref, w1_ref, b1_ref, w2_ref, b2_ref, masks_ref,
                           out_ref, *, C, H, W, tile, groups):
    """One grid step handles `groups` tiles of `tile` images (channel-major).

    x_ref     : (C, groups*tile, P) f32 VMEM, P = H*W (lane-dense last dim)
    w*_ref    : (9*C*C,) f32 SMEM, flat index o*9C + t*C + i  (t = kh*3 + kw)
    b*_ref    : (C,)     f32 SMEM
    masks_ref : (9, P)   f32 VMEM boundary masks per tap
    out_ref   : (C, groups*tile, P) f32 VMEM
    """
    P = H * W

    def conv3x3(chans, w_ref, b_ref):
        # out[o] = b[o] + sum_{t,i} w[o,t,i] * roll(chans[i], tap t) * mask[t]
        accs = [None] * C
        for t, (ky, kx) in enumerate(_TAPS):
            s = ky * W + kx
            mask = None if s == 0 else masks_ref[t:t + 1, :]        # (1, P)
            for i in range(C):
                if s == 0:
                    tap = chans[i]
                else:
                    # tap[:, p] = chans[i][:, (p + s) mod P]; the mask zeroes
                    # wrapped / out-of-image lanes (the conv's zero padding).
                    tap = pltpu.roll(chans[i], shift=(-s) % P, axis=1) * mask
                for o in range(C):
                    term = w_ref[o * 9 * C + t * C + i] * tap       # scalar*tile
                    if accs[o] is None:
                        accs[o] = term + b_ref[o]                   # bias-init
                    else:
                        accs[o] = accs[o] + term
        return accs

    # Loop over 8-image row groups: keeps the live working set at ~28 vregs
    # (f32 (8, 256) tiles) regardless of how large the per-step block is.
    for g in range(groups):
        r0 = g * tile
        xs = [x_ref[c, r0:r0 + tile, :] for c in range(C)]          # (tile, P)
        a0 = [jnp.maximum(v, 0.0) for v in xs]
        h1 = conv3x3(a0, w1_ref, b1_ref)
        a1 = [jnp.maximum(v, 0.0) for v in h1]
        h2 = conv3x3(a1, w2_ref, b2_ref)
        for c in range(C):
            out_ref[c, r0:r0 + tile, :] = h2[c] + xs[c]


def residual_block(x_nchw, w1, b1, w2, b2, *, tile=8, max_groups=4):
    """x_nchw: (N, C, H, W) f32; w*: (C, C, 3, 3) OIHW; b*: (C,). Returns NCHW."""
    N, C, H, W = x_nchw.shape
    P = H * W   # lane-dense when a multiple of 128; otherwise stores are masked.

    # Channel-major packing: (C, N_pad, P) so the batch fills the sublane axis.
    x3 = jnp.transpose(x_nchw.reshape(N, C, P), (1, 0, 2))
    n_pad = ((N + tile - 1) // tile) * tile
    if n_pad != N:
        x3 = jnp.pad(x3, ((0, 0), (0, n_pad - N), (0, 0)))

    total_tiles = n_pad // tile
    # Amortise per-step overhead with several tiles per step, but keep >= 2
    # parallel grid steps when possible so both v7x TensorCores get work.
    groups = max(1, min(max_groups, total_tiles // 2))
    while total_tiles % groups:
        groups -= 1
    b_step = tile * groups
    n_steps = total_tiles // groups

    # OIHW (o, i, kh, kw) -> flat [o*9C + (kh*3+kw)*C + i]  (SMEM scalar table).
    w1f = jnp.transpose(w1, (0, 2, 3, 1)).reshape(-1)
    w2f = jnp.transpose(w2, (0, 2, 3, 1)).reshape(-1)
    masks = jnp.asarray(_make_tap_masks(H, W))

    kernel = functools.partial(_residual_block_kernel, C=C, H=H, W=W,
                               tile=tile, groups=groups)
    out3 = pl.pallas_call(
        kernel,
        out_shape=jax.ShapeDtypeStruct((C, n_pad, P), jnp.float32),
        grid=(n_steps,),
        in_specs=[
            pl.BlockSpec((C, b_step, P), lambda n: (0, n, 0)),       # x block
            pl.BlockSpec(memory_space=pltpu.MemorySpace.SMEM),       # w1 scalars
            pl.BlockSpec(memory_space=pltpu.MemorySpace.SMEM),       # b1
            pl.BlockSpec(memory_space=pltpu.MemorySpace.SMEM),       # w2 scalars
            pl.BlockSpec(memory_space=pltpu.MemorySpace.SMEM),       # b2
            pl.BlockSpec((9, P), lambda n: (0, 0)),                  # tap masks
        ],
        out_specs=pl.BlockSpec((C, b_step, P), lambda n: (0, n, 0)),
        compiler_params=pltpu.CompilerParams(
            dimension_semantics=("parallel",),
            vmem_limit_bytes=32 * 1024 * 1024,
        ),
    )(x3, w1f, b1, w2f, b2, masks)

    out = out3[:, :N, :]
    return jnp.transpose(out, (1, 0, 2)).reshape(N, C, H, W)


def reference_residual_block(x, w1, b1, w2, b2):
    """Pure-JAX (XLA conv) reference in NCHW, matching the PyTorch module."""
    dn = jax.lax.conv_dimension_numbers(x.shape, w1.shape, ("NCHW", "OIHW", "NCHW"))

    def conv(a, w, b):
        y = jax.lax.conv_general_dilated(a, w, (1, 1), [(1, 1), (1, 1)],
                                         dimension_numbers=dn)
        return y + b[None, :, None, None]

    out = jnp.maximum(x, 0.0)
    out = conv(out, w1, b1)
    out = jnp.maximum(out, 0.0)
    out = conv(out, w2, b2)
    return out + x


if __name__ == "__main__":
    # Small shapes consistent with ResidualBlock(in_channels=4) on 16x16 maps.
    N, C, H, W = 2, 4, 16, 16

    key = jax.random.PRNGKey(0)
    kx, kw1, kb1, kw2, kb2 = jax.random.split(key, 5)

    # Deterministic init mimicking PyTorch Conv2d default (uniform +-1/sqrt(fan_in)).
    fan_in = C * 3 * 3
    bound = 1.0 / math.sqrt(fan_in)
    x = jax.random.normal(kx, (N, C, H, W), dtype=jnp.float32)
    w1 = jax.random.uniform(kw1, (C, C, 3, 3), jnp.float32, -bound, bound)
    b1 = jax.random.uniform(kb1, (C,), jnp.float32, -bound, bound)
    w2 = jax.random.uniform(kw2, (C, C, 3, 3), jnp.float32, -bound, bound)
    b2 = jax.random.uniform(kb2, (C,), jnp.float32, -bound, bound)

    out = jax.block_until_ready(residual_block(x, w1, b1, w2, b2))
    ref = jax.block_until_ready(reference_residual_block(x, w1, b1, w2, b2))

    assert out.shape == (N, C, H, W), out.shape
    assert out.dtype == jnp.float32
    assert jnp.allclose(out, ref, atol=1e-5, rtol=1e-5), float(jnp.max(jnp.abs(out - ref)))

    print("KERNEL_OK")
</pallas_src>

<mosaic_0001>
module attributes {stable_mosaic.version = 11 : i64} {
  func.func @_residual_block_kernel(%arg0: i32, %arg1: memref<4x8x256xf32, #tpu.memory_space<vmem>>, %arg2: memref<144xf32, #tpu.memory_space<smem>>, %arg3: memref<4xf32, #tpu.memory_space<smem>>, %arg4: memref<144xf32, #tpu.memory_space<smem>>, %arg5: memref<4xf32, #tpu.memory_space<smem>>, %arg6: memref<9x256xf32, #tpu.memory_space<vmem>>, %arg7: memref<4x8x256xf32, #tpu.memory_space<vmem>>) attributes {dimension_semantics = [#tpu.dimension_semantics<parallel>], iteration_bounds = array<i64: 1>, scalar_prefetch = 0 : i64, scratch_operands = 0 : i64, tpu.core_type = #tpu.core_type<tc>, window_params = [{transform_indices = @transform_0, window_bounds = array<i64: 4, 8, 256>}, {transform_indices = @transform_1, window_bounds = array<i64: 144>}, {transform_indices = @transform_2, window_bounds = array<i64: 4>}, {transform_indices = @transform_3, window_bounds = array<i64: 144>}, {transform_indices = @transform_4, window_bounds = array<i64: 4>}, {pipeline_mode = #tpu.pipeline_mode<synchronous>, transform_indices = @transform_5, window_bounds = array<i64: 9, 256>}, {transform_indices = @transform_6, window_bounds = array<i64: 4, 8, 256>}]} {
    %c0 = arith.constant 0 : index
    %c0_0 = arith.constant 0 : index
    %c0_1 = arith.constant 0 : index
    %0 = vector.load %arg1[%c0, %c0_0, %c0_1] : memref<4x8x256xf32, #tpu.memory_space<vmem>>, vector<1x8x256xf32>
    %1 = vector.shape_cast %0 : vector<1x8x256xf32> to vector<8x256xf32>
    %c1 = arith.constant 1 : index
    %c0_2 = arith.constant 0 : index
    %c0_3 = arith.constant 0 : index
    %2 = vector.load %arg1[%c1, %c0_2, %c0_3] : memref<4x8x256xf32, #tpu.memory_space<vmem>>, vector<1x8x256xf32>
    %3 = vector.shape_cast %2 : vector<1x8x256xf32> to vector<8x256xf32>
    %c2 = arith.constant 2 : index
    %c0_4 = arith.constant 0 : index
    %c0_5 = arith.constant 0 : index
    %4 = vector.load %arg1[%c2, %c0_4, %c0_5] : memref<4x8x256xf32, #tpu.memory_space<vmem>>, vector<1x8x256xf32>
    %5 = vector.shape_cast %4 : vector<1x8x256xf32> to vector<8x256xf32>
    %c3 = arith.constant 3 : index
    %c0_6 = arith.constant 0 : index
    %c0_7 = arith.constant 0 : index
    %6 = vector.load %arg1[%c3, %c0_6, %c0_7] : memref<4x8x256xf32, #tpu.memory_space<vmem>>, vector<1x8x256xf32>
    %7 = vector.shape_cast %6 : vector<1x8x256xf32> to vector<8x256xf32>
    %cst = arith.constant 0.000000e+00 : f32
    %8 = vector.broadcast %cst : f32 to vector<8x256xf32>
    %9 = arith.maximumf %1, %8 : vector<8x256xf32>
    %cst_8 = arith.constant 0.000000e+00 : f32
    %10 = vector.broadcast %cst_8 : f32 to vector<8x256xf32>
    %11 = arith.maximumf %3, %10 : vector<8x256xf32>
    %cst_9 = arith.constant 0.000000e+00 : f32
    %12 = vector.broadcast %cst_9 : f32 to vector<8x256xf32>
    %13 = arith.maximumf %5, %12 : vector<8x256xf32>
    %cst_10 = arith.constant 0.000000e+00 : f32
    %14 = vector.broadcast %cst_10 : f32 to vector<8x256xf32>
    %15 = arith.maximumf %7, %14 : vector<8x256xf32>
    %c0_11 = arith.constant 0 : index
    %c0_12 = arith.constant 0 : index
    %16 = vector.load %arg6[%c0_11, %c0_12] : memref<9x256xf32, #tpu.memory_space<vmem>>, vector<1x256xf32>
    %c17_i32 = arith.constant 17 : i32
    %17 = tpu.dynamic_rotate %9 by %c17_i32 dim 1 : vector<8x256xf32>, i32 -> vector<8x256xf32>
    %18 = vector.broadcast %16 : vector<1x256xf32> to vector<8x256xf32>
    %19 = arith.mulf %17, %18 : vector<8x256xf32>
    %c0_13 = arith.constant 0 : index
    %20 = memref.load %arg2[%c0_13] : memref<144xf32, #tpu.memory_space<smem>>
    %21 = vector.broadcast %20 : f32 to vector<8x256xf32>
    %22 = arith.mulf %21, %19 : vector<8x256xf32>
    %c0_14 = arith.constant 0 : index
    %23 = memref.load %arg3[%c0_14] : memref<4xf32, #tpu.memory_space<smem>>
    %24 = vector.broadcast %23 : f32 to vector<8x256xf32>
    %25 = arith.addf %22, %24 : vector<8x256xf32>
    %c36 = arith.constant 36 : index
    %26 = memref.load %arg2[%c36] : memref<144xf32, #tpu.memory_space<smem>>
    %27 = vector.broadcast %26 : f32 to vector<8x256xf32>
    %28 = arith.mulf %27, %19 : vector<8x256xf32>
    %c1_15 = arith.constant 1 : index
    %29 = memref.load %arg3[%c1_15] : memref<4xf32, #tpu.memory_space<smem>>
    %30 = vector.broadcast %29 : f32 to vector<8x256xf32>
    %31 = arith.addf %28, %30 : vector<8x256xf32>
    %c72 = arith.constant 72 : index
    %32 = memref.load %arg2[%c72] : memref<144xf32, #tpu.memory_space<smem>>
    %33 = vector.broadcast %32 : f32 to vector<8x256xf32>
    %34 = arith.mulf %33, %19 : vector<8x256xf32>
    %c2_16 = arith.constant 2 : index
    %35 = memref.load %arg3[%c2_16] : memref<4xf32, #tpu.memory_space<smem>>
    %36 = vector.broadcast %35 : f32 to vector<8x256xf32>
    %37 = arith.addf %34, %36 : vector<8x256xf32>
    %c108 = arith.constant 108 : index
    %38 = memref.load %arg2[%c108] : memref<144xf32, #tpu.memory_space<smem>>
    %39 = vector.broadcast %38 : f32 to vector<8x256xf32>
    %40 = arith.mulf %39, %19 : vector<8x256xf32>
    %c3_17 = arith.constant 3 : index
    %41 = memref.load %arg3[%c3_17] : memref<4xf32, #tpu.memory_space<smem>>
    %42 = vector.broadcast %41 : f32 to vector<8x256xf32>
    %43 = arith.addf %40, %42 : vector<8x256xf32>
    %c17_i32_18 = arith.constant 17 : i32
    %44 = tpu.dynamic_rotate %11 by %c17_i32_18 dim 1 : vector<8x256xf32>, i32 -> vector<8x256xf32>
    %45 = vector.broadcast %16 : vector<1x256xf32> to vector<8x256xf32>
    %46 = arith.mulf %44, %45 : vector<8x256xf32>
    %c1_19 = arith.constant 1 : index
    %47 = memref.load %arg2[%c1_19] : memref<144xf32, #tpu.memory_space<smem>>
    %48 = vector.broadcast %47 : f32 to vector<8x256xf32>
    %49 = arith.mulf %48, %46 : vector<8x256xf32>
    %50 = arith.addf %25, %49 : vector<8x256xf32>
    %c37 = arith.constant 37 : index
    %51 = memref.load %arg2[%c37] : memref<144xf32, #tpu.memory_space<smem>>
    %52 = vector.broadcast %51 : f32 to vector<8x256xf32>
    %53 = arith.mulf %52, %46 : vector<8x256xf32>
    %54 = arith.addf %31, %53 : vector<8x256xf32>
    %c73 = arith.constant 73 : index
    %55 = memref.load %arg2[%c73] : memref<144xf32, #tpu.memory_space<smem>>
    %56 = vector.broadcast %55 : f32 to vector<8x256xf32>
    %57 = arith.mulf %56, %46 : vector<8x256xf32>
    %58 = arith.addf %37, %57 : vector<8x256xf32>
    %c109 = arith.constant 109 : index
    %59 = memref.load %arg2[%c109] : memref<144xf32, #tpu.memory_space<smem>>
    %60 = vector.broadcast %59 : f32 to vector<8x256xf32>
    %61 = arith.mulf %60, %46 : vector<8x256xf32>
    %62 = arith.addf %43, %61 : vector<8x256xf32>
    %c17_i32_20 = arith.constant 17 : i32
    %63 = tpu.dynamic_rotate %13 by %c17_i32_20 dim 1 : vector<8x256xf32>, i32 -> vector<8x256xf32>
    %64 = vector.broadcast %16 : vector<1x256xf32> to vector<8x256xf32>
    %65 = arith.mulf %63, %64 : vector<8x256xf32>
    %c2_21 = arith.constant 2 : index
    %66 = memref.load %arg2[%c2_21] : memref<144xf32, #tpu.memory_space<smem>>
    %67 = vector.broadcast %66 : f32 to vector<8x256xf32>
    %68 = arith.mulf %67, %65 : vector<8x256xf32>
    %69 = arith.addf %50, %68 : vector<8x256xf32>
    %c38 = arith.constant 38 : index
    %70 = memref.load %arg2[%c38] : memref<144xf32, #tpu.memory_space<smem>>
    %71 = vector.broadcast %70 : f32 to vector<8x256xf32>
    %72 = arith.mulf %71, %65 : vector<8x256xf32>
    %73 = arith.addf %54, %72 : vector<8x256xf32>
    %c74 = arith.constant 74 : index
    %74 = memref.load %arg2[%c74] : memref<144xf32, #tpu.memory_space<smem>>
    %75 = vector.broadcast %74 : f32 to vector<8x256xf32>
    %76 = arith.mulf %75, %65 : vector<8x256xf32>
    %77 = arith.addf %58, %76 : vector<8x256xf32>
    %c110 = arith.constant 110 : index
    %78 = memref.load %arg2[%c110] : memref<144xf32, #tpu.memory_space<smem>>
    %79 = vector.broadcast %78 : f32 to vector<8x256xf32>
    %80 = arith.mulf %79, %65 : vector<8x256xf32>
    %81 = arith.addf %62, %80 : vector<8x256xf32>
    %c17_i32_22 = arith.constant 17 : i32
    %82 = tpu.dynamic_rotate %15 by %c17_i32_22 dim 1 : vector<8x256xf32>, i32 -> vector<8x256xf32>
    %83 = vector.broadcast %16 : vector<1x256xf32> to vector<8x256xf32>
    %84 = arith.mulf %82, %83 : vector<8x256xf32>
    %c3_23 = arith.constant 3 : index
    %85 = memref.load %arg2[%c3_23] : memref<144xf32, #tpu.memory_space<smem>>
    %86 = vector.broadcast %85 : f32 to vector<8x256xf32>
    %87 = arith.mulf %86, %84 : vector<8x256xf32>
    %88 = arith.addf %69, %87 : vector<8x256xf32>
    %c39 = arith.constant 39 : index
    %89 = memref.load %arg2[%c39] : memref<144xf32, #tpu.memory_space<smem>>
    %90 = vector.broadcast %89 : f32 to vector<8x256xf32>
    %91 = arith.mulf %90, %84 : vector<8x256xf32>
    %92 = arith.addf %73, %91 : vector<8x256xf32>
    %c75 = arith.constant 75 : index
    %93 = memref.load %arg2[%c75] : memref<144xf32, #tpu.memory_space<smem>>
    %94 = vector.broadcast %93 : f32 to vector<8x256xf32>
    %95 = arith.mulf %94, %84 : vector<8x256xf32>
    %96 = arith.addf %77, %95 : vector<8x256xf32>
    %c111 = arith.constant 111 : index
    %97 = memref.load %arg2[%c111] : memref<144xf32, #tpu.memory_space<smem>>
    %98 = vector.broadcast %97 : f32 to vector<8x256xf32>
    %99 = arith.mulf %98, %84 : vector<8x256xf32>
    %100 = arith.addf %81, %99 : vector<8x256xf32>
    %c1_24 = arith.constant 1 : index
    %c0_25 = arith.constant 0 : index
    %101 = vector.load %arg6[%c1_24, %c0_25] : memref<9x256xf32, #tpu.memory_space<vmem>>, vector<1x256xf32>
    %c16_i32 = arith.constant 16 : i32
    %102 = tpu.dynamic_rotate %9 by %c16_i32 dim 1 : vector<8x256xf32>, i32 -> vector<8x256xf32>
    %103 = vector.broadcast %101 : vector<1x256xf32> to vector<8x256xf32>
    %104 = arith.mulf %102, %103 : vector<8x256xf32>
    %c4 = arith.constant 4 : index
    %105 = memref.load %arg2[%c4] : memref<144xf32, #tpu.memory_space<smem>>
    %106 = vector.broadcast %105 : f32 to vector<8x256xf32>
    %107 = arith.mulf %106, %104 : vector<8x256xf32>
    %108 = arith.addf %88, %107 : vector<8x256xf32>
    %c40 = arith.constant 40 : index
    %109 = memref.load %arg2[%c40] : memref<144xf32, #tpu.memory_space<smem>>
    %110 = vector.broadcast %109 : f32 to vector<8x256xf32>
    %111 = arith.mulf %110, %104 : vector<8x256xf32>
    %112 = arith.addf %92, %111 : vector<8x256xf32>
    %c76 = arith.constant 76 : index
    %113 = memref.load %arg2[%c76] : memref<144xf32, #tpu.memory_space<smem>>
    %114 = vector.broadcast %113 : f32 to vector<8x256xf32>
    %115 = arith.mulf %114, %104 : vector<8x256xf32>
    %116 = arith.addf %96, %115 : vector<8x256xf32>
    %c112 = arith.constant 112 : index
    %117 = memref.load %arg2[%c112] : memref<144xf32, #tpu.memory_space<smem>>
    %118 = vector.broadcast %117 : f32 to vector<8x256xf32>
    %119 = arith.mulf %118, %104 : vector<8x256xf32>
    %120 = arith.addf %100, %119 : vector<8x256xf32>
    %c16_i32_26 = arith.constant 16 : i32
    %121 = tpu.dynamic_rotate %11 by %c16_i32_26 dim 1 : vector<8x256xf32>, i32 -> vector<8x256xf32>
    %122 = vector.broadcast %101 : vector<1x256xf32> to vector<8x256xf32>
    %123 = arith.mulf %121, %122 : vector<8x256xf32>
    %c5 = arith.constant 5 : index
    %124 = memref.load %arg2[%c5] : memref<144xf32, #tpu.memory_space<smem>>
    %125 = vector.broadcast %124 : f32 to vector<8x256xf32>
    %126 = arith.mulf %125, %123 : vector<8x256xf32>
    %127 = arith.addf %108, %126 : vector<8x256xf32>
    %c41 = arith.constant 41 : index
    %128 = memref.load %arg2[%c41] : memref<144xf32, #tpu.memory_space<smem>>
    %129 = vector.broadcast %128 : f32 to vector<8x256xf32>
    %130 = arith.mulf %129, %123 : vector<8x256xf32>
    %131 = arith.addf %112, %130 : vector<8x256xf32>
    %c77 = arith.constant 77 : index
    %132 = memref.load %arg2[%c77] : memref<144xf32, #tpu.memory_space<smem>>
    %133 = vector.broadcast %132 : f32 to vector<8x256xf32>
    %134 = arith.mulf %133, %123 : vector<8x256xf32>
    %135 = arith.addf %116, %134 : vector<8x256xf32>
    %c113 = arith.constant 113 : index
    %136 = memref.load %arg2[%c113] : memref<144xf32, #tpu.memory_space<smem>>
    %137 = vector.broadcast %136 : f32 to vector<8x256xf32>
    %138 = arith.mulf %137, %123 : vector<8x256xf32>
    %139 = arith.addf %120, %138 : vector<8x256xf32>
    %c16_i32_27 = arith.constant 16 : i32
    %140 = tpu.dynamic_rotate %13 by %c16_i32_27 dim 1 : vector<8x256xf32>, i32 -> vector<8x256xf32>
    %141 = vector.broadcast %101 : vector<1x256xf32> to vector<8x256xf32>
    %142 = arith.mulf %140, %141 : vector<8x256xf32>
    %c6 = arith.constant 6 : index
    %143 = memref.load %arg2[%c6] : memref<144xf32, #tpu.memory_space<smem>>
    %144 = vector.broadcast %143 : f32 to vector<8x256xf32>
    %145 = arith.mulf %144, %142 : vector<8x256xf32>
    %146 = arith.addf %127, %145 : vector<8x256xf32>
    %c42 = arith.constant 42 : index
    %147 = memref.load %arg2[%c42] : memref<144xf32, #tpu.memory_space<smem>>
    %148 = vector.broadcast %147 : f32 to vector<8x256xf32>
    %149 = arith.mulf %148, %142 : vector<8x256xf32>
    %150 = arith.addf %131, %149 : vector<8x256xf32>
    %c78 = arith.constant 78 : index
    %151 = memref.load %arg2[%c78] : memref<144xf32, #tpu.memory_space<smem>>
    %152 = vector.broadcast %151 : f32 to vector<8x256xf32>
    %153 = arith.mulf %152, %142 : vector<8x256xf32>
    %154 = arith.addf %135, %153 : vector<8x256xf32>
    %c114 = arith.constant 114 : index
    %155 = memref.load %arg2[%c114] : memref<144xf32, #tpu.memory_space<smem>>
    %156 = vector.broadcast %155 : f32 to vector<8x256xf32>
    %157 = arith.mulf %156, %142 : vector<8x256xf32>
    %158 = arith.addf %139, %157 : vector<8x256xf32>
    %c16_i32_28 = arith.constant 16 : i32
    %159 = tpu.dynamic_rotate %15 by %c16_i32_28 dim 1 : vector<8x256xf32>, i32 -> vector<8x256xf32>
    %160 = vector.broadcast %101 : vector<1x256xf32> to vector<8x256xf32>
    %161 = arith.mulf %159, %160 : vector<8x256xf32>
    %c7 = arith.constant 7 : index
    %162 = memref.load %arg2[%c7] : memref<144xf32, #tpu.memory_space<smem>>
    %163 = vector.broadcast %162 : f32 to vector<8x256xf32>
    %164 = arith.mulf %163, %161 : vector<8x256xf32>
    %165 = arith.addf %146, %164 : vector<8x256xf32>
    %c43 = arith.constant 43 : index
    %166 = memref.load %arg2[%c43] : memref<144xf32, #tpu.memory_space<smem>>
    %167 = vector.broadcast %166 : f32 to vector<8x256xf32>
    %168 = arith.mulf %167, %161 : vector<8x256xf32>
    %169 = arith.addf %150, %168 : vector<8x256xf32>
    %c79 = arith.constant 79 : index
    %170 = memref.load %arg2[%c79] : memref<144xf32, #tpu.memory_space<smem>>
    %171 = vector.broadcast %170 : f32 to vector<8x256xf32>
    %172 = arith.mulf %171, %161 : vector<8x256xf32>
    %173 = arith.addf %154, %172 : vector<8x256xf32>
    %c115 = arith.constant 115 : index
    %174 = memref.load %arg2[%c115] : memref<144xf32, #tpu.memory_space<smem>>
    %175 = vector.broadcast %174 : f32 to vector<8x256xf32>
    %176 = arith.mulf %175, %161 : vector<8x256xf32>
    %177 = arith.addf %158, %176 : vector<8x256xf32>
    %c2_29 = arith.constant 2 : index
    %c0_30 = arith.constant 0 : index
    %178 = vector.load %arg6[%c2_29, %c0_30] : memref<9x256xf32, #tpu.memory_space<vmem>>, vector<1x256xf32>
    %c15_i32 = arith.constant 15 : i32
    %179 = tpu.dynamic_rotate %9 by %c15_i32 dim 1 : vector<8x256xf32>, i32 -> vector<8x256xf32>
    %180 = vector.broadcast %178 : vector<1x256xf32> to vector<8x256xf32>
    %181 = arith.mulf %179, %180 : vector<8x256xf32>
    %c8 = arith.constant 8 : index
    %182 = memref.load %arg2[%c8] : memref<144xf32, #tpu.memory_space<smem>>
    %183 = vector.broadcast %182 : f32 to vector<8x256xf32>
    %184 = arith.mulf %183, %181 : vector<8x256xf32>
    %185 = arith.addf %165, %184 : vector<8x256xf32>
    %c44 = arith.constant 44 : index
    %186 = memref.load %arg2[%c44] : memref<144xf32, #tpu.memory_space<smem>>
    %187 = vector.broadcast %186 : f32 to vector<8x256xf32>
    %188 = arith.mulf %187, %181 : vector<8x256xf32>
    %189 = arith.addf %169, %188 : vector<8x256xf32>
    %c80 = arith.constant 80 : index
    %190 = memref.load %arg2[%c80] : memref<144xf32, #tpu.memory_space<smem>>
    %191 = vector.broadcast %190 : f32 to vector<8x256xf32>
    %192 = arith.mulf %191, %181 : vector<8x256xf32>
    %193 = arith.addf %173, %192 : vector<8x256xf32>
    %c116 = arith.constant 116 : index
    %194 = memref.load %arg2[%c116] : memref<144xf32, #tpu.memory_space<smem>>
    %195 = vector.broadcast %194 : f32 to vector<8x256xf32>
    %196 = arith.mulf %195, %181 : vector<8x256xf32>
    %197 = arith.addf %177, %196 : vector<8x256xf32>
    %c15_i32_31 = arith.constant 15 : i32
    %198 = tpu.dynamic_rotate %11 by %c15_i32_31 dim 1 : vector<8x256xf32>, i32 -> vector<8x256xf32>
    %199 = vector.broadcast %178 : vector<1x256xf32> to vector<8x256xf32>
    %200 = arith.mulf %198, %199 : vector<8x256xf32>
    %c9 = arith.constant 9 : index
    %201 = memref.load %arg2[%c9] : memref<144xf32, #tpu.memory_space<smem>>
    %202 = vector.broadcast %201 : f32 to vector<8x256xf32>
    %203 = arith.mulf %202, %200 : vector<8x256xf32>
    %204 = arith.addf %185, %203 : vector<8x256xf32>
    %c45 = arith.constant 45 : index
    %205 = memref.load %arg2[%c45] : memref<144xf32, #tpu.memory_space<smem>>
    %206 = vector.broadcast %205 : f32 to vector<8x256xf32>
    %207 = arith.mulf %206, %200 : vector<8x256xf32>
    %208 = arith.addf %189, %207 : vector<8x256xf32>
    %c81 = arith.constant 81 : index
    %209 = memref.load %arg2[%c81] : memref<144xf32, #tpu.memory_space<smem>>
    %210 = vector.broadcast %209 : f32 to vector<8x256xf32>
    %211 = arith.mulf %210, %200 : vector<8x256xf32>
    %212 = arith.addf %193, %211 : vector<8x256xf32>
    %c117 = arith.constant 117 : index
    %213 = memref.load %arg2[%c117] : memref<144xf32, #tpu.memory_space<smem>>
    %214 = vector.broadcast %213 : f32 to vector<8x256xf32>
    %215 = arith.mulf %214, %200 : vector<8x256xf32>
    %216 = arith.addf %197, %215 : vector<8x256xf32>
    %c15_i32_32 = arith.constant 15 : i32
    %217 = tpu.dynamic_rotate %13 by %c15_i32_32 dim 1 : vector<8x256xf32>, i32 -> vector<8x256xf32>
    %218 = vector.broadcast %178 : vector<1x256xf32> to vector<8x256xf32>
    %219 = arith.mulf %217, %218 : vector<8x256xf32>
    %c10 = arith.constant 10 : index
    %220 = memref.load %arg2[%c10] : memref<144xf32, #tpu.memory_space<smem>>
    %221 = vector.broadcast %220 : f32 to vector<8x256xf32>
    %222 = arith.mulf %221, %219 : vector<8x256xf32>
    %223 = arith.addf %204, %222 : vector<8x256xf32>
    %c46 = arith.constant 46 : index
    %224 = memref.load %arg2[%c46] : memref<144xf32, #tpu.memory_space<smem>>
    %225 = vector.broadcast %224 : f32 to vector<8x256xf32>
    %226 = arith.mulf %225, %219 : vector<8x256xf32>
    %227 = arith.addf %208, %226 : vector<8x256xf32>
    %c82 = arith.constant 82 : index
    %228 = memref.load %arg2[%c82] : memref<144xf32, #tpu.memory_space<smem>>
    %229 = vector.broadcast %228 : f32 to vector<8x256xf32>
    %230 = arith.mulf %229, %219 : vector<8x256xf32>
    %231 = arith.addf %212, %230 : vector<8x256xf32>
    %c118 = arith.constant 118 : index
    %232 = memref.load %arg2[%c118] : memref<144xf32, #tpu.memory_space<smem>>
    %233 = vector.broadcast %232 : f32 to vector<8x256xf32>
    %234 = arith.mulf %233, %219 : vector<8x256xf32>
    %235 = arith.addf %216, %234 : vector<8x256xf32>
    %c15_i32_33 = arith.constant 15 : i32
    %236 = tpu.dynamic_rotate %15 by %c15_i32_33 dim 1 : vector<8x256xf32>, i32 -> vector<8x256xf32>
    %237 = vector.broadcast %178 : vector<1x256xf32> to vector<8x256xf32>
    %238 = arith.mulf %236, %237 : vector<8x256xf32>
    %c11 = arith.constant 11 : index
    %239 = memref.load %arg2[%c11] : memref<144xf32, #tpu.memory_space<smem>>
    %240 = vector.broadcast %239 : f32 to vector<8x256xf32>
    %241 = arith.mulf %240, %238 : vector<8x256xf32>
    %242 = arith.addf %223, %241 : vector<8x256xf32>
    %c47 = arith.constant 47 : index
    %243 = memref.load %arg2[%c47] : memref<144xf32, #tpu.memory_space<smem>>
    %244 = vector.broadcast %243 : f32 to vector<8x256xf32>
    %245 = arith.mulf %244, %238 : vector<8x256xf32>
    %246 = arith.addf %227, %245 : vector<8x256xf32>
    %c83 = arith.constant 83 : index
    %247 = memref.load %arg2[%c83] : memref<144xf32, #tpu.memory_space<smem>>
    %248 = vector.broadcast %247 : f32 to vector<8x256xf32>
    %249 = arith.mulf %248, %238 : vector<8x256xf32>
    %250 = arith.addf %231, %249 : vector<8x256xf32>
    %c119 = arith.constant 119 : index
    %251 = memref.load %arg2[%c119] : memref<144xf32, #tpu.memory_space<smem>>
    %252 = vector.broadcast %251 : f32 to vector<8x256xf32>
    %253 = arith.mulf %252, %238 : vector<8x256xf32>
    %254 = arith.addf %235, %253 : vector<8x256xf32>
    %c3_34 = arith.constant 3 : index
    %c0_35 = arith.constant 0 : index
    %255 = vector.load %arg6[%c3_34, %c0_35] : memref<9x256xf32, #tpu.memory_space<vmem>>, vector<1x256xf32>
    %c1_i32 = arith.constant 1 : i32
    %256 = tpu.dynamic_rotate %9 by %c1_i32 dim 1 : vector<8x256xf32>, i32 -> vector<8x256xf32>
    %257 = vector.broadcast %255 : vector<1x256xf32> to vector<8x256xf32>
    %258 = arith.mulf %256, %257 : vector<8x256xf32>
    %c12 = arith.constant 12 : index
    %259 = memref.load %arg2[%c12] : memref<144xf32, #tpu.memory_space<smem>>
    %260 = vector.broadcast %259 : f32 to vector<8x256xf32>
    %261 = arith.mulf %260, %258 : vector<8x256xf32>
    %262 = arith.addf %242, %261 : vector<8x256xf32>
    %c48 = arith.constant 48 : index
    %263 = memref.load %arg2[%c48] : memref<144xf32, #tpu.memory_space<smem>>
    %264 = vector.broadcast %263 : f32 to vector<8x256xf32>
    %265 = arith.mulf %264, %258 : vector<8x256xf32>
    %266 = arith.addf %246, %265 : vector<8x256xf32>
    %c84 = arith.constant 84 : index
    %267 = memref.load %arg2[%c84] : memref<144xf32, #tpu.memory_space<smem>>
    %268 = vector.broadcast %267 : f32 to vector<8x256xf32>
    %269 = arith.mulf %268, %258 : vector<8x256xf32>
    %270 = arith.addf %250, %269 : vector<8x256xf32>
    %c120 = arith.constant 120 : index
    %271 = memref.load %arg2[%c120] : memref<144xf32, #tpu.memory_space<smem>>
    %272 = vector.broadcast %271 : f32 to vector<8x256xf32>
    %273 = arith.mulf %272, %258 : vector<8x256xf32>
    %274 = arith.addf %254, %273 : vector<8x256xf32>
    %c1_i32_36 = arith.constant 1 : i32
    %275 = tpu.dynamic_rotate %11 by %c1_i32_36 dim 1 : vector<8x256xf32>, i32 -> vector<8x256xf32>
    %276 = vector.broadcast %255 : vector<1x256xf32> to vector<8x256xf32>
    %277 = arith.mulf %275, %276 : vector<8x256xf32>
    %c13 = arith.constant 13 : index
    %278 = memref.load %arg2[%c13] : memref<144xf32, #tpu.memory_space<smem>>
    %279 = vector.broadcast %278 : f32 to vector<8x256xf32>
    %280 = arith.mulf %279, %277 : vector<8x256xf32>
    %281 = arith.addf %262, %280 : vector<8x256xf32>
    %c49 = arith.constant 49 : index
    %282 = memref.load %arg2[%c49] : memref<144xf32, #tpu.memory_space<smem>>
    %283 = vector.broadcast %282 : f32 to vector<8x256xf32>
    %284 = arith.mulf %283, %277 : vector<8x256xf32>
    %285 = arith.addf %266, %284 : vector<8x256xf32>
    %c85 = arith.constant 85 : index
    %286 = memref.load %arg2[%c85] : memref<144xf32, #tpu.memory_space<smem>>
    %287 = vector.broadcast %286 : f32 to vector<8x256xf32>
    %288 = arith.mulf %287, %277 : vector<8x256xf32>
    %289 = arith.addf %270, %288 : vector<8x256xf32>
    %c121 = arith.constant 121 : index
    %290 = memref.load %arg2[%c121] : memref<144xf32, #tpu.memory_space<smem>>
    %291 = vector.broadcast %290 : f32 to vector<8x256xf32>
    %292 = arith.mulf %291, %277 : vector<8x256xf32>
    %293 = arith.addf %274, %292 : vector<8x256xf32>
    %c1_i32_37 = arith.constant 1 : i32
    %294 = tpu.dynamic_rotate %13 by %c1_i32_37 dim 1 : vector<8x256xf32>, i32 -> vector<8x256xf32>
    %295 = vector.broadcast %255 : vector<1x256xf32> to vector<8x256xf32>
    %296 = arith.mulf %294, %295 : vector<8x256xf32>
    %c14 = arith.constant 14 : index
    %297 = memref.load %arg2[%c14] : memref<144xf32, #tpu.memory_space<smem>>
    %298 = vector.broadcast %297 : f32 to vector<8x256xf32>
    %299 = arith.mulf %298, %296 : vector<8x256xf32>
    %300 = arith.addf %281, %299 : vector<8x256xf32>
    %c50 = arith.constant 50 : index
    %301 = memref.load %arg2[%c50] : memref<144xf32, #tpu.memory_space<smem>>
    %302 = vector.broadcast %301 : f32 to vector<8x256xf32>
    %303 = arith.mulf %302, %296 : vector<8x256xf32>
    %304 = arith.addf %285, %303 : vector<8x256xf32>
    %c86 = arith.constant 86 : index
    %305 = memref.load %arg2[%c86] : memref<144xf32, #tpu.memory_space<smem>>
    %306 = vector.broadcast %305 : f32 to vector<8x256xf32>
    %307 = arith.mulf %306, %296 : vector<8x256xf32>
    %308 = arith.addf %289, %307 : vector<8x256xf32>
    %c122 = arith.constant 122 : index
    %309 = memref.load %arg2[%c122] : memref<144xf32, #tpu.memory_space<smem>>
    %310 = vector.broadcast %309 : f32 to vector<8x256xf32>
    %311 = arith.mulf %310, %296 : vector<8x256xf32>
    %312 = arith.addf %293, %311 : vector<8x256xf32>
    %c1_i32_38 = arith.constant 1 : i32
    %313 = tpu.dynamic_rotate %15 by %c1_i32_38 dim 1 : vector<8x256xf32>, i32 -> vector<8x256xf32>
    %314 = vector.broadcast %255 : vector<1x256xf32> to vector<8x256xf32>
    %315 = arith.mulf %313, %314 : vector<8x256xf32>
    %c15 = arith.constant 15 : index
    %316 = memref.load %arg2[%c15] : memref<144xf32, #tpu.memory_space<smem>>
    %317 = vector.broadcast %316 : f32 to vector<8x256xf32>
    %318 = arith.mulf %317, %315 : vector<8x256xf32>
    %319 = arith.addf %300, %318 : vector<8x256xf32>
    %c51 = arith.constant 51 : index
    %320 = memref.load %arg2[%c51] : memref<144xf32, #tpu.memory_space<smem>>
    %321 = vector.broadcast %320 : f32 to vector<8x256xf32>
    %322 = arith.mulf %321, %315 : vector<8x256xf32>
    %323 = arith.addf %304, %322 : vector<8x256xf32>
    %c87 = arith.constant 87 : index
    %324 = memref.load %arg2[%c87] : memref<144xf32, #tpu.memory_space<smem>>
    %325 = vector.broadcast %324 : f32 to vector<8x256xf32>
    %326 = arith.mulf %325, %315 : vector<8x256xf32>
    %327 = arith.addf %308, %326 : vector<8x256xf32>
    %c123 = arith.constant 123 : index
    %328 = memref.load %arg2[%c123] : memref<144xf32, #tpu.memory_space<smem>>
    %329 = vector.broadcast %328 : f32 to vector<8x256xf32>
    %330 = arith.mulf %329, %315 : vector<8x256xf32>
    %331 = arith.addf %312, %330 : vector<8x256xf32>
    %c16 = arith.constant 16 : index
    %332 = memref.load %arg2[%c16] : memref<144xf32, #tpu.memory_space<smem>>
    %333 = vector.broadcast %332 : f32 to vector<8x256xf32>
    %334 = arith.mulf %333, %9 : vector<8x256xf32>
    %335 = arith.addf %319, %334 : vector<8x256xf32>
    %c52 = arith.constant 52 : index
    %336 = memref.load %arg2[%c52] : memref<144xf32, #tpu.memory_space<smem>>
    %337 = vector.broadcast %336 : f32 to vector<8x256xf32>
    %338 = arith.mulf %337, %9 : vector<8x256xf32>
    %339 = arith.addf %323, %338 : vector<8x256xf32>
    %c88 = arith.constant 88 : index
    %340 = memref.load %arg2[%c88] : memref<144xf32, #tpu.memory_space<smem>>
    %341 = vector.broadcast %340 : f32 to vector<8x256xf32>
    %342 = arith.mulf %341, %9 : vector<8x256xf32>
    %343 = arith.addf %327, %342 : vector<8x256xf32>
    %c124 = arith.constant 124 : index
    %344 = memref.load %arg2[%c124] : memref<144xf32, #tpu.memory_space<smem>>
    %345 = vector.broadcast %344 : f32 to vector<8x256xf32>
    %346 = arith.mulf %345, %9 : vector<8x256xf32>
    %347 = arith.addf %331, %346 : vector<8x256xf32>
    %c17 = arith.constant 17 : index
    %348 = memref.load %arg2[%c17] : memref<144xf32, #tpu.memory_space<smem>>
    %349 = vector.broadcast %348 : f32 to vector<8x256xf32>
    %350 = arith.mulf %349, %11 : vector<8x256xf32>
    %351 = arith.addf %335, %350 : vector<8x256xf32>
    %c53 = arith.constant 53 : index
    %352 = memref.load %arg2[%c53] : memref<144xf32, #tpu.memory_space<smem>>
    %353 = vector.broadcast %352 : f32 to vector<8x256xf32>
    %354 = arith.mulf %353, %11 : vector<8x256xf32>
    %355 = arith.addf %339, %354 : vector<8x256xf32>
    %c89 = arith.constant 89 : index
    %356 = memref.load %arg2[%c89] : memref<144xf32, #tpu.memory_space<smem>>
    %357 = vector.broadcast %356 : f32 to vector<8x256xf32>
    %358 = arith.mulf %357, %11 : vector<8x256xf32>
    %359 = arith.addf %343, %358 : vector<8x256xf32>
    %c125 = arith.constant 125 : index
    %360 = memref.load %arg2[%c125] : memref<144xf32, #tpu.memory_space<smem>>
    %361 = vector.broadcast %360 : f32 to vector<8x256xf32>
    %362 = arith.mulf %361, %11 : vector<8x256xf32>
    %363 = arith.addf %347, %362 : vector<8x256xf32>
    %c18 = arith.constant 18 : index
    %364 = memref.load %arg2[%c18] : memref<144xf32, #tpu.memory_space<smem>>
    %365 = vector.broadcast %364 : f32 to vector<8x256xf32>
    %366 = arith.mulf %365, %13 : vector<8x256xf32>
    %367 = arith.addf %351, %366 : vector<8x256xf32>
    %c54 = arith.constant 54 : index
    %368 = memref.load %arg2[%c54] : memref<144xf32, #tpu.memory_space<smem>>
    %369 = vector.broadcast %368 : f32 to vector<8x256xf32>
    %370 = arith.mulf %369, %13 : vector<8x256xf32>
    %371 = arith.addf %355, %370 : vector<8x256xf32>
    %c90 = arith.constant 90 : index
    %372 = memref.load %arg2[%c90] : memref<144xf32, #tpu.memory_space<smem>>
    %373 = vector.broadcast %372 : f32 to vector<8x256xf32>
    %374 = arith.mulf %373, %13 : vector<8x256xf32>
    %375 = arith.addf %359, %374 : vector<8x256xf32>
    %c126 = arith.constant 126 : index
    %376 = memref.load %arg2[%c126] : memref<144xf32, #tpu.memory_space<smem>>
    %377 = vector.broadcast %376 : f32 to vector<8x256xf32>
    %378 = arith.mulf %377, %13 : vector<8x256xf32>
    %379 = arith.addf %363, %378 : vector<8x256xf32>
    %c19 = arith.constant 19 : index
    %380 = memref.load %arg2[%c19] : memref<144xf32, #tpu.memory_space<smem>>
    %381 = vector.broadcast %380 : f32 to vector<8x256xf32>
    %382 = arith.mulf %381, %15 : vector<8x256xf32>
    %383 = arith.addf %367, %382 : vector<8x256xf32>
    %c55 = arith.constant 55 : index
    %384 = memref.load %arg2[%c55] : memref<144xf32, #tpu.memory_space<smem>>
    %385 = vector.broadcast %384 : f32 to vector<8x256xf32>
    %386 = arith.mulf %385, %15 : vector<8x256xf32>
    %387 = arith.addf %371, %386 : vector<8x256xf32>
    %c91 = arith.constant 91 : index
    %388 = memref.load %arg2[%c91] : memref<144xf32, #tpu.memory_space<smem>>
    %389 = vector.broadcast %388 : f32 to vector<8x256xf32>
    %390 = arith.mulf %389, %15 : vector<8x256xf32>
    %391 = arith.addf %375, %390 : vector<8x256xf32>
    %c127 = arith.constant 127 : index
    %392 = memref.load %arg2[%c127] : memref<144xf32, #tpu.memory_space<smem>>
    %393 = vector.broadcast %392 : f32 to vector<8x256xf32>
    %394 = arith.mulf %393, %15 : vector<8x256xf32>
    %395 = arith.addf %379, %394 : vector<8x256xf32>
    %c5_39 = arith.constant 5 : index
    %c0_40 = arith.constant 0 : index
    %396 = vector.load %arg6[%c5_39, %c0_40] : memref<9x256xf32, #tpu.memory_space<vmem>>, vector<1x256xf32>
    %c255_i32 = arith.constant 255 : i32
    %397 = tpu.dynamic_rotate %9 by %c255_i32 dim 1 : vector<8x256xf32>, i32 -> vector<8x256xf32>
    %398 = vector.broadcast %396 : vector<1x256xf32> to vector<8x256xf32>
    %399 = arith.mulf %397, %398 : vector<8x256xf32>
    %c20 = arith.constant 20 : index
    %400 = memref.load %arg2[%c20] : memref<144xf32, #tpu.memory_space<smem>>
    %401 = vector.broadcast %400 : f32 to vector<8x256xf32>
    %402 = arith.mulf %401, %399 : vector<8x256xf32>
    %403 = arith.addf %383, %402 : vector<8x256xf32>
    %c56 = arith.constant 56 : index
    %404 = memref.load %arg2[%c56] : memref<144xf32, #tpu.memory_space<smem>>
    %405 = vector.broadcast %404 : f32 to vector<8x256xf32>
    %406 = arith.mulf %405, %399 : vector<8x256xf32>
    %407 = arith.addf %387, %406 : vector<8x256xf32>
    %c92 = arith.constant 92 : index
    %408 = memref.load %arg2[%c92] : memref<144xf32, #tpu.memory_space<smem>>
    %409 = vector.broadcast %408 : f32 to vector<8x256xf32>
    %410 = arith.mulf %409, %399 : vector<8x256xf32>
    %411 = arith.addf %391, %410 : vector<8x256xf32>
    %c128 = arith.constant 128 : index
    %412 = memref.load %arg2[%c128] : memref<144xf32, #tpu.memory_space<smem>>
    %413 = vector.broadcast %412 : f32 to vector<8x256xf32>
    %414 = arith.mulf %413, %399 : vector<8x256xf32>
    %415 = arith.addf %395, %414 : vector<8x256xf32>
    %c255_i32_41 = arith.constant 255 : i32
    %416 = tpu.dynamic_rotate %11 by %c255_i32_41 dim 1 : vector<8x256xf32>, i32 -> vector<8x256xf32>
    %417 = vector.broadcast %396 : vector<1x256xf32> to vector<8x256xf32>
    %418 = arith.mulf %416, %417 : vector<8x256xf32>
    %c21 = arith.constant 21 : index
    %419 = memref.load %arg2[%c21] : memref<144xf32, #tpu.memory_space<smem>>
    %420 = vector.broadcast %419 : f32 to vector<8x256xf32>
    %421 = arith.mulf %420, %418 : vector<8x256xf32>
    %422 = arith.addf %403, %421 : vector<8x256xf32>
    %c57 = arith.constant 57 : index
    %423 = memref.load %arg2[%c57] : memref<144xf32, #tpu.memory_space<smem>>
    %424 = vector.broadcast %423 : f32 to vector<8x256xf32>
    %425 = arith.mulf %424, %418 : vector<8x256xf32>
    %426 = arith.addf %407, %425 : vector<8x256xf32>
    %c93 = arith.constant 93 : index
    %427 = memref.load %arg2[%c93] : memref<144xf32, #tpu.memory_space<smem>>
    %428 = vector.broadcast %427 : f32 to vector<8x256xf32>
    %429 = arith.mulf %428, %418 : vector<8x256xf32>
    %430 = arith.addf %411, %429 : vector<8x256xf32>
    %c129 = arith.constant 129 : index
    %431 = memref.load %arg2[%c129] : memref<144xf32, #tpu.memory_space<smem>>
    %432 = vector.broadcast %431 : f32 to vector<8x256xf32>
    %433 = arith.mulf %432, %418 : vector<8x256xf32>
    %434 = arith.addf %415, %433 : vector<8x256xf32>
    %c255_i32_42 = arith.constant 255 : i32
    %435 = tpu.dynamic_rotate %13 by %c255_i32_42 dim 1 : vector<8x256xf32>, i32 -> vector<8x256xf32>
    %436 = vector.broadcast %396 : vector<1x256xf32> to vector<8x256xf32>
    %437 = arith.mulf %435, %436 : vector<8x256xf32>
    %c22 = arith.constant 22 : index
    %438 = memref.load %arg2[%c22] : memref<144xf32, #tpu.memory_space<smem>>
    %439 = vector.broadcast %438 : f32 to vector<8x256xf32>
    %440 = arith.mulf %439, %437 : vector<8x256xf32>
    %441 = arith.addf %422, %440 : vector<8x256xf32>
    %c58 = arith.constant 58 : index
    %442 = memref.load %arg2[%c58] : memref<144xf32, #tpu.memory_space<smem>>
    %443 = vector.broadcast %442 : f32 to vector<8x256xf32>
    %444 = arith.mulf %443, %437 : vector<8x256xf32>
    %445 = arith.addf %426, %444 : vector<8x256xf32>
    %c94 = arith.constant 94 : index
    %446 = memref.load %arg2[%c94] : memref<144xf32, #tpu.memory_space<smem>>
    %447 = vector.broadcast %446 : f32 to vector<8x256xf32>
    %448 = arith.mulf %447, %437 : vector<8x256xf32>
    %449 = arith.addf %430, %448 : vector<8x256xf32>
    %c130 = arith.constant 130 : index
    %450 = memref.load %arg2[%c130] : memref<144xf32, #tpu.memory_space<smem>>
    %451 = vector.broadcast %450 : f32 to vector<8x256xf32>
    %452 = arith.mulf %451, %437 : vector<8x256xf32>
    %453 = arith.addf %434, %452 : vector<8x256xf32>
    %c255_i32_43 = arith.constant 255 : i32
    %454 = tpu.dynamic_rotate %15 by %c255_i32_43 dim 1 : vector<8x256xf32>, i32 -> vector<8x256xf32>
    %455 = vector.broadcast %396 : vector<1x256xf32> to vector<8x256xf32>
    %456 = arith.mulf %454, %455 : vector<8x256xf32>
    %c23 = arith.constant 23 : index
    %457 = memref.load %arg2[%c23] : memref<144xf32, #tpu.memory_space<smem>>
    %458 = vector.broadcast %457 : f32 to vector<8x256xf32>
    %459 = arith.mulf %458, %456 : vector<8x256xf32>
    %460 = arith.addf %441, %459 : vector<8x256xf32>
    %c59 = arith.constant 59 : index
    %461 = memref.load %arg2[%c59] : memref<144xf32, #tpu.memory_space<smem>>
    %462 = vector.broadcast %461 : f32 to vector<8x256xf32>
    %463 = arith.mulf %462, %456 : vector<8x256xf32>
    %464 = arith.addf %445, %463 : vector<8x256xf32>
    %c95 = arith.constant 95 : index
    %465 = memref.load %arg2[%c95] : memref<144xf32, #tpu.memory_space<smem>>
    %466 = vector.broadcast %465 : f32 to vector<8x256xf32>
    %467 = arith.mulf %466, %456 : vector<8x256xf32>
    %468 = arith.addf %449, %467 : vector<8x256xf32>
    %c131 = arith.constant 131 : index
    %469 = memref.load %arg2[%c131] : memref<144xf32, #tpu.memory_space<smem>>
    %470 = vector.broadcast %469 : f32 to vector<8x256xf32>
    %471 = arith.mulf %470, %456 : vector<8x256xf32>
    %472 = arith.addf %453, %471 : vector<8x256xf32>
    %c6_44 = arith.constant 6 : index
    %c0_45 = arith.constant 0 : index
    %473 = vector.load %arg6[%c6_44, %c0_45] : memref<9x256xf32, #tpu.memory_space<vmem>>, vector<1x256xf32>
    %c241_i32 = arith.constant 241 : i32
    %474 = tpu.dynamic_rotate %9 by %c241_i32 dim 1 : vector<8x256xf32>, i32 -> vector<8x256xf32>
    %475 = vector.broadcast %473 : vector<1x256xf32> to vector<8x256xf32>
    %476 = arith.mulf %474, %475 : vector<8x256xf32>
    %c24 = arith.constant 24 : index
    %477 = memref.load %arg2[%c24] : memref<144xf32, #tpu.memory_space<smem>>
    %478 = vector.broadcast %477 : f32 to vector<8x256xf32>
    %479 = arith.mulf %478, %476 : vector<8x256xf32>
    %480 = arith.addf %460, %479 : vector<8x256xf32>
    %c60 = arith.constant 60 : index
    %481 = memref.load %arg2[%c60] : memref<144xf32, #tpu.memory_space<smem>>
    %482 = vector.broadcast %481 : f32 to vector<8x256xf32>
    %483 = arith.mulf %482, %476 : vector<8x256xf32>
    %484 = arith.addf %464, %483 : vector<8x256xf32>
    %c96 = arith.constant 96 : index
    %485 = memref.load %arg2[%c96] : memref<144xf32, #tpu.memory_space<smem>>
    %486 = vector.broadcast %485 : f32 to vector<8x256xf32>
    %487 = arith.mulf %486, %476 : vector<8x256xf32>
    %488 = arith.addf %468, %487 : vector<8x256xf32>
    %c132 = arith.constant 132 : index
    %489 = memref.load %arg2[%c132] : memref<144xf32, #tpu.memory_space<smem>>
    %490 = vector.broadcast %489 : f32 to vector<8x256xf32>
    %491 = arith.mulf %490, %476 : vector<8x256xf32>
    %492 = arith.addf %472, %491 : vector<8x256xf32>
    %c241_i32_46 = arith.constant 241 : i32
    %493 = tpu.dynamic_rotate %11 by %c241_i32_46 dim 1 : vector<8x256xf32>, i32 -> vector<8x256xf32>
    %494 = vector.broadcast %473 : vector<1x256xf32> to vector<8x256xf32>
    %495 = arith.mulf %493, %494 : vector<8x256xf32>
    %c25 = arith.constant 25 : index
    %496 = memref.load %arg2[%c25] : memref<144xf32, #tpu.memory_space<smem>>
    %497 = vector.broadcast %496 : f32 to vector<8x256xf32>
    %498 = arith.mulf %497, %495 : vector<8x256xf32>
    %499 = arith.addf %480, %498 : vector<8x256xf32>
    %c61 = arith.constant 61 : index
    %500 = memref.load %arg2[%c61] : memref<144xf32, #tpu.memory_space<smem>>
    %501 = vector.broadcast %500 : f32 to vector<8x256xf32>
    %502 = arith.mulf %501, %495 : vector<8x256xf32>
    %503 = arith.addf %484, %502 : vector<8x256xf32>
    %c97 = arith.constant 97 : index
    %504 = memref.load %arg2[%c97] : memref<144xf32, #tpu.memory_space<smem>>
    %505 = vector.broadcast %504 : f32 to vector<8x256xf32>
    %506 = arith.mulf %505, %495 : vector<8x256xf32>
    %507 = arith.addf %488, %506 : vector<8x256xf32>
    %c133 = arith.constant 133 : index
    %508 = memref.load %arg2[%c133] : memref<144xf32, #tpu.memory_space<smem>>
    %509 = vector.broadcast %508 : f32 to vector<8x256xf32>
    %510 = arith.mulf %509, %495 : vector<8x256xf32>
    %511 = arith.addf %492, %510 : vector<8x256xf32>
    %c241_i32_47 = arith.constant 241 : i32
    %512 = tpu.dynamic_rotate %13 by %c241_i32_47 dim 1 : vector<8x256xf32>, i32 -> vector<8x256xf32>
    %513 = vector.broadcast %473 : vector<1x256xf32> to vector<8x256xf32>
    %514 = arith.mulf %512, %513 : vector<8x256xf32>
    %c26 = arith.constant 26 : index
    %515 = memref.load %arg2[%c26] : memref<144xf32, #tpu.memory_space<smem>>
    %516 = vector.broadcast %515 : f32 to vector<8x256xf32>
    %517 = arith.mulf %516, %514 : vector<8x256xf32>
    %518 = arith.addf %499, %517 : vector<8x256xf32>
    %c62 = arith.constant 62 : index
    %519 = memref.load %arg2[%c62] : memref<144xf32, #tpu.memory_space<smem>>
    %520 = vector.broadcast %519 : f32 to vector<8x256xf32>
    %521 = arith.mulf %520, %514 : vector<8x256xf32>
    %522 = arith.addf %503, %521 : vector<8x256xf32>
    %c98 = arith.constant 98 : index
    %523 = memref.load %arg2[%c98] : memref<144xf32, #tpu.memory_space<smem>>
    %524 = vector.broadcast %523 : f32 to vector<8x256xf32>
    %525 = arith.mulf %524, %514 : vector<8x256xf32>
    %526 = arith.addf %507, %525 : vector<8x256xf32>
    %c134 = arith.constant 134 : index
    %527 = memref.load %arg2[%c134] : memref<144xf32, #tpu.memory_space<smem>>
    %528 = vector.broadcast %527 : f32 to vector<8x256xf32>
    %529 = arith.mulf %528, %514 : vector<8x256xf32>
    %530 = arith.addf %511, %529 : vector<8x256xf32>
    %c241_i32_48 = arith.constant 241 : i32
    %531 = tpu.dynamic_rotate %15 by %c241_i32_48 dim 1 : vector<8x256xf32>, i32 -> vector<8x256xf32>
    %532 = vector.broadcast %473 : vector<1x256xf32> to vector<8x256xf32>
    %533 = arith.mulf %531, %532 : vector<8x256xf32>
    %c27 = arith.constant 27 : index
    %534 = memref.load %arg2[%c27] : memref<144xf32, #tpu.memory_space<smem>>
    %535 = vector.broadcast %534 : f32 to vector<8x256xf32>
    %536 = arith.mulf %535, %533 : vector<8x256xf32>
    %537 = arith.addf %518, %536 : vector<8x256xf32>
    %c63 = arith.constant 63 : index
    %538 = memref.load %arg2[%c63] : memref<144xf32, #tpu.memory_space<smem>>
    %539 = vector.broadcast %538 : f32 to vector<8x256xf32>
    %540 = arith.mulf %539, %533 : vector<8x256xf32>
    %541 = arith.addf %522, %540 : vector<8x256xf32>
    %c99 = arith.constant 99 : index
    %542 = memref.load %arg2[%c99] : memref<144xf32, #tpu.memory_space<smem>>
    %543 = vector.broadcast %542 : f32 to vector<8x256xf32>
    %544 = arith.mulf %543, %533 : vector<8x256xf32>
    %545 = arith.addf %526, %544 : vector<8x256xf32>
    %c135 = arith.constant 135 : index
    %546 = memref.load %arg2[%c135] : memref<144xf32, #tpu.memory_space<smem>>
    %547 = vector.broadcast %546 : f32 to vector<8x256xf32>
    %548 = arith.mulf %547, %533 : vector<8x256xf32>
    %549 = arith.addf %530, %548 : vector<8x256xf32>
    %c7_49 = arith.constant 7 : index
    %c0_50 = arith.constant 0 : index
    %550 = vector.load %arg6[%c7_49, %c0_50] : memref<9x256xf32, #tpu.memory_space<vmem>>, vector<1x256xf32>
    %c240_i32 = arith.constant 240 : i32
    %551 = tpu.dynamic_rotate %9 by %c240_i32 dim 1 : vector<8x256xf32>, i32 -> vector<8x256xf32>
    %552 = vector.broadcast %550 : vector<1x256xf32> to vector<8x256xf32>
    %553 = arith.mulf %551, %552 : vector<8x256xf32>
    %c28 = arith.constant 28 : index
    %554 = memref.load %arg2[%c28] : memref<144xf32, #tpu.memory_space<smem>>
    %555 = vector.broadcast %554 : f32 to vector<8x256xf32>
    %556 = arith.mulf %555, %553 : vector<8x256xf32>
    %557 = arith.addf %537, %556 : vector<8x256xf32>
    %c64 = arith.constant 64 : index
    %558 = memref.load %arg2[%c64] : memref<144xf32, #tpu.memory_space<smem>>
    %559 = vector.broadcast %558 : f32 to vector<8x256xf32>
    %560 = arith.mulf %559, %553 : vector<8x256xf32>
    %561 = arith.addf %541, %560 : vector<8x256xf32>
    %c100 = arith.constant 100 : index
    %562 = memref.load %arg2[%c100] : memref<144xf32, #tpu.memory_space<smem>>
    %563 = vector.broadcast %562 : f32 to vector<8x256xf32>
    %564 = arith.mulf %563, %553 : vector<8x256xf32>
    %565 = arith.addf %545, %564 : vector<8x256xf32>
    %c136 = arith.constant 136 : index
    %566 = memref.load %arg2[%c136] : memref<144xf32, #tpu.memory_space<smem>>
    %567 = vector.broadcast %566 : f32 to vector<8x256xf32>
    %568 = arith.mulf %567, %553 : vector<8x256xf32>
    %569 = arith.addf %549, %568 : vector<8x256xf32>
    %c240_i32_51 = arith.constant 240 : i32
    %570 = tpu.dynamic_rotate %11 by %c240_i32_51 dim 1 : vector<8x256xf32>, i32 -> vector<8x256xf32>
    %571 = vector.broadcast %550 : vector<1x256xf32> to vector<8x256xf32>
    %572 = arith.mulf %570, %571 : vector<8x256xf32>
    %c29 = arith.constant 29 : index
    %573 = memref.load %arg2[%c29] : memref<144xf32, #tpu.memory_space<smem>>
    %574 = vector.broadcast %573 : f32 to vector<8x256xf32>
    %575 = arith.mulf %574, %572 : vector<8x256xf32>
    %576 = arith.addf %557, %575 : vector<8x256xf32>
    %c65 = arith.constant 65 : index
    %577 = memref.load %arg2[%c65] : memref<144xf32, #tpu.memory_space<smem>>
    %578 = vector.broadcast %577 : f32 to vector<8x256xf32>
    %579 = arith.mulf %578, %572 : vector<8x256xf32>
    %580 = arith.addf %561, %579 : vector<8x256xf32>
    %c101 = arith.constant 101 : index
    %581 = memref.load %arg2[%c101] : memref<144xf32, #tpu.memory_space<smem>>
    %582 = vector.broadcast %581 : f32 to vector<8x256xf32>
    %583 = arith.mulf %582, %572 : vector<8x256xf32>
    %584 = arith.addf %565, %583 : vector<8x256xf32>
    %c137 = arith.constant 137 : index
    %585 = memref.load %arg2[%c137] : memref<144xf32, #tpu.memory_space<smem>>
    %586 = vector.broadcast %585 : f32 to vector<8x256xf32>
    %587 = arith.mulf %586, %572 : vector<8x256xf32>
    %588 = arith.addf %569, %587 : vector<8x256xf32>
    %c240_i32_52 = arith.constant 240 : i32
    %589 = tpu.dynamic_rotate %13 by %c240_i32_52 dim 1 : vector<8x256xf32>, i32 -> vector<8x256xf32>
    %590 = vector.broadcast %550 : vector<1x256xf32> to vector<8x256xf32>
    %591 = arith.mulf %589, %590 : vector<8x256xf32>
    %c30 = arith.constant 30 : index
    %592 = memref.load %arg2[%c30] : memref<144xf32, #tpu.memory_space<smem>>
    %593 = vector.broadcast %592 : f32 to vector<8x256xf32>
    %594 = arith.mulf %593, %591 : vector<8x256xf32>
    %595 = arith.addf %576, %594 : vector<8x256xf32>
    %c66 = arith.constant 66 : index
    %596 = memref.load %arg2[%c66] : memref<144xf32, #tpu.memory_space<smem>>
    %597 = vector.broadcast %596 : f32 to vector<8x256xf32>
    %598 = arith.mulf %597, %591 : vector<8x256xf32>
    %599 = arith.addf %580, %598 : vector<8x256xf32>
    %c102 = arith.constant 102 : index
    %600 = memref.load %arg2[%c102] : memref<144xf32, #tpu.memory_space<smem>>
    %601 = vector.broadcast %600 : f32 to vector<8x256xf32>
    %602 = arith.mulf %601, %591 : vector<8x256xf32>
    %603 = arith.addf %584, %602 : vector<8x256xf32>
    %c138 = arith.constant 138 : index
    %604 = memref.load %arg2[%c138] : memref<144xf32, #tpu.memory_space<smem>>
    %605 = vector.broadcast %604 : f32 to vector<8x256xf32>
    %606 = arith.mulf %605, %591 : vector<8x256xf32>
    %607 = arith.addf %588, %606 : vector<8x256xf32>
    %c240_i32_53 = arith.constant 240 : i32
    %608 = tpu.dynamic_rotate %15 by %c240_i32_53 dim 1 : vector<8x256xf32>, i32 -> vector<8x256xf32>
    %609 = vector.broadcast %550 : vector<1x256xf32> to vector<8x256xf32>
    %610 = arith.mulf %608, %609 : vector<8x256xf32>
    %c31 = arith.constant 31 : index
    %611 = memref.load %arg2[%c31] : memref<144xf32, #tpu.memory_space<smem>>
    %612 = vector.broadcast %611 : f32 to vector<8x256xf32>
    %613 = arith.mulf %612, %610 : vector<8x256xf32>
    %614 = arith.addf %595, %613 : vector<8x256xf32>
    %c67 = arith.constant 67 : index
    %615 = memref.load %arg2[%c67] : memref<144xf32, #tpu.memory_space<smem>>
    %616 = vector.broadcast %615 : f32 to vector<8x256xf32>
    %617 = arith.mulf %616, %610 : vector<8x256xf32>
    %618 = arith.addf %599, %617 : vector<8x256xf32>
    %c103 = arith.constant 103 : index
    %619 = memref.load %arg2[%c103] : memref<144xf32, #tpu.memory_space<smem>>
    %620 = vector.broadcast %619 : f32 to vector<8x256xf32>
    %621 = arith.mulf %620, %610 : vector<8x256xf32>
    %622 = arith.addf %603, %621 : vector<8x256xf32>
    %c139 = arith.constant 139 : index
    %623 = memref.load %arg2[%c139] : memref<144xf32, #tpu.memory_space<smem>>
    %624 = vector.broadcast %623 : f32 to vector<8x256xf32>
    %625 = arith.mulf %624, %610 : vector<8x256xf32>
    %626 = arith.addf %607, %625 : vector<8x256xf32>
    %c8_54 = arith.constant 8 : index
    %c0_55 = arith.constant 0 : index
    %627 = vector.load %arg6[%c8_54, %c0_55] : memref<9x256xf32, #tpu.memory_space<vmem>>, vector<1x256xf32>
    %c239_i32 = arith.constant 239 : i32
    %628 = tpu.dynamic_rotate %9 by %c239_i32 dim 1 : vector<8x256xf32>, i32 -> vector<8x256xf32>
    %629 = vector.broadcast %627 : vector<1x256xf32> to vector<8x256xf32>
    %630 = arith.mulf %628, %629 : vector<8x256xf32>
    %c32 = arith.constant 32 : index
    %631 = memref.load %arg2[%c32] : memref<144xf32, #tpu.memory_space<smem>>
    %632 = vector.broadcast %631 : f32 to vector<8x256xf32>
    %633 = arith.mulf %632, %630 : vector<8x256xf32>
    %634 = arith.addf %614, %633 : vector<8x256xf32>
    %c68 = arith.constant 68 : index
    %635 = memref.load %arg2[%c68] : memref<144xf32, #tpu.memory_space<smem>>
    %636 = vector.broadcast %635 : f32 to vector<8x256xf32>
    %637 = arith.mulf %636, %630 : vector<8x256xf32>
    %638 = arith.addf %618, %637 : vector<8x256xf32>
    %c104 = arith.constant 104 : index
    %639 = memref.load %arg2[%c104] : memref<144xf32, #tpu.memory_space<smem>>
    %640 = vector.broadcast %639 : f32 to vector<8x256xf32>
    %641 = arith.mulf %640, %630 : vector<8x256xf32>
    %642 = arith.addf %622, %641 : vector<8x256xf32>
    %c140 = arith.constant 140 : index
    %643 = memref.load %arg2[%c140] : memref<144xf32, #tpu.memory_space<smem>>
    %644 = vector.broadcast %643 : f32 to vector<8x256xf32>
    %645 = arith.mulf %644, %630 : vector<8x256xf32>
    %646 = arith.addf %626, %645 : vector<8x256xf32>
    %c239_i32_56 = arith.constant 239 : i32
    %647 = tpu.dynamic_rotate %11 by %c239_i32_56 dim 1 : vector<8x256xf32>, i32 -> vector<8x256xf32>
    %648 = vector.broadcast %627 : vector<1x256xf32> to vector<8x256xf32>
    %649 = arith.mulf %647, %648 : vector<8x256xf32>
    %c33 = arith.constant 33 : index
    %650 = memref.load %arg2[%c33] : memref<144xf32, #tpu.memory_space<smem>>
    %651 = vector.broadcast %650 : f32 to vector<8x256xf32>
    %652 = arith.mulf %651, %649 : vector<8x256xf32>
    %653 = arith.addf %634, %652 : vector<8x256xf32>
    %c69 = arith.constant 69 : index
    %654 = memref.load %arg2[%c69] : memref<144xf32, #tpu.memory_space<smem>>
    %655 = vector.broadcast %654 : f32 to vector<8x256xf32>
    %656 = arith.mulf %655, %649 : vector<8x256xf32>
    %657 = arith.addf %638, %656 : vector<8x256xf32>
    %c105 = arith.constant 105 : index
    %658 = memref.load %arg2[%c105] : memref<144xf32, #tpu.memory_space<smem>>
    %659 = vector.broadcast %658 : f32 to vector<8x256xf32>
    %660 = arith.mulf %659, %649 : vector<8x256xf32>
    %661 = arith.addf %642, %660 : vector<8x256xf32>
    %c141 = arith.constant 141 : index
    %662 = memref.load %arg2[%c141] : memref<144xf32, #tpu.memory_space<smem>>
    %663 = vector.broadcast %662 : f32 to vector<8x256xf32>
    %664 = arith.mulf %663, %649 : vector<8x256xf32>
    %665 = arith.addf %646, %664 : vector<8x256xf32>
    %c239_i32_57 = arith.constant 239 : i32
    %666 = tpu.dynamic_rotate %13 by %c239_i32_57 dim 1 : vector<8x256xf32>, i32 -> vector<8x256xf32>
    %667 = vector.broadcast %627 : vector<1x256xf32> to vector<8x256xf32>
    %668 = arith.mulf %666, %667 : vector<8x256xf32>
    %c34 = arith.constant 34 : index
    %669 = memref.load %arg2[%c34] : memref<144xf32, #tpu.memory_space<smem>>
    %670 = vector.broadcast %669 : f32 to vector<8x256xf32>
    %671 = arith.mulf %670, %668 : vector<8x256xf32>
    %672 = arith.addf %653, %671 : vector<8x256xf32>
    %c70 = arith.constant 70 : index
    %673 = memref.load %arg2[%c70] : memref<144xf32, #tpu.memory_space<smem>>
    %674 = vector.broadcast %673 : f32 to vector<8x256xf32>
    %675 = arith.mulf %674, %668 : vector<8x256xf32>
    %676 = arith.addf %657, %675 : vector<8x256xf32>
    %c106 = arith.constant 106 : index
    %677 = memref.load %arg2[%c106] : memref<144xf32, #tpu.memory_space<smem>>
    %678 = vector.broadcast %677 : f32 to vector<8x256xf32>
    %679 = arith.mulf %678, %668 : vector<8x256xf32>
    %680 = arith.addf %661, %679 : vector<8x256xf32>
    %c142 = arith.constant 142 : index
    %681 = memref.load %arg2[%c142] : memref<144xf32, #tpu.memory_space<smem>>
    %682 = vector.broadcast %681 : f32 to vector<8x256xf32>
    %683 = arith.mulf %682, %668 : vector<8x256xf32>
    %684 = arith.addf %665, %683 : vector<8x256xf32>
    %c239_i32_58 = arith.constant 239 : i32
    %685 = tpu.dynamic_rotate %15 by %c239_i32_58 dim 1 : vector<8x256xf32>, i32 -> vector<8x256xf32>
    %686 = vector.broadcast %627 : vector<1x256xf32> to vector<8x256xf32>
    %687 = arith.mulf %685, %686 : vector<8x256xf32>
    %c35 = arith.constant 35 : index
    %688 = memref.load %arg2[%c35] : memref<144xf32, #tpu.memory_space<smem>>
    %689 = vector.broadcast %688 : f32 to vector<8x256xf32>
    %690 = arith.mulf %689, %687 : vector<8x256xf32>
    %691 = arith.addf %672, %690 : vector<8x256xf32>
    %c71 = arith.constant 71 : index
    %692 = memref.load %arg2[%c71] : memref<144xf32, #tpu.memory_space<smem>>
    %693 = vector.broadcast %692 : f32 to vector<8x256xf32>
    %694 = arith.mulf %693, %687 : vector<8x256xf32>
    %695 = arith.addf %676, %694 : vector<8x256xf32>
    %c107 = arith.constant 107 : index
    %696 = memref.load %arg2[%c107] : memref<144xf32, #tpu.memory_space<smem>>
    %697 = vector.broadcast %696 : f32 to vector<8x256xf32>
    %698 = arith.mulf %697, %687 : vector<8x256xf32>
    %699 = arith.addf %680, %698 : vector<8x256xf32>
    %c143 = arith.constant 143 : index
    %700 = memref.load %arg2[%c143] : memref<144xf32, #tpu.memory_space<smem>>
    %701 = vector.broadcast %700 : f32 to vector<8x256xf32>
    %702 = arith.mulf %701, %687 : vector<8x256xf32>
    %703 = arith.addf %684, %702 : vector<8x256xf32>
    %cst_59 = arith.constant 0.000000e+00 : f32
    %704 = vector.broadcast %cst_59 : f32 to vector<8x256xf32>
    %705 = arith.maximumf %691, %704 : vector<8x256xf32>
    %cst_60 = arith.constant 0.000000e+00 : f32
    %706 = vector.broadcast %cst_60 : f32 to vector<8x256xf32>
    %707 = arith.maximumf %695, %706 : vector<8x256xf32>
    %cst_61 = arith.constant 0.000000e+00 : f32
    %708 = vector.broadcast %cst_61 : f32 to vector<8x256xf32>
    %709 = arith.maximumf %699, %708 : vector<8x256xf32>
    %cst_62 = arith.constant 0.000000e+00 : f32
    %710 = vector.broadcast %cst_62 : f32 to vector<8x256xf32>
    %711 = arith.maximumf %703, %710 : vector<8x256xf32>
    %c0_63 = arith.constant 0 : index
    %c0_64 = arith.constant 0 : index
    %712 = vector.load %arg6[%c0_63, %c0_64] : memref<9x256xf32, #tpu.memory_space<vmem>>, vector<1x256xf32>
    %c17_i32_65 = arith.constant 17 : i32
    %713 = tpu.dynamic_rotate %705 by %c17_i32_65 dim 1 : vector<8x256xf32>, i32 -> vector<8x256xf32>
    %714 = vector.broadcast %712 : vector<1x256xf32> to vector<8x256xf32>
    %715 = arith.mulf %713, %714 : vector<8x256xf32>
    %c0_66 = arith.constant 0 : index
    %716 = memref.load %arg4[%c0_66] : memref<144xf32, #tpu.memory_space<smem>>
    %717 = vector.broadcast %716 : f32 to vector<8x256xf32>
    %718 = arith.mulf %717, %715 : vector<8x256xf32>
    %c0_67 = arith.constant 0 : index
    %719 = memref.load %arg5[%c0_67] : memref<4xf32, #tpu.memory_space<smem>>
    %720 = vector.broadcast %719 : f32 to vector<8x256xf32>
    %721 = arith.addf %718, %720 : vector<8x256xf32>
    %c36_68 = arith.constant 36 : index
    %722 = memref.load %arg4[%c36_68] : memref<144xf32, #tpu.memory_space<smem>>
    %723 = vector.broadcast %722 : f32 to vector<8x256xf32>
    %724 = arith.mulf %723, %715 : vector<8x256xf32>
    %c1_69 = arith.constant 1 : index
    %725 = memref.load %arg5[%c1_69] : memref<4xf32, #tpu.memory_space<smem>>
    %726 = vector.broadcast %725 : f32 to vector<8x256xf32>
    %727 = arith.addf %724, %726 : vector<8x256xf32>
    %c72_70 = arith.constant 72 : index
    %728 = memref.load %arg4[%c72_70] : memref<144xf32, #tpu.memory_space<smem>>
    %729 = vector.broadcast %728 : f32 to vector<8x256xf32>
    %730 = arith.mulf %729, %715 : vector<8x256xf32>
    %c2_71 = arith.constant 2 : index
    %731 = memref.load %arg5[%c2_71] : memref<4xf32, #tpu.memory_space<smem>>
    %732 = vector.broadcast %731 : f32 to vector<8x256xf32>
    %733 = arith.addf %730, %732 : vector<8x256xf32>
    %c108_72 = arith.constant 108 : index
    %734 = memref.load %arg4[%c108_72] : memref<144xf32, #tpu.memory_space<smem>>
    %735 = vector.broadcast %734 : f32 to vector<8x256xf32>
    %736 = arith.mulf %735, %715 : vector<8x256xf32>
    %c3_73 = arith.constant 3 : index
    %737 = memref.load %arg5[%c3_73] : memref<4xf32, #tpu.memory_space<smem>>
    %738 = vector.broadcast %737 : f32 to vector<8x256xf32>
    %739 = arith.addf %736, %738 : vector<8x256xf32>
    %c17_i32_74 = arith.constant 17 : i32
    %740 = tpu.dynamic_rotate %707 by %c17_i32_74 dim 1 : vector<8x256xf32>, i32 -> vector<8x256xf32>
    %741 = vector.broadcast %712 : vector<1x256xf32> to vector<8x256xf32>
    %742 = arith.mulf %740, %741 : vector<8x256xf32>
    %c1_75 = arith.constant 1 : index
    %743 = memref.load %arg4[%c1_75] : memref<144xf32, #tpu.memory_space<smem>>
    %744 = vector.broadcast %743 : f32 to vector<8x256xf32>
    %745 = arith.mulf %744, %742 : vector<8x256xf32>
    %746 = arith.addf %721, %745 : vector<8x256xf32>
    %c37_76 = arith.constant 37 : index
    %747 = memref.load %arg4[%c37_76] : memref<144xf32, #tpu.memory_space<smem>>
    %748 = vector.broadcast %747 : f32 to vector<8x256xf32>
    %749 = arith.mulf %748, %742 : vector<8x256xf32>
    %750 = arith.addf %727, %749 : vector<8x256xf32>
    %c73_77 = arith.constant 73 : index
    %751 = memref.load %arg4[%c73_77] : memref<144xf32, #tpu.memory_space<smem>>
    %752 = vector.broadcast %751 : f32 to vector<8x256xf32>
    %753 = arith.mulf %752, %742 : vector<8x256xf32>
    %754 = arith.addf %733, %753 : vector<8x256xf32>
    %c109_78 = arith.constant 109 : index
    %755 = memref.load %arg4[%c109_78] : memref<144xf32, #tpu.memory_space<smem>>
    %756 = vector.broadcast %755 : f32 to vector<8x256xf32>
    %757 = arith.mulf %756, %742 : vector<8x256xf32>
    %758 = arith.addf %739, %757 : vector<8x256xf32>
    %c17_i32_79 = arith.constant 17 : i32
    %759 = tpu.dynamic_rotate %709 by %c17_i32_79 dim 1 : vector<8x256xf32>, i32 -> vector<8x256xf32>
    %760 = vector.broadcast %712 : vector<1x256xf32> to vector<8x256xf32>
    %761 = arith.mulf %759, %760 : vector<8x256xf32>
    %c2_80 = arith.constant 2 : index
    %762 = memref.load %arg4[%c2_80] : memref<144xf32, #tpu.memory_space<smem>>
    %763 = vector.broadcast %762 : f32 to vector<8x256xf32>
    %764 = arith.mulf %763, %761 : vector<8x256xf32>
    %765 = arith.addf %746, %764 : vector<8x256xf32>
    %c38_81 = arith.constant 38 : index
    %766 = memref.load %arg4[%c38_81] : memref<144xf32, #tpu.memory_space<smem>>
    %767 = vector.broadcast %766 : f32 to vector<8x256xf32>
    %768 = arith.mulf %767, %761 : vector<8x256xf32>
    %769 = arith.addf %750, %768 : vector<8x256xf32>
    %c74_82 = arith.constant 74 : index
    %770 = memref.load %arg4[%c74_82] : memref<144xf32, #tpu.memory_space<smem>>
    %771 = vector.broadcast %770 : f32 to vector<8x256xf32>
    %772 = arith.mulf %771, %761 : vector<8x256xf32>
    %773 = arith.addf %754, %772 : vector<8x256xf32>
    %c110_83 = arith.constant 110 : index
    %774 = memref.load %arg4[%c110_83] : memref<144xf32, #tpu.memory_space<smem>>
    %775 = vector.broadcast %774 : f32 to vector<8x256xf32>
    %776 = arith.mulf %775, %761 : vector<8x256xf32>
    %777 = arith.addf %758, %776 : vector<8x256xf32>
    %c17_i32_84 = arith.constant 17 : i32
    %778 = tpu.dynamic_rotate %711 by %c17_i32_84 dim 1 : vector<8x256xf32>, i32 -> vector<8x256xf32>
    %779 = vector.broadcast %712 : vector<1x256xf32> to vector<8x256xf32>
    %780 = arith.mulf %778, %779 : vector<8x256xf32>
    %c3_85 = arith.constant 3 : index
    %781 = memref.load %arg4[%c3_85] : memref<144xf32, #tpu.memory_space<smem>>
    %782 = vector.broadcast %781 : f32 to vector<8x256xf32>
    %783 = arith.mulf %782, %780 : vector<8x256xf32>
    %784 = arith.addf %765, %783 : vector<8x256xf32>
    %c39_86 = arith.constant 39 : index
    %785 = memref.load %arg4[%c39_86] : memref<144xf32, #tpu.memory_space<smem>>
    %786 = vector.broadcast %785 : f32 to vector<8x256xf32>
    %787 = arith.mulf %786, %780 : vector<8x256xf32>
    %788 = arith.addf %769, %787 : vector<8x256xf32>
    %c75_87 = arith.constant 75 : index
    %789 = memref.load %arg4[%c75_87] : memref<144xf32, #tpu.memory_space<smem>>
    %790 = vector.broadcast %789 : f32 to vector<8x256xf32>
    %791 = arith.mulf %790, %780 : vector<8x256xf32>
    %792 = arith.addf %773, %791 : vector<8x256xf32>
    %c111_88 = arith.constant 111 : index
    %793 = memref.load %arg4[%c111_88] : memref<144xf32, #tpu.memory_space<smem>>
    %794 = vector.broadcast %793 : f32 to vector<8x256xf32>
    %795 = arith.mulf %794, %780 : vector<8x256xf32>
    %796 = arith.addf %777, %795 : vector<8x256xf32>
    %c1_89 = arith.constant 1 : index
    %c0_90 = arith.constant 0 : index
    %797 = vector.load %arg6[%c1_89, %c0_90] : memref<9x256xf32, #tpu.memory_space<vmem>>, vector<1x256xf32>
    %c16_i32_91 = arith.constant 16 : i32
    %798 = tpu.dynamic_rotate %705 by %c16_i32_91 dim 1 : vector<8x256xf32>, i32 -> vector<8x256xf32>
    %799 = vector.broadcast %797 : vector<1x256xf32> to vector<8x256xf32>
    %800 = arith.mulf %798, %799 : vector<8x256xf32>
    %c4_92 = arith.constant 4 : index
    %801 = memref.load %arg4[%c4_92] : memref<144xf32, #tpu.memory_space<smem>>
    %802 = vector.broadcast %801 : f32 to vector<8x256xf32>
    %803 = arith.mulf %802, %800 : vector<8x256xf32>
    %804 = arith.addf %784, %803 : vector<8x256xf32>
    %c40_93 = arith.constant 40 : index
    %805 = memref.load %arg4[%c40_93] : memref<144xf32, #tpu.memory_space<smem>>
    %806 = vector.broadcast %805 : f32 to vector<8x256xf32>
    %807 = arith.mulf %806, %800 : vector<8x256xf32>
    %808 = arith.addf %788, %807 : vector<8x256xf32>
    %c76_94 = arith.constant 76 : index
    %809 = memref.load %arg4[%c76_94] : memref<144xf32, #tpu.memory_space<smem>>
    %810 = vector.broadcast %809 : f32 to vector<8x256xf32>
    %811 = arith.mulf %810, %800 : vector<8x256xf32>
    %812 = arith.addf %792, %811 : vector<8x256xf32>
    %c112_95 = arith.constant 112 : index
    %813 = memref.load %arg4[%c112_95] : memref<144xf32, #tpu.memory_space<smem>>
    %814 = vector.broadcast %813 : f32 to vector<8x256xf32>
    %815 = arith.mulf %814, %800 : vector<8x256xf32>
    %816 = arith.addf %796, %815 : vector<8x256xf32>
    %c16_i32_96 = arith.constant 16 : i32
    %817 = tpu.dynamic_rotate %707 by %c16_i32_96 dim 1 : vector<8x256xf32>, i32 -> vector<8x256xf32>
    %818 = vector.broadcast %797 : vector<1x256xf32> to vector<8x256xf32>
    %819 = arith.mulf %817, %818 : vector<8x256xf32>
    %c5_97 = arith.constant 5 : index
    %820 = memref.load %arg4[%c5_97] : memref<144xf32, #tpu.memory_space<smem>>
    %821 = vector.broadcast %820 : f32 to vector<8x256xf32>
    %822 = arith.mulf %821, %819 : vector<8x256xf32>
    %823 = arith.addf %804, %822 : vector<8x256xf32>
    %c41_98 = arith.constant 41 : index
    %824 = memref.load %arg4[%c41_98] : memref<144xf32, #tpu.memory_space<smem>>
    %825 = vector.broadcast %824 : f32 to vector<8x256xf32>
    %826 = arith.mulf %825, %819 : vector<8x256xf32>
    %827 = arith.addf %808, %826 : vector<8x256xf32>
    %c77_99 = arith.constant 77 : index
    %828 = memref.load %arg4[%c77_99] : memref<144xf32, #tpu.memory_space<smem>>
    %829 = vector.broadcast %828 : f32 to vector<8x256xf32>
    %830 = arith.mulf %829, %819 : vector<8x256xf32>
    %831 = arith.addf %812, %830 : vector<8x256xf32>
    %c113_100 = arith.constant 113 : index
    %832 = memref.load %arg4[%c113_100] : memref<144xf32, #tpu.memory_space<smem>>
    %833 = vector.broadcast %832 : f32 to vector<8x256xf32>
    %834 = arith.mulf %833, %819 : vector<8x256xf32>
    %835 = arith.addf %816, %834 : vector<8x256xf32>
    %c16_i32_101 = arith.constant 16 : i32
    %836 = tpu.dynamic_rotate %709 by %c16_i32_101 dim 1 : vector<8x256xf32>, i32 -> vector<8x256xf32>
    %837 = vector.broadcast %797 : vector<1x256xf32> to vector<8x256xf32>
    %838 = arith.mulf %836, %837 : vector<8x256xf32>
    %c6_102 = arith.constant 6 : index
    %839 = memref.load %arg4[%c6_102] : memref<144xf32, #tpu.memory_space<smem>>
    %840 = vector.broadcast %839 : f32 to vector<8x256xf32>
    %841 = arith.mulf %840, %838 : vector<8x256xf32>
    %842 = arith.addf %823, %841 : vector<8x256xf32>
    %c42_103 = arith.constant 42 : index
    %843 = memref.load %arg4[%c42_103] : memref<144xf32, #tpu.memory_space<smem>>
    %844 = vector.broadcast %843 : f32 to vector<8x256xf32>
    %845 = arith.mulf %844, %838 : vector<8x256xf32>
    %846 = arith.addf %827, %845 : vector<8x256xf32>
    %c78_104 = arith.constant 78 : index
    %847 = memref.load %arg4[%c78_104] : memref<144xf32, #tpu.memory_space<smem>>
    %848 = vector.broadcast %847 : f32 to vector<8x256xf32>
    %849 = arith.mulf %848, %838 : vector<8x256xf32>
    %850 = arith.addf %831, %849 : vector<8x256xf32>
    %c114_105 = arith.constant 114 : index
    %851 = memref.load %arg4[%c114_105] : memref<144xf32, #tpu.memory_space<smem>>
    %852 = vector.broadcast %851 : f32 to vector<8x256xf32>
    %853 = arith.mulf %852, %838 : vector<8x256xf32>
    %854 = arith.addf %835, %853 : vector<8x256xf32>
    %c16_i32_106 = arith.constant 16 : i32
    %855 = tpu.dynamic_rotate %711 by %c16_i32_106 dim 1 : vector<8x256xf32>, i32 -> vector<8x256xf32>
    %856 = vector.broadcast %797 : vector<1x256xf32> to vector<8x256xf32>
    %857 = arith.mulf %855, %856 : vector<8x256xf32>
    %c7_107 = arith.constant 7 : index
    %858 = memref.load %arg4[%c7_107] : memref<144xf32, #tpu.memory_space<smem>>
    %859 = vector.broadcast %858 : f32 to vector<8x256xf32>
    %860 = arith.mulf %859, %857 : vector<8x256xf32>
    %861 = arith.addf %842, %860 : vector<8x256xf32>
    %c43_108 = arith.constant 43 : index
    %862 = memref.load %arg4[%c43_108] : memref<144xf32, #tpu.memory_space<smem>>
    %863 = vector.broadcast %862 : f32 to vector<8x256xf32>
    %864 = arith.mulf %863, %857 : vector<8x256xf32>
    %865 = arith.addf %846, %864 : vector<8x256xf32>
    %c79_109 = arith.constant 79 : index
    %866 = memref.load %arg4[%c79_109] : memref<144xf32, #tpu.memory_space<smem>>
    %867 = vector.broadcast %866 : f32 to vector<8x256xf32>
    %868 = arith.mulf %867, %857 : vector<8x256xf32>
    %869 = arith.addf %850, %868 : vector<8x256xf32>
    %c115_110 = arith.constant 115 : index
    %870 = memref.load %arg4[%c115_110] : memref<144xf32, #tpu.memory_space<smem>>
    %871 = vector.broadcast %870 : f32 to vector<8x256xf32>
    %872 = arith.mulf %871, %857 : vector<8x256xf32>
    %873 = arith.addf %854, %872 : vector<8x256xf32>
    %c2_111 = arith.constant 2 : index
    %c0_112 = arith.constant 0 : index
    %874 = vector.load %arg6[%c2_111, %c0_112] : memref<9x256xf32, #tpu.memory_space<vmem>>, vector<1x256xf32>
    %c15_i32_113 = arith.constant 15 : i32
    %875 = tpu.dynamic_rotate %705 by %c15_i32_113 dim 1 : vector<8x256xf32>, i32 -> vector<8x256xf32>
    %876 = vector.broadcast %874 : vector<1x256xf32> to vector<8x256xf32>
    %877 = arith.mulf %875, %876 : vector<8x256xf32>
    %c8_114 = arith.constant 8 : index
    %878 = memref.load %arg4[%c8_114] : memref<144xf32, #tpu.memory_space<smem>>
    %879 = vector.broadcast %878 : f32 to vector<8x256xf32>
    %880 = arith.mulf %879, %877 : vector<8x256xf32>
    %881 = arith.addf %861, %880 : vector<8x256xf32>
    %c44_115 = arith.constant 44 : index
    %882 = memref.load %arg4[%c44_115] : memref<144xf32, #tpu.memory_space<smem>>
    %883 = vector.broadcast %882 : f32 to vector<8x256xf32>
    %884 = arith.mulf %883, %877 : vector<8x256xf32>
    %885 = arith.addf %865, %884 : vector<8x256xf32>
    %c80_116 = arith.constant 80 : index
    %886 = memref.load %arg4[%c80_116] : memref<144xf32, #tpu.memory_space<smem>>
    %887 = vector.broadcast %886 : f32 to vector<8x256xf32>
    %888 = arith.mulf %887, %877 : vector<8x256xf32>
    %889 = arith.addf %869, %888 : vector<8x256xf32>
    %c116_117 = arith.constant 116 : index
    %890 = memref.load %arg4[%c116_117] : memref<144xf32, #tpu.memory_space<smem>>
    %891 = vector.broadcast %890 : f32 to vector<8x256xf32>
    %892 = arith.mulf %891, %877 : vector<8x256xf32>
    %893 = arith.addf %873, %892 : vector<8x256xf32>
    %c15_i32_118 = arith.constant 15 : i32
    %894 = tpu.dynamic_rotate %707 by %c15_i32_118 dim 1 : vector<8x256xf32>, i32 -> vector<8x256xf32>
    %895 = vector.broadcast %874 : vector<1x256xf32> to vector<8x256xf32>
    %896 = arith.mulf %894, %895 : vector<8x256xf32>
    %c9_119 = arith.constant 9 : index
    %897 = memref.load %arg4[%c9_119] : memref<144xf32, #tpu.memory_space<smem>>
    %898 = vector.broadcast %897 : f32 to vector<8x256xf32>
    %899 = arith.mulf %898, %896 : vector<8x256xf32>
    %900 = arith.addf %881, %899 : vector<8x256xf32>
    %c45_120 = arith.constant 45 : index
    %901 = memref.load %arg4[%c45_120] : memref<144xf32, #tpu.memory_space<smem>>
    %902 = vector.broadcast %901 : f32 to vector<8x256xf32>
    %903 = arith.mulf %902, %896 : vector<8x256xf32>
    %904 = arith.addf %885, %903 : vector<8x256xf32>
    %c81_121 = arith.constant 81 : index
    %905 = memref.load %arg4[%c81_121] : memref<144xf32, #tpu.memory_space<smem>>
    %906 = vector.broadcast %905 : f32 to vector<8x256xf32>
    %907 = arith.mulf %906, %896 : vector<8x256xf32>
    %908 = arith.addf %889, %907 : vector<8x256xf32>
    %c117_122 = arith.constant 117 : index
    %909 = memref.load %arg4[%c117_122] : memref<144xf32, #tpu.memory_space<smem>>
    %910 = vector.broadcast %909 : f32 to vector<8x256xf32>
    %911 = arith.mulf %910, %896 : vector<8x256xf32>
    %912 = arith.addf %893, %911 : vector<8x256xf32>
    %c15_i32_123 = arith.constant 15 : i32
    %913 = tpu.dynamic_rotate %709 by %c15_i32_123 dim 1 : vector<8x256xf32>, i32 -> vector<8x256xf32>
    %914 = vector.broadcast %874 : vector<1x256xf32> to vector<8x256xf32>
    %915 = arith.mulf %913, %914 : vector<8x256xf32>
    %c10_124 = arith.constant 10 : index
    %916 = memref.load %arg4[%c10_124] : memref<144xf32, #tpu.memory_space<smem>>
    %917 = vector.broadcast %916 : f32 to vector<8x256xf32>
    %918 = arith.mulf %917, %915 : vector<8x256xf32>
    %919 = arith.addf %900, %918 : vector<8x256xf32>
    %c46_125 = arith.constant 46 : index
    %920 = memref.load %arg4[%c46_125] : memref<144xf32, #tpu.memory_space<smem>>
    %921 = vector.broadcast %920 : f32 to vector<8x256xf32>
    %922 = arith.mulf %921, %915 : vector<8x256xf32>
    %923 = arith.addf %904, %922 : vector<8x256xf32>
    %c82_126 = arith.constant 82 : index
    %924 = memref.load %arg4[%c82_126] : memref<144xf32, #tpu.memory_space<smem>>
    %925 = vector.broadcast %924 : f32 to vector<8x256xf32>
    %926 = arith.mulf %925, %915 : vector<8x256xf32>
    %927 = arith.addf %908, %926 : vector<8x256xf32>
    %c118_127 = arith.constant 118 : index
    %928 = memref.load %arg4[%c118_127] : memref<144xf32, #tpu.memory_space<smem>>
    %929 = vector.broadcast %928 : f32 to vector<8x256xf32>
    %930 = arith.mulf %929, %915 : vector<8x256xf32>
    %931 = arith.addf %912, %930 : vector<8x256xf32>
    %c15_i32_128 = arith.constant 15 : i32
    %932 = tpu.dynamic_rotate %711 by %c15_i32_128 dim 1 : vector<8x256xf32>, i32 -> vector<8x256xf32>
    %933 = vector.broadcast %874 : vector<1x256xf32> to vector<8x256xf32>
    %934 = arith.mulf %932, %933 : vector<8x256xf32>
    %c11_129 = arith.constant 11 : index
    %935 = memref.load %arg4[%c11_129] : memref<144xf32, #tpu.memory_space<smem>>
    %936 = vector.broadcast %935 : f32 to vector<8x256xf32>
    %937 = arith.mulf %936, %934 : vector<8x256xf32>
    %938 = arith.addf %919, %937 : vector<8x256xf32>
    %c47_130 = arith.constant 47 : index
    %939 = memref.load %arg4[%c47_130] : memref<144xf32, #tpu.memory_space<smem>>
    %940 = vector.broadcast %939 : f32 to vector<8x256xf32>
    %941 = arith.mulf %940, %934 : vector<8x256xf32>
    %942 = arith.addf %923, %941 : vector<8x256xf32>
    %c83_131 = arith.constant 83 : index
    %943 = memref.load %arg4[%c83_131] : memref<144xf32, #tpu.memory_space<smem>>
    %944 = vector.broadcast %943 : f32 to vector<8x256xf32>
    %945 = arith.mulf %944, %934 : vector<8x256xf32>
    %946 = arith.addf %927, %945 : vector<8x256xf32>
    %c119_132 = arith.constant 119 : index
    %947 = memref.load %arg4[%c119_132] : memref<144xf32, #tpu.memory_space<smem>>
    %948 = vector.broadcast %947 : f32 to vector<8x256xf32>
    %949 = arith.mulf %948, %934 : vector<8x256xf32>
    %950 = arith.addf %931, %949 : vector<8x256xf32>
    %c3_133 = arith.constant 3 : index
    %c0_134 = arith.constant 0 : index
    %951 = vector.load %arg6[%c3_133, %c0_134] : memref<9x256xf32, #tpu.memory_space<vmem>>, vector<1x256xf32>
    %c1_i32_135 = arith.constant 1 : i32
    %952 = tpu.dynamic_rotate %705 by %c1_i32_135 dim 1 : vector<8x256xf32>, i32 -> vector<8x256xf32>
    %953 = vector.broadcast %951 : vector<1x256xf32> to vector<8x256xf32>
    %954 = arith.mulf %952, %953 : vector<8x256xf32>
    %c12_136 = arith.constant 12 : index
    %955 = memref.load %arg4[%c12_136] : memref<144xf32, #tpu.memory_space<smem>>
    %956 = vector.broadcast %955 : f32 to vector<8x256xf32>
    %957 = arith.mulf %956, %954 : vector<8x256xf32>
    %958 = arith.addf %938, %957 : vector<8x256xf32>
    %c48_137 = arith.constant 48 : index
    %959 = memref.load %arg4[%c48_137] : memref<144xf32, #tpu.memory_space<smem>>
    %960 = vector.broadcast %959 : f32 to vector<8x256xf32>
    %961 = arith.mulf %960, %954 : vector<8x256xf32>
    %962 = arith.addf %942, %961 : vector<8x256xf32>
    %c84_138 = arith.constant 84 : index
    %963 = memref.load %arg4[%c84_138] : memref<144xf32, #tpu.memory_space<smem>>
    %964 = vector.broadcast %963 : f32 to vector<8x256xf32>
    %965 = arith.mulf %964, %954 : vector<8x256xf32>
    %966 = arith.addf %946, %965 : vector<8x256xf32>
    %c120_139 = arith.constant 120 : index
    %967 = memref.load %arg4[%c120_139] : memref<144xf32, #tpu.memory_space<smem>>
    %968 = vector.broadcast %967 : f32 to vector<8x256xf32>
    %969 = arith.mulf %968, %954 : vector<8x256xf32>
    %970 = arith.addf %950, %969 : vector<8x256xf32>
    %c1_i32_140 = arith.constant 1 : i32
    %971 = tpu.dynamic_rotate %707 by %c1_i32_140 dim 1 : vector<8x256xf32>, i32 -> vector<8x256xf32>
    %972 = vector.broadcast %951 : vector<1x256xf32> to vector<8x256xf32>
    %973 = arith.mulf %971, %972 : vector<8x256xf32>
    %c13_141 = arith.constant 13 : index
    %974 = memref.load %arg4[%c13_141] : memref<144xf32, #tpu.memory_space<smem>>
    %975 = vector.broadcast %974 : f32 to vector<8x256xf32>
    %976 = arith.mulf %975, %973 : vector<8x256xf32>
    %977 = arith.addf %958, %976 : vector<8x256xf32>
    %c49_142 = arith.constant 49 : index
    %978 = memref.load %arg4[%c49_142] : memref<144xf32, #tpu.memory_space<smem>>
    %979 = vector.broadcast %978 : f32 to vector<8x256xf32>
    %980 = arith.mulf %979, %973 : vector<8x256xf32>
    %981 = arith.addf %962, %980 : vector<8x256xf32>
    %c85_143 = arith.constant 85 : index
    %982 = memref.load %arg4[%c85_143] : memref<144xf32, #tpu.memory_space<smem>>
    %983 = vector.broadcast %982 : f32 to vector<8x256xf32>
    %984 = arith.mulf %983, %973 : vector<8x256xf32>
    %985 = arith.addf %966, %984 : vector<8x256xf32>
    %c121_144 = arith.constant 121 : index
    %986 = memref.load %arg4[%c121_144] : memref<144xf32, #tpu.memory_space<smem>>
    %987 = vector.broadcast %986 : f32 to vector<8x256xf32>
    %988 = arith.mulf %987, %973 : vector<8x256xf32>
    %989 = arith.addf %970, %988 : vector<8x256xf32>
    %c1_i32_145 = arith.constant 1 : i32
    %990 = tpu.dynamic_rotate %709 by %c1_i32_145 dim 1 : vector<8x256xf32>, i32 -> vector<8x256xf32>
    %991 = vector.broadcast %951 : vector<1x256xf32> to vector<8x256xf32>
    %992 = arith.mulf %990, %991 : vector<8x256xf32>
    %c14_146 = arith.constant 14 : index
    %993 = memref.load %arg4[%c14_146] : memref<144xf32, #tpu.memory_space<smem>>
    %994 = vector.broadcast %993 : f32 to vector<8x256xf32>
    %995 = arith.mulf %994, %992 : vector<8x256xf32>
    %996 = arith.addf %977, %995 : vector<8x256xf32>
    %c50_147 = arith.constant 50 : index
    %997 = memref.load %arg4[%c50_147] : memref<144xf32, #tpu.memory_space<smem>>
    %998 = vector.broadcast %997 : f32 to vector<8x256xf32>
    %999 = arith.mulf %998, %992 : vector<8x256xf32>
    %1000 = arith.addf %981, %999 : vector<8x256xf32>
    %c86_148 = arith.constant 86 : index
    %1001 = memref.load %arg4[%c86_148] : memref<144xf32, #tpu.memory_space<smem>>
    %1002 = vector.broadcast %1001 : f32 to vector<8x256xf32>
    %1003 = arith.mulf %1002, %992 : vector<8x256xf32>
    %1004 = arith.addf %985, %1003 : vector<8x256xf32>
    %c122_149 = arith.constant 122 : index
    %1005 = memref.load %arg4[%c122_149] : memref<144xf32, #tpu.memory_space<smem>>
    %1006 = vector.broadcast %1005 : f32 to vector<8x256xf32>
    %1007 = arith.mulf %1006, %992 : vector<8x256xf32>
    %1008 = arith.addf %989, %1007 : vector<8x256xf32>
    %c1_i32_150 = arith.constant 1 : i32
    %1009 = tpu.dynamic_rotate %711 by %c1_i32_150 dim 1 : vector<8x256xf32>, i32 -> vector<8x256xf32>
    %1010 = vector.broadcast %951 : vector<1x256xf32> to vector<8x256xf32>
    %1011 = arith.mulf %1009, %1010 : vector<8x256xf32>
    %c15_151 = arith.constant 15 : index
    %1012 = memref.load %arg4[%c15_151] : memref<144xf32, #tpu.memory_space<smem>>
    %1013 = vector.broadcast %1012 : f32 to vector<8x256xf32>
    %1014 = arith.mulf %1013, %1011 : vector<8x256xf32>
    %1015 = arith.addf %996, %1014 : vector<8x256xf32>
    %c51_152 = arith.constant 51 : index
    %1016 = memref.load %arg4[%c51_152] : memref<144xf32, #tpu.memory_space<smem>>
    %1017 = vector.broadcast %1016 : f32 to vector<8x256xf32>
    %1018 = arith.mulf %1017, %1011 : vector<8x256xf32>
    %1019 = arith.addf %1000, %1018 : vector<8x256xf32>
    %c87_153 = arith.constant 87 : index
    %1020 = memref.load %arg4[%c87_153] : memref<144xf32, #tpu.memory_space<smem>>
    %1021 = vector.broadcast %1020 : f32 to vector<8x256xf32>
    %1022 = arith.mulf %1021, %1011 : vector<8x256xf32>
    %1023 = arith.addf %1004, %1022 : vector<8x256xf32>
    %c123_154 = arith.constant 123 : index
    %1024 = memref.load %arg4[%c123_154] : memref<144xf32, #tpu.memory_space<smem>>
    %1025 = vector.broadcast %1024 : f32 to vector<8x256xf32>
    %1026 = arith.mulf %1025, %1011 : vector<8x256xf32>
    %1027 = arith.addf %1008, %1026 : vector<8x256xf32>
    %c16_155 = arith.constant 16 : index
    %1028 = memref.load %arg4[%c16_155] : memref<144xf32, #tpu.memory_space<smem>>
    %1029 = vector.broadcast %1028 : f32 to vector<8x256xf32>
    %1030 = arith.mulf %1029, %705 : vector<8x256xf32>
    %1031 = arith.addf %1015, %1030 : vector<8x256xf32>
    %c52_156 = arith.constant 52 : index
    %1032 = memref.load %arg4[%c52_156] : memref<144xf32, #tpu.memory_space<smem>>
    %1033 = vector.broadcast %1032 : f32 to vector<8x256xf32>
    %1034 = arith.mulf %1033, %705 : vector<8x256xf32>
    %1035 = arith.addf %1019, %1034 : vector<8x256xf32>
    %c88_157 = arith.constant 88 : index
    %1036 = memref.load %arg4[%c88_157] : memref<144xf32, #tpu.memory_space<smem>>
    %1037 = vector.broadcast %1036 : f32 to vector<8x256xf32>
    %1038 = arith.mulf %1037, %705 : vector<8x256xf32>
    %1039 = arith.addf %1023, %1038 : vector<8x256xf32>
    %c124_158 = arith.constant 124 : index
    %1040 = memref.load %arg4[%c124_158] : memref<144xf32, #tpu.memory_space<smem>>
    %1041 = vector.broadcast %1040 : f32 to vector<8x256xf32>
    %1042 = arith.mulf %1041, %705 : vector<8x256xf32>
    %1043 = arith.addf %1027, %1042 : vector<8x256xf32>
    %c17_159 = arith.constant 17 : index
    %1044 = memref.load %arg4[%c17_159] : memref<144xf32, #tpu.memory_space<smem>>
    %1045 = vector.broadcast %1044 : f32 to vector<8x256xf32>
    %1046 = arith.mulf %1045, %707 : vector<8x256xf32>
    %1047 = arith.addf %1031, %1046 : vector<8x256xf32>
    %c53_160 = arith.constant 53 : index
    %1048 = memref.load %arg4[%c53_160] : memref<144xf32, #tpu.memory_space<smem>>
    %1049 = vector.broadcast %1048 : f32 to vector<8x256xf32>
    %1050 = arith.mulf %1049, %707 : vector<8x256xf32>
    %1051 = arith.addf %1035, %1050 : vector<8x256xf32>
    %c89_161 = arith.constant 89 : index
    %1052 = memref.load %arg4[%c89_161] : memref<144xf32, #tpu.memory_space<smem>>
    %1053 = vector.broadcast %1052 : f32 to vector<8x256xf32>
    %1054 = arith.mulf %1053, %707 : vector<8x256xf32>
    %1055 = arith.addf %1039, %1054 : vector<8x256xf32>
    %c125_162 = arith.constant 125 : index
    %1056 = memref.load %arg4[%c125_162] : memref<144xf32, #tpu.memory_space<smem>>
    %1057 = vector.broadcast %1056 : f32 to vector<8x256xf32>
    %1058 = arith.mulf %1057, %707 : vector<8x256xf32>
    %1059 = arith.addf %1043, %1058 : vector<8x256xf32>
    %c18_163 = arith.constant 18 : index
    %1060 = memref.load %arg4[%c18_163] : memref<144xf32, #tpu.memory_space<smem>>
    %1061 = vector.broadcast %1060 : f32 to vector<8x256xf32>
    %1062 = arith.mulf %1061, %709 : vector<8x256xf32>
    %1063 = arith.addf %1047, %1062 : vector<8x256xf32>
    %c54_164 = arith.constant 54 : index
    %1064 = memref.load %arg4[%c54_164] : memref<144xf32, #tpu.memory_space<smem>>
    %1065 = vector.broadcast %1064 : f32 to vector<8x256xf32>
    %1066 = arith.mulf %1065, %709 : vector<8x256xf32>
    %1067 = arith.addf %1051, %1066 : vector<8x256xf32>
    %c90_165 = arith.constant 90 : index
    %1068 = memref.load %arg4[%c90_165] : memref<144xf32, #tpu.memory_space<smem>>
    %1069 = vector.broadcast %1068 : f32 to vector<8x256xf32>
    %1070 = arith.mulf %1069, %709 : vector<8x256xf32>
    %1071 = arith.addf %1055, %1070 : vector<8x256xf32>
    %c126_166 = arith.constant 126 : index
    %1072 = memref.load %arg4[%c126_166] : memref<144xf32, #tpu.memory_space<smem>>
    %1073 = vector.broadcast %1072 : f32 to vector<8x256xf32>
    %1074 = arith.mulf %1073, %709 : vector<8x256xf32>
    %1075 = arith.addf %1059, %1074 : vector<8x256xf32>
    %c19_167 = arith.constant 19 : index
    %1076 = memref.load %arg4[%c19_167] : memref<144xf32, #tpu.memory_space<smem>>
    %1077 = vector.broadcast %1076 : f32 to vector<8x256xf32>
    %1078 = arith.mulf %1077, %711 : vector<8x256xf32>
    %1079 = arith.addf %1063, %1078 : vector<8x256xf32>
    %c55_168 = arith.constant 55 : index
    %1080 = memref.load %arg4[%c55_168] : memref<144xf32, #tpu.memory_space<smem>>
    %1081 = vector.broadcast %1080 : f32 to vector<8x256xf32>
    %1082 = arith.mulf %1081, %711 : vector<8x256xf32>
    %1083 = arith.addf %1067, %1082 : vector<8x256xf32>
    %c91_169 = arith.constant 91 : index
    %1084 = memref.load %arg4[%c91_169] : memref<144xf32, #tpu.memory_space<smem>>
    %1085 = vector.broadcast %1084 : f32 to vector<8x256xf32>
    %1086 = arith.mulf %1085, %711 : vector<8x256xf32>
    %1087 = arith.addf %1071, %1086 : vector<8x256xf32>
    %c127_170 = arith.constant 127 : index
    %1088 = memref.load %arg4[%c127_170] : memref<144xf32, #tpu.memory_space<smem>>
    %1089 = vector.broadcast %1088 : f32 to vector<8x256xf32>
    %1090 = arith.mulf %1089, %711 : vector<8x256xf32>
    %1091 = arith.addf %1075, %1090 : vector<8x256xf32>
    %c5_171 = arith.constant 5 : index
    %c0_172 = arith.constant 0 : index
    %1092 = vector.load %arg6[%c5_171, %c0_172] : memref<9x256xf32, #tpu.memory_space<vmem>>, vector<1x256xf32>
    %c255_i32_173 = arith.constant 255 : i32
    %1093 = tpu.dynamic_rotate %705 by %c255_i32_173 dim 1 : vector<8x256xf32>, i32 -> vector<8x256xf32>
    %1094 = vector.broadcast %1092 : vector<1x256xf32> to vector<8x256xf32>
    %1095 = arith.mulf %1093, %1094 : vector<8x256xf32>
    %c20_174 = arith.constant 20 : index
    %1096 = memref.load %arg4[%c20_174] : memref<144xf32, #tpu.memory_space<smem>>
    %1097 = vector.broadcast %1096 : f32 to vector<8x256xf32>
    %1098 = arith.mulf %1097, %1095 : vector<8x256xf32>
    %1099 = arith.addf %1079, %1098 : vector<8x256xf32>
    %c56_175 = arith.constant 56 : index
    %1100 = memref.load %arg4[%c56_175] : memref<144xf32, #tpu.memory_space<smem>>
    %1101 = vector.broadcast %1100 : f32 to vector<8x256xf32>
    %1102 = arith.mulf %1101, %1095 : vector<8x256xf32>
    %1103 = arith.addf %1083, %1102 : vector<8x256xf32>
    %c92_176 = arith.constant 92 : index
    %1104 = memref.load %arg4[%c92_176] : memref<144xf32, #tpu.memory_space<smem>>
    %1105 = vector.broadcast %1104 : f32 to vector<8x256xf32>
    %1106 = arith.mulf %1105, %1095 : vector<8x256xf32>
    %1107 = arith.addf %1087, %1106 : vector<8x256xf32>
    %c128_177 = arith.constant 128 : index
    %1108 = memref.load %arg4[%c128_177] : memref<144xf32, #tpu.memory_space<smem>>
    %1109 = vector.broadcast %1108 : f32 to vector<8x256xf32>
    %1110 = arith.mulf %1109, %1095 : vector<8x256xf32>
    %1111 = arith.addf %1091, %1110 : vector<8x256xf32>
    %c255_i32_178 = arith.constant 255 : i32
    %1112 = tpu.dynamic_rotate %707 by %c255_i32_178 dim 1 : vector<8x256xf32>, i32 -> vector<8x256xf32>
    %1113 = vector.broadcast %1092 : vector<1x256xf32> to vector<8x256xf32>
    %1114 = arith.mulf %1112, %1113 : vector<8x256xf32>
    %c21_179 = arith.constant 21 : index
    %1115 = memref.load %arg4[%c21_179] : memref<144xf32, #tpu.memory_space<smem>>
    %1116 = vector.broadcast %1115 : f32 to vector<8x256xf32>
    %1117 = arith.mulf %1116, %1114 : vector<8x256xf32>
    %1118 = arith.addf %1099, %1117 : vector<8x256xf32>
    %c57_180 = arith.constant 57 : index
    %1119 = memref.load %arg4[%c57_180] : memref<144xf32, #tpu.memory_space<smem>>
    %1120 = vector.broadcast %1119 : f32 to vector<8x256xf32>
    %1121 = arith.mulf %1120, %1114 : vector<8x256xf32>
    %1122 = arith.addf %1103, %1121 : vector<8x256xf32>
    %c93_181 = arith.constant 93 : index
    %1123 = memref.load %arg4[%c93_181] : memref<144xf32, #tpu.memory_space<smem>>
    %1124 = vector.broadcast %1123 : f32 to vector<8x256xf32>
    %1125 = arith.mulf %1124, %1114 : vector<8x256xf32>
    %1126 = arith.addf %1107, %1125 : vector<8x256xf32>
    %c129_182 = arith.constant 129 : index
    %1127 = memref.load %arg4[%c129_182] : memref<144xf32, #tpu.memory_space<smem>>
    %1128 = vector.broadcast %1127 : f32 to vector<8x256xf32>
    %1129 = arith.mulf %1128, %1114 : vector<8x256xf32>
    %1130 = arith.addf %1111, %1129 : vector<8x256xf32>
    %c255_i32_183 = arith.constant 255 : i32
    %1131 = tpu.dynamic_rotate %709 by %c255_i32_183 dim 1 : vector<8x256xf32>, i32 -> vector<8x256xf32>
    %1132 = vector.broadcast %1092 : vector<1x256xf32> to vector<8x256xf32>
    %1133 = arith.mulf %1131, %1132 : vector<8x256xf32>
    %c22_184 = arith.constant 22 : index
    %1134 = memref.load %arg4[%c22_184] : memref<144xf32, #tpu.memory_space<smem>>
    %1135 = vector.broadcast %1134 : f32 to vector<8x256xf32>
    %1136 = arith.mulf %1135, %1133 : vector<8x256xf32>
    %1137 = arith.addf %1118, %1136 : vector<8x256xf32>
    %c58_185 = arith.constant 58 : index
    %1138 = memref.load %arg4[%c58_185] : memref<144xf32, #tpu.memory_space<smem>>
    %1139 = vector.broadcast %1138 : f32 to vector<8x256xf32>
    %1140 = arith.mulf %1139, %1133 : vector<8x256xf32>
    %1141 = arith.addf %1122, %1140 : vector<8x256xf32>
    %c94_186 = arith.constant 94 : index
    %1142 = memref.load %arg4[%c94_186] : memref<144xf32, #tpu.memory_space<smem>>
    %1143 = vector.broadcast %1142 : f32 to vector<8x256xf32>
    %1144 = arith.mulf %1143, %1133 : vector<8x256xf32>
    %1145 = arith.addf %1126, %1144 : vector<8x256xf32>
    %c130_187 = arith.constant 130 : index
    %1146 = memref.load %arg4[%c130_187] : memref<144xf32, #tpu.memory_space<smem>>
    %1147 = vector.broadcast %1146 : f32 to vector<8x256xf32>
    %1148 = arith.mulf %1147, %1133 : vector<8x256xf32>
    %1149 = arith.addf %1130, %1148 : vector<8x256xf32>
    %c255_i32_188 = arith.constant 255 : i32
    %1150 = tpu.dynamic_rotate %711 by %c255_i32_188 dim 1 : vector<8x256xf32>, i32 -> vector<8x256xf32>
    %1151 = vector.broadcast %1092 : vector<1x256xf32> to vector<8x256xf32>
    %1152 = arith.mulf %1150, %1151 : vector<8x256xf32>
    %c23_189 = arith.constant 23 : index
    %1153 = memref.load %arg4[%c23_189] : memref<144xf32, #tpu.memory_space<smem>>
    %1154 = vector.broadcast %1153 : f32 to vector<8x256xf32>
    %1155 = arith.mulf %1154, %1152 : vector<8x256xf32>
    %1156 = arith.addf %1137, %1155 : vector<8x256xf32>
    %c59_190 = arith.constant 59 : index
    %1157 = memref.load %arg4[%c59_190] : memref<144xf32, #tpu.memory_space<smem>>
    %1158 = vector.broadcast %1157 : f32 to vector<8x256xf32>
    %1159 = arith.mulf %1158, %1152 : vector<8x256xf32>
    %1160 = arith.addf %1141, %1159 : vector<8x256xf32>
    %c95_191 = arith.constant 95 : index
    %1161 = memref.load %arg4[%c95_191] : memref<144xf32, #tpu.memory_space<smem>>
    %1162 = vector.broadcast %1161 : f32 to vector<8x256xf32>
    %1163 = arith.mulf %1162, %1152 : vector<8x256xf32>
    %1164 = arith.addf %1145, %1163 : vector<8x256xf32>
    %c131_192 = arith.constant 131 : index
    %1165 = memref.load %arg4[%c131_192] : memref<144xf32, #tpu.memory_space<smem>>
    %1166 = vector.broadcast %1165 : f32 to vector<8x256xf32>
    %1167 = arith.mulf %1166, %1152 : vector<8x256xf32>
    %1168 = arith.addf %1149, %1167 : vector<8x256xf32>
    %c6_193 = arith.constant 6 : index
    %c0_194 = arith.constant 0 : index
    %1169 = vector.load %arg6[%c6_193, %c0_194] : memref<9x256xf32, #tpu.memory_space<vmem>>, vector<1x256xf32>
    %c241_i32_195 = arith.constant 241 : i32
    %1170 = tpu.dynamic_rotate %705 by %c241_i32_195 dim 1 : vector<8x256xf32>, i32 -> vector<8x256xf32>
    %1171 = vector.broadcast %1169 : vector<1x256xf32> to vector<8x256xf32>
    %1172 = arith.mulf %1170, %1171 : vector<8x256xf32>
    %c24_196 = arith.constant 24 : index
    %1173 = memref.load %arg4[%c24_196] : memref<144xf32, #tpu.memory_space<smem>>
    %1174 = vector.broadcast %1173 : f32 to vector<8x256xf32>
    %1175 = arith.mulf %1174, %1172 : vector<8x256xf32>
    %1176 = arith.addf %1156, %1175 : vector<8x256xf32>
    %c60_197 = arith.constant 60 : index
    %1177 = memref.load %arg4[%c60_197] : memref<144xf32, #tpu.memory_space<smem>>
    %1178 = vector.broadcast %1177 : f32 to vector<8x256xf32>
    %1179 = arith.mulf %1178, %1172 : vector<8x256xf32>
    %1180 = arith.addf %1160, %1179 : vector<8x256xf32>
    %c96_198 = arith.constant 96 : index
    %1181 = memref.load %arg4[%c96_198] : memref<144xf32, #tpu.memory_space<smem>>
    %1182 = vector.broadcast %1181 : f32 to vector<8x256xf32>
    %1183 = arith.mulf %1182, %1172 : vector<8x256xf32>
    %1184 = arith.addf %1164, %1183 : vector<8x256xf32>
    %c132_199 = arith.constant 132 : index
    %1185 = memref.load %arg4[%c132_199] : memref<144xf32, #tpu.memory_space<smem>>
    %1186 = vector.broadcast %1185 : f32 to vector<8x256xf32>
    %1187 = arith.mulf %1186, %1172 : vector<8x256xf32>
    %1188 = arith.addf %1168, %1187 : vector<8x256xf32>
    %c241_i32_200 = arith.constant 241 : i32
    %1189 = tpu.dynamic_rotate %707 by %c241_i32_200 dim 1 : vector<8x256xf32>, i32 -> vector<8x256xf32>
    %1190 = vector.broadcast %1169 : vector<1x256xf32> to vector<8x256xf32>
    %1191 = arith.mulf %1189, %1190 : vector<8x256xf32>
    %c25_201 = arith.constant 25 : index
    %1192 = memref.load %arg4[%c25_201] : memref<144xf32, #tpu.memory_space<smem>>
    %1193 = vector.broadcast %1192 : f32 to vector<8x256xf32>
    %1194 = arith.mulf %1193, %1191 : vector<8x256xf32>
    %1195 = arith.addf %1176, %1194 : vector<8x256xf32>
    %c61_202 = arith.constant 61 : index
    %1196 = memref.load %arg4[%c61_202] : memref<144xf32, #tpu.memory_space<smem>>
    %1197 = vector.broadcast %1196 : f32 to vector<8x256xf32>
    %1198 = arith.mulf %1197, %1191 : vector<8x256xf32>
    %1199 = arith.addf %1180, %1198 : vector<8x256xf32>
    %c97_203 = arith.constant 97 : index
    %1200 = memref.load %arg4[%c97_203] : memref<144xf32, #tpu.memory_space<smem>>
    %1201 = vector.broadcast %1200 : f32 to vector<8x256xf32>
    %1202 = arith.mulf %1201, %1191 : vector<8x256xf32>
    %1203 = arith.addf %1184, %1202 : vector<8x256xf32>
    %c133_204 = arith.constant 133 : index
    %1204 = memref.load %arg4[%c133_204] : memref<144xf32, #tpu.memory_space<smem>>
    %1205 = vector.broadcast %1204 : f32 to vector<8x256xf32>
    %1206 = arith.mulf %1205, %1191 : vector<8x256xf32>
    %1207 = arith.addf %1188, %1206 : vector<8x256xf32>
    %c241_i32_205 = arith.constant 241 : i32
    %1208 = tpu.dynamic_rotate %709 by %c241_i32_205 dim 1 : vector<8x256xf32>, i32 -> vector<8x256xf32>
    %1209 = vector.broadcast %1169 : vector<1x256xf32> to vector<8x256xf32>
    %1210 = arith.mulf %1208, %1209 : vector<8x256xf32>
    %c26_206 = arith.constant 26 : index
    %1211 = memref.load %arg4[%c26_206] : memref<144xf32, #tpu.memory_space<smem>>
    %1212 = vector.broadcast %1211 : f32 to vector<8x256xf32>
    %1213 = arith.mulf %1212, %1210 : vector<8x256xf32>
    %1214 = arith.addf %1195, %1213 : vector<8x256xf32>
    %c62_207 = arith.constant 62 : index
    %1215 = memref.load %arg4[%c62_207] : memref<144xf32, #tpu.memory_space<smem>>
    %1216 = vector.broadcast %1215 : f32 to vector<8x256xf32>
    %1217 = arith.mulf %1216, %1210 : vector<8x256xf32>
    %1218 = arith.addf %1199, %1217 : vector<8x256xf32>
    %c98_208 = arith.constant 98 : index
    %1219 = memref.load %arg4[%c98_208] : memref<144xf32, #tpu.memory_space<smem>>
    %1220 = vector.broadcast %1219 : f32 to vector<8x256xf32>
    %1221 = arith.mulf %1220, %1210 : vector<8x256xf32>
    %1222 = arith.addf %1203, %1221 : vector<8x256xf32>
    %c134_209 = arith.constant 134 : index
    %1223 = memref.load %arg4[%c134_209] : memref<144xf32, #tpu.memory_space<smem>>
    %1224 = vector.broadcast %1223 : f32 to vector<8x256xf32>
    %1225 = arith.mulf %1224, %1210 : vector<8x256xf32>
    %1226 = arith.addf %1207, %1225 : vector<8x256xf32>
    %c241_i32_210 = arith.constant 241 : i32
    %1227 = tpu.dynamic_rotate %711 by %c241_i32_210 dim 1 : vector<8x256xf32>, i32 -> vector<8x256xf32>
    %1228 = vector.broadcast %1169 : vector<1x256xf32> to vector<8x256xf32>
    %1229 = arith.mulf %1227, %1228 : vector<8x256xf32>
    %c27_211 = arith.constant 27 : index
    %1230 = memref.load %arg4[%c27_211] : memref<144xf32, #tpu.memory_space<smem>>
    %1231 = vector.broadcast %1230 : f32 to vector<8x256xf32>
    %1232 = arith.mulf %1231, %1229 : vector<8x256xf32>
    %1233 = arith.addf %1214, %1232 : vector<8x256xf32>
    %c63_212 = arith.constant 63 : index
    %1234 = memref.load %arg4[%c63_212] : memref<144xf32, #tpu.memory_space<smem>>
    %1235 = vector.broadcast %1234 : f32 to vector<8x256xf32>
    %1236 = arith.mulf %1235, %1229 : vector<8x256xf32>
    %1237 = arith.addf %1218, %1236 : vector<8x256xf32>
    %c99_213 = arith.constant 99 : index
    %1238 = memref.load %arg4[%c99_213] : memref<144xf32, #tpu.memory_space<smem>>
    %1239 = vector.broadcast %1238 : f32 to vector<8x256xf32>
    %1240 = arith.mulf %1239, %1229 : vector<8x256xf32>
    %1241 = arith.addf %1222, %1240 : vector<8x256xf32>
    %c135_214 = arith.constant 135 : index
    %1242 = memref.load %arg4[%c135_214] : memref<144xf32, #tpu.memory_space<smem>>
    %1243 = vector.broadcast %1242 : f32 to vector<8x256xf32>
    %1244 = arith.mulf %1243, %1229 : vector<8x256xf32>
    %1245 = arith.addf %1226, %1244 : vector<8x256xf32>
    %c7_215 = arith.constant 7 : index
    %c0_216 = arith.constant 0 : index
    %1246 = vector.load %arg6[%c7_215, %c0_216] : memref<9x256xf32, #tpu.memory_space<vmem>>, vector<1x256xf32>
    %c240_i32_217 = arith.constant 240 : i32
    %1247 = tpu.dynamic_rotate %705 by %c240_i32_217 dim 1 : vector<8x256xf32>, i32 -> vector<8x256xf32>
    %1248 = vector.broadcast %1246 : vector<1x256xf32> to vector<8x256xf32>
    %1249 = arith.mulf %1247, %1248 : vector<8x256xf32>
    %c28_218 = arith.constant 28 : index
    %1250 = memref.load %arg4[%c28_218] : memref<144xf32, #tpu.memory_space<smem>>
    %1251 = vector.broadcast %1250 : f32 to vector<8x256xf32>
    %1252 = arith.mulf %1251, %1249 : vector<8x256xf32>
    %1253 = arith.addf %1233, %1252 : vector<8x256xf32>
    %c64_219 = arith.constant 64 : index
    %1254 = memref.load %arg4[%c64_219] : memref<144xf32, #tpu.memory_space<smem>>
    %1255 = vector.broadcast %1254 : f32 to vector<8x256xf32>
    %1256 = arith.mulf %1255, %1249 : vector<8x256xf32>
    %1257 = arith.addf %1237, %1256 : vector<8x256xf32>
    %c100_220 = arith.constant 100 : index
    %1258 = memref.load %arg4[%c100_220] : memref<144xf32, #tpu.memory_space<smem>>
    %1259 = vector.broadcast %1258 : f32 to vector<8x256xf32>
    %1260 = arith.mulf %1259, %1249 : vector<8x256xf32>
    %1261 = arith.addf %1241, %1260 : vector<8x256xf32>
    %c136_221 = arith.constant 136 : index
    %1262 = memref.load %arg4[%c136_221] : memref<144xf32, #tpu.memory_space<smem>>
    %1263 = vector.broadcast %1262 : f32 to vector<8x256xf32>
    %1264 = arith.mulf %1263, %1249 : vector<8x256xf32>
    %1265 = arith.addf %1245, %1264 : vector<8x256xf32>
    %c240_i32_222 = arith.constant 240 : i32
    %1266 = tpu.dynamic_rotate %707 by %c240_i32_222 dim 1 : vector<8x256xf32>, i32 -> vector<8x256xf32>
    %1267 = vector.broadcast %1246 : vector<1x256xf32> to vector<8x256xf32>
    %1268 = arith.mulf %1266, %1267 : vector<8x256xf32>
    %c29_223 = arith.constant 29 : index
    %1269 = memref.load %arg4[%c29_223] : memref<144xf32, #tpu.memory_space<smem>>
    %1270 = vector.broadcast %1269 : f32 to vector<8x256xf32>
    %1271 = arith.mulf %1270, %1268 : vector<8x256xf32>
    %1272 = arith.addf %1253, %1271 : vector<8x256xf32>
    %c65_224 = arith.constant 65 : index
    %1273 = memref.load %arg4[%c65_224] : memref<144xf32, #tpu.memory_space<smem>>
    %1274 = vector.broadcast %1273 : f32 to vector<8x256xf32>
    %1275 = arith.mulf %1274, %1268 : vector<8x256xf32>
    %1276 = arith.addf %1257, %1275 : vector<8x256xf32>
    %c101_225 = arith.constant 101 : index
    %1277 = memref.load %arg4[%c101_225] : memref<144xf32, #tpu.memory_space<smem>>
    %1278 = vector.broadcast %1277 : f32 to vector<8x256xf32>
    %1279 = arith.mulf %1278, %1268 : vector<8x256xf32>
    %1280 = arith.addf %1261, %1279 : vector<8x256xf32>
    %c137_226 = arith.constant 137 : index
    %1281 = memref.load %arg4[%c137_226] : memref<144xf32, #tpu.memory_space<smem>>
    %1282 = vector.broadcast %1281 : f32 to vector<8x256xf32>
    %1283 = arith.mulf %1282, %1268 : vector<8x256xf32>
    %1284 = arith.addf %1265, %1283 : vector<8x256xf32>
    %c240_i32_227 = arith.constant 240 : i32
    %1285 = tpu.dynamic_rotate %709 by %c240_i32_227 dim 1 : vector<8x256xf32>, i32 -> vector<8x256xf32>
    %1286 = vector.broadcast %1246 : vector<1x256xf32> to vector<8x256xf32>
    %1287 = arith.mulf %1285, %1286 : vector<8x256xf32>
    %c30_228 = arith.constant 30 : index
    %1288 = memref.load %arg4[%c30_228] : memref<144xf32, #tpu.memory_space<smem>>
    %1289 = vector.broadcast %1288 : f32 to vector<8x256xf32>
    %1290 = arith.mulf %1289, %1287 : vector<8x256xf32>
    %1291 = arith.addf %1272, %1290 : vector<8x256xf32>
    %c66_229 = arith.constant 66 : index
    %1292 = memref.load %arg4[%c66_229] : memref<144xf32, #tpu.memory_space<smem>>
    %1293 = vector.broadcast %1292 : f32 to vector<8x256xf32>
    %1294 = arith.mulf %1293, %1287 : vector<8x256xf32>
    %1295 = arith.addf %1276, %1294 : vector<8x256xf32>
    %c102_230 = arith.constant 102 : index
    %1296 = memref.load %arg4[%c102_230] : memref<144xf32, #tpu.memory_space<smem>>
    %1297 = vector.broadcast %1296 : f32 to vector<8x256xf32>
    %1298 = arith.mulf %1297, %1287 : vector<8x256xf32>
    %1299 = arith.addf %1280, %1298 : vector<8x256xf32>
    %c138_231 = arith.constant 138 : index
    %1300 = memref.load %arg4[%c138_231] : memref<144xf32, #tpu.memory_space<smem>>
    %1301 = vector.broadcast %1300 : f32 to vector<8x256xf32>
    %1302 = arith.mulf %1301, %1287 : vector<8x256xf32>
    %1303 = arith.addf %1284, %1302 : vector<8x256xf32>
    %c240_i32_232 = arith.constant 240 : i32
    %1304 = tpu.dynamic_rotate %711 by %c240_i32_232 dim 1 : vector<8x256xf32>, i32 -> vector<8x256xf32>
    %1305 = vector.broadcast %1246 : vector<1x256xf32> to vector<8x256xf32>
    %1306 = arith.mulf %1304, %1305 : vector<8x256xf32>
    %c31_233 = arith.constant 31 : index
    %1307 = memref.load %arg4[%c31_233] : memref<144xf32, #tpu.memory_space<smem>>
    %1308 = vector.broadcast %1307 : f32 to vector<8x256xf32>
    %1309 = arith.mulf %1308, %1306 : vector<8x256xf32>
    %1310 = arith.addf %1291, %1309 : vector<8x256xf32>
    %c67_234 = arith.constant 67 : index
    %1311 = memref.load %arg4[%c67_234] : memref<144xf32, #tpu.memory_space<smem>>
    %1312 = vector.broadcast %1311 : f32 to vector<8x256xf32>
    %1313 = arith.mulf %1312, %1306 : vector<8x256xf32>
    %1314 = arith.addf %1295, %1313 : vector<8x256xf32>
    %c103_235 = arith.constant 103 : index
    %1315 = memref.load %arg4[%c103_235] : memref<144xf32, #tpu.memory_space<smem>>
    %1316 = vector.broadcast %1315 : f32 to vector<8x256xf32>
    %1317 = arith.mulf %1316, %1306 : vector<8x256xf32>
    %1318 = arith.addf %1299, %1317 : vector<8x256xf32>
    %c139_236 = arith.constant 139 : index
    %1319 = memref.load %arg4[%c139_236] : memref<144xf32, #tpu.memory_space<smem>>
    %1320 = vector.broadcast %1319 : f32 to vector<8x256xf32>
    %1321 = arith.mulf %1320, %1306 : vector<8x256xf32>
    %1322 = arith.addf %1303, %1321 : vector<8x256xf32>
    %c8_237 = arith.constant 8 : index
    %c0_238 = arith.constant 0 : index
    %1323 = vector.load %arg6[%c8_237, %c0_238] : memref<9x256xf32, #tpu.memory_space<vmem>>, vector<1x256xf32>
    %c239_i32_239 = arith.constant 239 : i32
    %1324 = tpu.dynamic_rotate %705 by %c239_i32_239 dim 1 : vector<8x256xf32>, i32 -> vector<8x256xf32>
    %1325 = vector.broadcast %1323 : vector<1x256xf32> to vector<8x256xf32>
    %1326 = arith.mulf %1324, %1325 : vector<8x256xf32>
    %c32_240 = arith.constant 32 : index
    %1327 = memref.load %arg4[%c32_240] : memref<144xf32, #tpu.memory_space<smem>>
    %1328 = vector.broadcast %1327 : f32 to vector<8x256xf32>
    %1329 = arith.mulf %1328, %1326 : vector<8x256xf32>
    %1330 = arith.addf %1310, %1329 : vector<8x256xf32>
    %c68_241 = arith.constant 68 : index
    %1331 = memref.load %arg4[%c68_241] : memref<144xf32, #tpu.memory_space<smem>>
    %1332 = vector.broadcast %1331 : f32 to vector<8x256xf32>
    %1333 = arith.mulf %1332, %1326 : vector<8x256xf32>
    %1334 = arith.addf %1314, %1333 : vector<8x256xf32>
    %c104_242 = arith.constant 104 : index
    %1335 = memref.load %arg4[%c104_242] : memref<144xf32, #tpu.memory_space<smem>>
    %1336 = vector.broadcast %1335 : f32 to vector<8x256xf32>
    %1337 = arith.mulf %1336, %1326 : vector<8x256xf32>
    %1338 = arith.addf %1318, %1337 : vector<8x256xf32>
    %c140_243 = arith.constant 140 : index
    %1339 = memref.load %arg4[%c140_243] : memref<144xf32, #tpu.memory_space<smem>>
    %1340 = vector.broadcast %1339 : f32 to vector<8x256xf32>
    %1341 = arith.mulf %1340, %1326 : vector<8x256xf32>
    %1342 = arith.addf %1322, %1341 : vector<8x256xf32>
    %c239_i32_244 = arith.constant 239 : i32
    %1343 = tpu.dynamic_rotate %707 by %c239_i32_244 dim 1 : vector<8x256xf32>, i32 -> vector<8x256xf32>
    %1344 = vector.broadcast %1323 : vector<1x256xf32> to vector<8x256xf32>
    %1345 = arith.mulf %1343, %1344 : vector<8x256xf32>
    %c33_245 = arith.constant 33 : index
    %1346 = memref.load %arg4[%c33_245] : memref<144xf32, #tpu.memory_space<smem>>
    %1347 = vector.broadcast %1346 : f32 to vector<8x256xf32>
    %1348 = arith.mulf %1347, %1345 : vector<8x256xf32>
    %1349 = arith.addf %1330, %1348 : vector<8x256xf32>
    %c69_246 = arith.constant 69 : index
    %1350 = memref.load %arg4[%c69_246] : memref<144xf32, #tpu.memory_space<smem>>
    %1351 = vector.broadcast %1350 : f32 to vector<8x256xf32>
    %1352 = arith.mulf %1351, %1345 : vector<8x256xf32>
    %1353 = arith.addf %1334, %1352 : vector<8x256xf32>
    %c105_247 = arith.constant 105 : index
    %1354 = memref.load %arg4[%c105_247] : memref<144xf32, #tpu.memory_space<smem>>
    %1355 = vector.broadcast %1354 : f32 to vector<8x256xf32>
    %1356 = arith.mulf %1355, %1345 : vector<8x256xf32>
    %1357 = arith.addf %1338, %1356 : vector<8x256xf32>
    %c141_248 = arith.constant 141 : index
    %1358 = memref.load %arg4[%c141_248] : memref<144xf32, #tpu.memory_space<smem>>
    %1359 = vector.broadcast %1358 : f32 to vector<8x256xf32>
    %1360 = arith.mulf %1359, %1345 : vector<8x256xf32>
    %1361 = arith.addf %1342, %1360 : vector<8x256xf32>
    %c239_i32_249 = arith.constant 239 : i32
    %1362 = tpu.dynamic_rotate %709 by %c239_i32_249 dim 1 : vector<8x256xf32>, i32 -> vector<8x256xf32>
    %1363 = vector.broadcast %1323 : vector<1x256xf32> to vector<8x256xf32>
    %1364 = arith.mulf %1362, %1363 : vector<8x256xf32>
    %c34_250 = arith.constant 34 : index
    %1365 = memref.load %arg4[%c34_250] : memref<144xf32, #tpu.memory_space<smem>>
    %1366 = vector.broadcast %1365 : f32 to vector<8x256xf32>
    %1367 = arith.mulf %1366, %1364 : vector<8x256xf32>
    %1368 = arith.addf %1349, %1367 : vector<8x256xf32>
    %c70_251 = arith.constant 70 : index
    %1369 = memref.load %arg4[%c70_251] : memref<144xf32, #tpu.memory_space<smem>>
    %1370 = vector.broadcast %1369 : f32 to vector<8x256xf32>
    %1371 = arith.mulf %1370, %1364 : vector<8x256xf32>
    %1372 = arith.addf %1353, %1371 : vector<8x256xf32>
    %c106_252 = arith.constant 106 : index
    %1373 = memref.load %arg4[%c106_252] : memref<144xf32, #tpu.memory_space<smem>>
    %1374 = vector.broadcast %1373 : f32 to vector<8x256xf32>
    %1375 = arith.mulf %1374, %1364 : vector<8x256xf32>
    %1376 = arith.addf %1357, %1375 : vector<8x256xf32>
    %c142_253 = arith.constant 142 : index
    %1377 = memref.load %arg4[%c142_253] : memref<144xf32, #tpu.memory_space<smem>>
    %1378 = vector.broadcast %1377 : f32 to vector<8x256xf32>
    %1379 = arith.mulf %1378, %1364 : vector<8x256xf32>
    %1380 = arith.addf %1361, %1379 : vector<8x256xf32>
    %c239_i32_254 = arith.constant 239 : i32
    %1381 = tpu.dynamic_rotate %711 by %c239_i32_254 dim 1 : vector<8x256xf32>, i32 -> vector<8x256xf32>
    %1382 = vector.broadcast %1323 : vector<1x256xf32> to vector<8x256xf32>
    %1383 = arith.mulf %1381, %1382 : vector<8x256xf32>
    %c35_255 = arith.constant 35 : index
    %1384 = memref.load %arg4[%c35_255] : memref<144xf32, #tpu.memory_space<smem>>
    %1385 = vector.broadcast %1384 : f32 to vector<8x256xf32>
    %1386 = arith.mulf %1385, %1383 : vector<8x256xf32>
    %1387 = arith.addf %1368, %1386 : vector<8x256xf32>
    %c71_256 = arith.constant 71 : index
    %1388 = memref.load %arg4[%c71_256] : memref<144xf32, #tpu.memory_space<smem>>
    %1389 = vector.broadcast %1388 : f32 to vector<8x256xf32>
    %1390 = arith.mulf %1389, %1383 : vector<8x256xf32>
    %1391 = arith.addf %1372, %1390 : vector<8x256xf32>
    %c107_257 = arith.constant 107 : index
    %1392 = memref.load %arg4[%c107_257] : memref<144xf32, #tpu.memory_space<smem>>
    %1393 = vector.broadcast %1392 : f32 to vector<8x256xf32>
    %1394 = arith.mulf %1393, %1383 : vector<8x256xf32>
    %1395 = arith.addf %1376, %1394 : vector<8x256xf32>
    %c143_258 = arith.constant 143 : index
    %1396 = memref.load %arg4[%c143_258] : memref<144xf32, #tpu.memory_space<smem>>
    %1397 = vector.broadcast %1396 : f32 to vector<8x256xf32>
    %1398 = arith.mulf %1397, %1383 : vector<8x256xf32>
    %1399 = arith.addf %1380, %1398 : vector<8x256xf32>
    %1400 = arith.addf %1387, %1 : vector<8x256xf32>
    %c0_259 = arith.constant 0 : index
    %c0_260 = arith.constant 0 : index
    %c0_261 = arith.constant 0 : index
    %1401 = vector.load %arg7[%c0_259, %c0_260, %c0_261] : memref<4x8x256xf32, #tpu.memory_space<vmem>>, vector<1x8x256xf32>
    %1402 = vector.shape_cast %1401 : vector<1x8x256xf32> to vector<8x256xf32>
    %1403 = vector.shape_cast %1400 : vector<8x256xf32> to vector<1x8x256xf32>
    tpu.vector_store %arg7[%c0_259, %c0_260, %c0_261], %1403 {strides = array<i32>} : memref<4x8x256xf32, #tpu.memory_space<vmem>>, vector<1x8x256xf32>,
    %1404 = arith.addf %1391, %3 : vector<8x256xf32>
    %c1_262 = arith.constant 1 : index
    %c0_263 = arith.constant 0 : index
    %c0_264 = arith.constant 0 : index
    %1405 = vector.load %arg7[%c1_262, %c0_263, %c0_264] : memref<4x8x256xf32, #tpu.memory_space<vmem>>, vector<1x8x256xf32>
    %1406 = vector.shape_cast %1405 : vector<1x8x256xf32> to vector<8x256xf32>
    %1407 = vector.shape_cast %1404 : vector<8x256xf32> to vector<1x8x256xf32>
    tpu.vector_store %arg7[%c1_262, %c0_263, %c0_264], %1407 {strides = array<i32>} : memref<4x8x256xf32, #tpu.memory_space<vmem>>, vector<1x8x256xf32>,
    %1408 = arith.addf %1395, %5 : vector<8x256xf32>
    %c2_265 = arith.constant 2 : index
    %c0_266 = arith.constant 0 : index
    %c0_267 = arith.constant 0 : index
    %1409 = vector.load %arg7[%c2_265, %c0_266, %c0_267] : memref<4x8x256xf32, #tpu.memory_space<vmem>>, vector<1x8x256xf32>
    %1410 = vector.shape_cast %1409 : vector<1x8x256xf32> to vector<8x256xf32>
    %1411 = vector.shape_cast %1408 : vector<8x256xf32> to vector<1x8x256xf32>
    tpu.vector_store %arg7[%c2_265, %c0_266, %c0_267], %1411 {strides = array<i32>} : memref<4x8x256xf32, #tpu.memory_space<vmem>>, vector<1x8x256xf32>,
    %1412 = arith.addf %1399, %7 : vector<8x256xf32>
    %c3_268 = arith.constant 3 : index
    %c0_269 = arith.constant 0 : index
    %c0_270 = arith.constant 0 : index
    %1413 = vector.load %arg7[%c3_268, %c0_269, %c0_270] : memref<4x8x256xf32, #tpu.memory_space<vmem>>, vector<1x8x256xf32>
    %1414 = vector.shape_cast %1413 : vector<1x8x256xf32> to vector<8x256xf32>
    %1415 = vector.shape_cast %1412 : vector<8x256xf32> to vector<1x8x256xf32>
    tpu.vector_store %arg7[%c3_268, %c0_269, %c0_270], %1415 {strides = array<i32>} : memref<4x8x256xf32, #tpu.memory_space<vmem>>, vector<1x8x256xf32>,
    return
  }
  func.func @transform_0(%arg0: i32) -> (i32, i32, i32) {
    %c0_i32 = arith.constant 0 : i32
    %c0_i32_0 = arith.constant 0 : i32
    %c0_i32_1 = arith.constant 0 : i32
    return %c0_i32, %arg0, %c0_i32_0 : i32, i32, i32
  }
  func.func @transform_1(%arg0: i32) -> i32 {
    %c0_i32 = arith.constant 0 : i32
    %c0_i32_0 = arith.constant 0 : i32
    return %c0_i32 : i32
  }
  func.func @transform_2(%arg0: i32) -> i32 {
    %c0_i32 = arith.constant 0 : i32
    %c0_i32_0 = arith.constant 0 : i32
    return %c0_i32 : i32
  }
  func.func @transform_3(%arg0: i32) -> i32 {
    %c0_i32 = arith.constant 0 : i32
    %c0_i32_0 = arith.constant 0 : i32
    return %c0_i32 : i32
  }
  func.func @transform_4(%arg0: i32) -> i32 {
    %c0_i32 = arith.constant 0 : i32
    %c0_i32_0 = arith.constant 0 : i32
    return %c0_i32 : i32
  }
  func.func @transform_5(%arg0: i32) -> (i32, i32) {
    %c0_i32 = arith.constant 0 : i32
    %c0_i32_0 = arith.constant 0 : i32
    %c0_i32_1 = arith.constant 0 : i32
    return %c0_i32, %c0_i32_0 : i32, i32
  }
  func.func @transform_6(%arg0: i32) -> (i32, i32, i32) {
    %c0_i32 = arith.constant 0 : i32
    %c0_i32_0 = arith.constant 0 : i32
    %c0_i32_1 = arith.constant 0 : i32
    return %c0_i32, %arg0, %c0_i32_0 : i32, i32, i32
  }
}

</mosaic_0001>

<llo_original>
// kernel: tpu_custom_call.1
$region0: #{tpu_custom_call.1}
  #allocation0 [shape = 'u32[]', space=smem, size = 0x4, offset = 0x4, fixed_abs, tag = 'smem constant byte address 0x4 - core index']
  #allocation1 [shape = 'u32[144,128]{1,0:T(1,128)}', space=vmem, size = 0x12000, scoped, tag = 'internal scratch']
  %s0 = inlined_call_operand.hbm [shape: f32[4,8,256], index: 0, kind: input, shape index: {}]
  %s1 = inlined_call_operand.hbm [shape: f32[144], index: 1, kind: input, shape index: {}]
  %s2 = inlined_call_operand.vmem [shape: f32[4], index: 2, kind: input, shape index: {}]
  %s3 = inlined_call_operand.vmem [shape: f32[144], index: 3, kind: input, shape index: {}]
  %s4 = inlined_call_operand.vmem [shape: f32[4], index: 4, kind: input, shape index: {}]
  %s5 = inlined_call_operand.hbm [shape: f32[9,256], index: 5, kind: input, shape index: {}]
  %s6 = inlined_call_operand.hbm [shape: f32[4,8,256], index: 6, kind: output, shape index: {}]
  %s7 = sld [smem:[#allocation0]]
  $region58: #{tpu_custom_call.1} parent=0
    _
  %s9 = ssub.s32 1, %s7
  %s10 = scalar_select 0, %s9, %s7
  $region1: #{tpu_custom_call.1} parent=0
    #allocation2 [shape = 'u8[32768]{0}', space=vmem, size = 0x8000, scoped, tag = 'input window, operand 0, single buffered']
    #allocation3 [shape = 's32[1]{0}', space=sflag, size = 0x4, scoped, tag = 'scoped memory for tpu_custom_call.1']
    #allocation4 [shape = 's32[1]{0}', space=sflag, size = 0x4, scoped, tag = 'scoped memory for tpu_custom_call.1']
    #allocation5 [shape = 's32[1]{0}', space=sflag, size = 0x4, scoped, tag = 'scoped memory for tpu_custom_call.1']
    #allocation6 [shape = 's32[1]{0}', space=sflag, size = 0x4, scoped, tag = 'scoped memory for tpu_custom_call.1']
    #allocation7 [shape = 'u8[1024]{0}', space=smem, size = 0x400, scoped, tag = 'input window, operand 1, single buffered']
    #allocation8 [shape = 'u8[512]{0}', space=smem, size = 0x200, scoped, tag = 'input window, operand 2, single buffered']
    #allocation9 [shape = 'u8[1024]{0}', space=smem, size = 0x400, scoped, tag = 'input window, operand 3, single buffered']
    #allocation10 [shape = 's32[1]{0}', space=sflag, size = 0x4, scoped, tag = 'scoped memory for tpu_custom_call.1']
    #allocation11 [shape = 'u8[512]{0}', space=smem, size = 0x200, scoped, tag = 'input window, operand 4, single buffered']
    #allocation12 [shape = 'u8[16384]{0}', space=vmem, size = 0x4000, scoped, tag = 'input window, operand 5, single buffered']
    #allocation13 [shape = 's32[1]{0}', space=sflag, size = 0x4, scoped, tag = 'scoped memory for tpu_custom_call.1']
    #allocation14 [shape = 'u8[32768]{0}', space=vmem, size = 0x8000, scoped, tag = 'output window, operand 0, single buffered']
    %11 = vsyncpa [#allocation3], 0
    %12 = vsyncpa [#allocation5], 0
    %13 = vsyncpa [#allocation6], 0
    %14 = vsyncpa [#allocation10], 0
    %15 = vsyncpa [#allocation13], 0
    %16 = vsyncpa [#allocation4], 0
    // Predicated region
    $region2: #{tpu_custom_call.1} parent=1 // pred_check
      _
    $region3: #{tpu_custom_call.1} parent=1 // pred_check_branch
      %18 = sbr.rel (0) target = $region5
    $region4: #{tpu_custom_call.1} parent=1 // pred_region
      %s20 = ssub.s32 1024, 1024
      %21 = vsyncadd [#allocation3], %s20
      %s22 = sshll.u32 [#allocation2], 4
      %s23 = int_to_ptr.vmem [resolvable:$true] %s22
      %28 = dma.hbm_to_vmem [thread:$0]  %s0, 1024, %s23, [#allocation3], 256, 256, 16
    $region5: #{tpu_custom_call.1} parent=1 // pred_fallthru
      _
    // Predicated region
    $region6: #{tpu_custom_call.1} parent=1 // pred_check
      _
    $region7: #{tpu_custom_call.1} parent=1 // pred_check_branch
      %30 = sbr.rel (0) target = $region9
    $region8: #{tpu_custom_call.1} parent=1 // pred_region
      %s32 = ssub.s32 32, 32
      %33 = vsyncadd [#allocation5], %s32
      %36 = dma.hbm_to_smem %s1, 32, [#allocation7], [#allocation5]
    $region9: #{tpu_custom_call.1} parent=1 // pred_fallthru
      _
    // Predicated region
    $region10: #{tpu_custom_call.1} parent=1 // pred_check
      _
    $region11: #{tpu_custom_call.1} parent=1 // pred_check_branch
      %38 = sbr.rel (0) target = $region13
    $region12: #{tpu_custom_call.1} parent=1 // pred_region
      %s40 = ssub.s32 16, 16
      %41 = vsyncadd [#allocation6], %s40
      %s43 = sshll.u32 %s2, 4
      %s44 = int_to_ptr.vmem [resolvable:$true] %s43
      %46 = dma.vmem_to_smem %s44, 16, [#allocation8], [#allocation6]
    $region13: #{tpu_custom_call.1} parent=1 // pred_fallthru
      _
    // Predicated region
    $region14: #{tpu_custom_call.1} parent=1 // pred_check
      _
    $region15: #{tpu_custom_call.1} parent=1 // pred_check_branch
      %48 = sbr.rel (0) target = $region17
    $region16: #{tpu_custom_call.1} parent=1 // pred_region
      %s50 = ssub.s32 32, 32
      %51 = vsyncadd [#allocation10], %s50
      %s53 = sshll.u32 %s3, 4
      %s54 = int_to_ptr.vmem [resolvable:$true] %s53
      %56 = dma.vmem_to_smem %s54, 32, [#allocation9], [#allocation10]
    $region17: #{tpu_custom_call.1} parent=1 // pred_fallthru
      _
    // Predicated region
    $region18: #{tpu_custom_call.1} parent=1 // pred_check
      _
    $region19: #{tpu_custom_call.1} parent=1 // pred_check_branch
      %58 = sbr.rel (0) target = $region21
    $region20: #{tpu_custom_call.1} parent=1 // pred_region
      %s60 = ssub.s32 16, 16
      %61 = vsyncadd [#allocation10], %s60
      %s63 = sshll.u32 %s4, 4
      %s64 = int_to_ptr.vmem [resolvable:$true] %s63
      %66 = dma.vmem_to_smem %s64, 16, [#allocation11], [#allocation10]
    $region21: #{tpu_custom_call.1} parent=1 // pred_fallthru
      _
    // Predicated region
    $region22: #{tpu_custom_call.1} parent=1 // pred_check
      _
    $region23: #{tpu_custom_call.1} parent=1 // pred_check_branch
      %68 = sbr.rel (0) target = $region25
    $region24: #{tpu_custom_call.1} parent=1 // pred_region
      %s70 = ssub.s32 512, 512
      %71 = vsyncadd [#allocation13], %s70
      %s72 = sshll.u32 [#allocation12], 4
      %s73 = int_to_ptr.vmem [resolvable:$true] %s72
      %78 = dma.hbm_to_vmem [thread:$0]  %s5, 512, %s73, [#allocation13], 256, 256, 16
    $region25: #{tpu_custom_call.1} parent=1 // pred_fallthru
      _
    // Predicated region
    $region26: #{tpu_custom_call.1} parent=1 // pred_check
      _
    $region27: #{tpu_custom_call.1} parent=1 // pred_check_branch
      %80 = sbr.rel (0) target = $region29
    $region28: #{tpu_custom_call.1} parent=1 // pred_region
      %81 = dma.done [#allocation3], 1024
    $region29: #{tpu_custom_call.1} parent=1 // pred_fallthru
      _
    // Predicated region
    $region30: #{tpu_custom_call.1} parent=1 // pred_check
      _
    $region31: #{tpu_custom_call.1} parent=1 // pred_check_branch
      %83 = sbr.rel (0) target = $region33
    $region32: #{tpu_custom_call.1} parent=1 // pred_region
      %84 = dma.done [#allocation5], 32
    $region33: #{tpu_custom_call.1} parent=1 // pred_fallthru
      _
    // Predicated region
    $region34: #{tpu_custom_call.1} parent=1 // pred_check
      _
    $region35: #{tpu_custom_call.1} parent=1 // pred_check_branch
      %86 = sbr.rel (0) target = $region37
    $region36: #{tpu_custom_call.1} parent=1 // pred_region
      %87 = dma.done [#allocation6], 16
    $region37: #{tpu_custom_call.1} parent=1 // pred_fallthru
      _
    // Predicated region
    $region38: #{tpu_custom_call.1} parent=1 // pred_check
      _
    $region39: #{tpu_custom_call.1} parent=1 // pred_check_branch
      %89 = sbr.rel (0) target = $region41
    $region40: #{tpu_custom_call.1} parent=1 // pred_region
      %90 = dma.done [#allocation10], 32
    $region41: #{tpu_custom_call.1} parent=1 // pred_fallthru
      _
    // Predicated region
    $region42: #{tpu_custom_call.1} parent=1 // pred_check
      _
    $region43: #{tpu_custom_call.1} parent=1 // pred_check_branch
      %92 = sbr.rel (0) target = $region45
    $region44: #{tpu_custom_call.1} parent=1 // pred_region
      %93 = dma.done [#allocation10], 16
    $region45: #{tpu_custom_call.1} parent=1 // pred_fallthru
      _
    // Predicated region
    $region46: #{tpu_custom_call.1} parent=1 // pred_check
      _
    $region47: #{tpu_custom_call.1} parent=1 // pred_check_branch
      %95 = sbr.rel (0) target = $region49
    $region48: #{tpu_custom_call.1} parent=1 // pred_region
      %96 = dma.done [#allocation13], 512
    $region49: #{tpu_custom_call.1} parent=1 // pred_fallthru
      _
    %97 = sfence
    %v98 = vld [vmem:[#allocation2] sm:$0xff]
    %v99 = vld [vmem:[#allocation2 + $0x8] sm:$0xff]
    %s100 = scalar_lea.vmem [#allocation2], 16
    %v101 = vld [vmem:[%s100] sm:$0xff]
    %v102 = vld [vmem:[%s100 + $0x8] sm:$0xff]
    %s103 = scalar_lea.vmem [#allocation2], 32
    %v104 = vld [vmem:[%s103] sm:$0xff]
    %v105 = vld [vmem:[%s103 + $0x8] sm:$0xff]
    %s106 = scalar_lea.vmem [#allocation2], 48
    %v107 = vld [vmem:[%s106] sm:$0xff]
    %v108 = vld [vmem:[%s106 + $0x8] sm:$0xff]
    %v109 = vmax.f32 %v98, 0.0
    %v110 = vmax.f32 %v99, 0.0
    %v111 = vmax.f32 %v101, 0.0
    %v112 = vmax.f32 %v102, 0.0
    %v113 = vmax.f32 %v104, 0.0
    %v114 = vmax.f32 %v105, 0.0
    %v115 = vmax.f32 %v107, 0.0
    %v116 = vmax.f32 %v108, 0.0
    %v117 = vld [vmem:[#allocation12] ss:$8 sm:$0x3]
    %118 = vrot.lane.b32.xlu0 %v109, 17
    %v119 = vpop.permute.xlu0 %118
    %120 = vrot.lane.b32.xlu0 %v110, 17
    %v121 = vpop.permute.xlu0 %120
    %v122 = vlaneseq
    %v123 = vand.u32 %v122, 127
    %vm124 = vcmp.lt.s32.totalorder %v123, 17
    %v125 = vsel %vm124, %v119, %v121
    %v126 = vsel %vm124, %v121, %v119
    %v128 = vlaneseq
    %v129 = vshrl.u32 %v128, 7
    %v130 = vsub.s32 0, %v129
    %v131 = vrot.slane %v117, %v130
    %v132 = vlaneseq
    %v133 = vshrl.u32 %v132, 7
    %v134 = vsub.s32 1, %v133
    %v135 = vrot.slane %v117, %v134
    %v138 = vmul.f32 %v126, %v131
    %v139 = vmul.f32 %v125, %v135
    %s140 = sld [smem:[#allocation7]]
    %v141 = vstv %s140
    %v142 = vmul.f32 %v141, %v138
    %v143 = vmul.f32 %v141, %v139
    %s144 = sld [smem:[#allocation8]]
    %v145 = vstv %s144
    %v146 = vadd.f32 %v142, %v145
    %v147 = vadd.f32 %v143, %v145
    %s148 = sld [smem:[#allocation7 + $0x24]]
    %v149 = vstv %s148
    %v150 = vmul.f32 %v149, %v138
    %v151 = vmul.f32 %v149, %v139
    %s152 = sld [smem:[#allocation8 + $0x1]]
    %v153 = vstv %s152
    %v154 = vadd.f32 %v150, %v153
    %v155 = vadd.f32 %v151, %v153
    %s156 = sld [smem:[#allocation7 + $0x48]]
    %v157 = vstv %s156
    %v158 = vmul.f32 %v157, %v138
    %v159 = vmul.f32 %v157, %v139
    %s160 = sld [smem:[#allocation8 + $0x2]]
    %v161 = vstv %s160
    %v162 = vadd.f32 %v158, %v161
    %v163 = vadd.f32 %v159, %v161
    %s164 = sld [smem:[#allocation7 + $0x6c]]
    %v165 = vstv %s164
    %v166 = vmul.f32 %v165, %v138
    %v167 = vmul.f32 %v165, %v139
    %s168 = sld [smem:[#allocation8 + $0x3]]
    %v169 = vstv %s168
    %v170 = vadd.f32 %v166, %v169
    %v171 = vadd.f32 %v167, %v169
    %172 = vrot.lane.b32.xlu0 %v111, 17
    %v173 = vpop.permute.xlu0 %172
    %174 = vrot.lane.b32.xlu0 %v112, 17
    %v175 = vpop.permute.xlu0 %174
    %v176 = vsel %vm124, %v173, %v175
    %v177 = vsel %vm124, %v175, %v173
    %v178 = vmul.f32 %v177, %v131
    %v179 = vmul.f32 %v176, %v135
    %s180 = sld [smem:[#allocation7 + $0x1]]
    %v181 = vstv %s180
    %v182 = vmul.f32 %v181, %v178
    %v183 = vmul.f32 %v181, %v179
    %v184 = vadd.f32 %v146, %v182
    %v185 = vadd.f32 %v147, %v183
    %s186 = sld [smem:[#allocation7 + $0x25]]
    %v187 = vstv %s186
    %v188 = vmul.f32 %v187, %v178
    %v189 = vmul.f32 %v187, %v179
    %v190 = vadd.f32 %v154, %v188
    %v191 = vadd.f32 %v155, %v189
    %s192 = sld [smem:[#allocation7 + $0x49]]
    %v193 = vstv %s192
    %v194 = vmul.f32 %v193, %v178
    %v195 = vmul.f32 %v193, %v179
    %v196 = vadd.f32 %v162, %v194
    %v197 = vadd.f32 %v163, %v195
    %s198 = sld [smem:[#allocation7 + $0x6d]]
    %v199 = vstv %s198
    %v200 = vmul.f32 %v199, %v178
    %v201 = vmul.f32 %v199, %v179
    %v202 = vadd.f32 %v170, %v200
    %v203 = vadd.f32 %v171, %v201
    %204 = vrot.lane.b32.xlu0 %v113, 17
    %v205 = vpop.permute.xlu0 %204
    %206 = vrot.lane.b32.xlu0 %v114, 17
    %v207 = vpop.permute.xlu0 %206
    %v208 = vsel %vm124, %v205, %v207
    %v209 = vsel %vm124, %v207, %v205
    %v210 = vmul.f32 %v209, %v131
    %v211 = vmul.f32 %v208, %v135
    %s212 = sld [smem:[#allocation7 + $0x2]]
    %v213 = vstv %s212
    %v214 = vmul.f32 %v213, %v210
    %v215 = vmul.f32 %v213, %v211
    %v216 = vadd.f32 %v184, %v214
    %v217 = vadd.f32 %v185, %v215
    %s218 = sld [smem:[#allocation7 + $0x26]]
    %v219 = vstv %s218
    %v220 = vmul.f32 %v219, %v210
    %v221 = vmul.f32 %v219, %v211
    %v222 = vadd.f32 %v190, %v220
    %v223 = vadd.f32 %v191, %v221
    %s224 = sld [smem:[#allocation7 + $0x4a]]
    %v225 = vstv %s224
    %v226 = vmul.f32 %v225, %v210
    %v227 = vmul.f32 %v225, %v211
    %v228 = vadd.f32 %v196, %v226
    %v229 = vadd.f32 %v197, %v227
    %s230 = sld [smem:[#allocation7 + $0x6e]]
    %v231 = vstv %s230
    %v232 = vmul.f32 %v231, %v210
    %v233 = vmul.f32 %v231, %v211
    %v234 = vadd.f32 %v202, %v232
    %v235 = vadd.f32 %v203, %v233
    %236 = vrot.lane.b32.xlu0 %v115, 17
    %v237 = vpop.permute.xlu0 %236
    %238 = vrot.lane.b32.xlu0 %v116, 17
    %v239 = vpop.permute.xlu0 %238
    %v240 = vsel %vm124, %v237, %v239
    %v241 = vsel %vm124, %v239, %v237
    %v242 = vmul.f32 %v241, %v131
    %v243 = vmul.f32 %v240, %v135
    %s244 = sld [smem:[#allocation7 + $0x3]]
    %v245 = vstv %s244
    %v246 = vmul.f32 %v245, %v242
    %v247 = vmul.f32 %v245, %v243
    %v248 = vadd.f32 %v216, %v246
    %v249 = vadd.f32 %v217, %v247
    %s250 = sld [smem:[#allocation7 + $0x27]]
    %v251 = vstv %s250
    %v252 = vmul.f32 %v251, %v242
    %v253 = vmul.f32 %v251, %v243
    %v254 = vadd.f32 %v222, %v252
    %v255 = vadd.f32 %v223, %v253
    %s256 = sld [smem:[#allocation7 + $0x4b]]
    %v257 = vstv %s256
    %v258 = vmul.f32 %v257, %v242
    %v259 = vmul.f32 %v257, %v243
    %v260 = vadd.f32 %v228, %v258
    %v261 = vadd.f32 %v229, %v259
    %s262 = sld [smem:[#allocation7 + $0x6f]]
    %v263 = vstv %s262
    %v264 = vmul.f32 %v263, %v242
    %v265 = vmul.f32 %v263, %v243
    %v266 = vadd.f32 %v234, %v264
    %v267 = vadd.f32 %v235, %v265
    %s268 = scalar_lea.vmem [#allocation12], 1
    %v269 = vld [vmem:[%s268] ss:$8 sm:$0x3]
    %270 = vrot.lane.b32.xlu0 %v109, 16
    %v271 = vpop.permute.xlu0 %270
    %272 = vrot.lane.b32.xlu0 %v110, 16
    %v273 = vpop.permute.xlu0 %272
    %vm274 = vcmp.lt.s32.totalorder %v123, 16
    %v275 = vsel %vm274, %v271, %v273
    %v276 = vsel %vm274, %v273, %v271
    %v278 = vlaneseq
    %v279 = vshrl.u32 %v278, 7
    %v280 = vsub.s32 0, %v279
    %v281 = vrot.slane %v269, %v280
    %v282 = vlaneseq
    %v283 = vshrl.u32 %v282, 7
    %v284 = vsub.s32 1, %v283
    %v285 = vrot.slane %v269, %v284
    %v288 = vmul.f32 %v276, %v281
    %v289 = vmul.f32 %v275, %v285
    %s290 = sld [smem:[#allocation7 + $0x4]]
    %v291 = vstv %s290
    %v292 = vmul.f32 %v291, %v288
    %v293 = vmul.f32 %v291, %v289
    %v294 = vadd.f32 %v248, %v292
    %v295 = vadd.f32 %v249, %v293
    %s296 = sld [smem:[#allocation7 + $0x28]]
    %v297 = vstv %s296
    %v298 = vmul.f32 %v297, %v288
    %v299 = vmul.f32 %v297, %v289
    %v300 = vadd.f32 %v254, %v298
    %v301 = vadd.f32 %v255, %v299
    %s302 = sld [smem:[#allocation7 + $0x4c]]
    %v303 = vstv %s302
    %v304 = vmul.f32 %v303, %v288
    %v305 = vmul.f32 %v303, %v289
    %v306 = vadd.f32 %v260, %v304
    %v307 = vadd.f32 %v261, %v305
    %s308 = sld [smem:[#allocation7 + $0x70]]
    %v309 = vstv %s308
    %v310 = vmul.f32 %v309, %v288
    %v311 = vmul.f32 %v309, %v289
    %v312 = vadd.f32 %v266, %v310
    %v313 = vadd.f32 %v267, %v311
    %314 = vrot.lane.b32.xlu0 %v111, 16
    %v315 = vpop.permute.xlu0 %314
    %316 = vrot.lane.b32.xlu0 %v112, 16
    %v317 = vpop.permute.xlu0 %316
    %v318 = vsel %vm274, %v315, %v317
    %v319 = vsel %vm274, %v317, %v315
    %v320 = vmul.f32 %v319, %v281
    %v321 = vmul.f32 %v318, %v285
    %s322 = sld [smem:[#allocation7 + $0x5]]
    %v323 = vstv %s322
    %v324 = vmul.f32 %v323, %v320
    %v325 = vmul.f32 %v323, %v321
    %v326 = vadd.f32 %v294, %v324
    %v327 = vadd.f32 %v295, %v325
    %s328 = sld [smem:[#allocation7 + $0x29]]
    %v329 = vstv %s328
    %v330 = vmul.f32 %v329, %v320
    %v331 = vmul.f32 %v329, %v321
    %v332 = vadd.f32 %v300, %v330
    %v333 = vadd.f32 %v301, %v331
    %s334 = sld [smem:[#allocation7 + $0x4d]]
    %v335 = vstv %s334
    %v336 = vmul.f32 %v335, %v320
    %v337 = vmul.f32 %v335, %v321
    %v338 = vadd.f32 %v306, %v336
    %v339 = vadd.f32 %v307, %v337
    %s340 = sld [smem:[#allocation7 + $0x71]]
    %v341 = vstv %s340
    %v342 = vmul.f32 %v341, %v320
    %v343 = vmul.f32 %v341, %v321
    %v344 = vadd.f32 %v312, %v342
    %v345 = vadd.f32 %v313, %v343
    %346 = vrot.lane.b32.xlu0 %v113, 16
    %v347 = vpop.permute.xlu0 %346
    %348 = vrot.lane.b32.xlu0 %v114, 16
    %v349 = vpop.permute.xlu0 %348
    %v350 = vsel %vm274, %v347, %v349
    %v351 = vsel %vm274, %v349, %v347
    %v352 = vmul.f32 %v351, %v281
    %v353 = vmul.f32 %v350, %v285
    %s354 = sld [smem:[#allocation7 + $0x6]]
    %v355 = vstv %s354
    %v356 = vmul.f32 %v355, %v352
    %v357 = vmul.f32 %v355, %v353
    %v358 = vadd.f32 %v326, %v356
    %v359 = vadd.f32 %v327, %v357
    %s360 = sld [smem:[#allocation7 + $0x2a]]
    %v361 = vstv %s360
    %v362 = vmul.f32 %v361, %v352
    %v363 = vmul.f32 %v361, %v353
    %v364 = vadd.f32 %v332, %v362
    %v365 = vadd.f32 %v333, %v363
    %s366 = sld [smem:[#allocation7 + $0x4e]]
    %v367 = vstv %s366
    %v368 = vmul.f32 %v367, %v352
    %v369 = vmul.f32 %v367, %v353
    %v370 = vadd.f32 %v338, %v368
    %v371 = vadd.f32 %v339, %v369
    %s372 = sld [smem:[#allocation7 + $0x72]]
    %v373 = vstv %s372
    %v374 = vmul.f32 %v373, %v352
    %v375 = vmul.f32 %v373, %v353
    %v376 = vadd.f32 %v344, %v374
    %v377 = vadd.f32 %v345, %v375
    %378 = vrot.lane.b32.xlu0 %v115, 16
    %v379 = vpop.permute.xlu0 %378
    %380 = vrot.lane.b32.xlu0 %v116, 16
    %v381 = vpop.permute.xlu0 %380
    %v382 = vsel %vm274, %v379, %v381
    %v383 = vsel %vm274, %v381, %v379
    %v384 = vmul.f32 %v383, %v281
    %v385 = vmul.f32 %v382, %v285
    %s386 = sld [smem:[#allocation7 + $0x7]]
    %v387 = vstv %s386
    %v388 = vmul.f32 %v387, %v384
    %v389 = vmul.f32 %v387, %v385
    %v390 = vadd.f32 %v358, %v388
    %v391 = vadd.f32 %v359, %v389
    %s392 = sld [smem:[#allocation7 + $0x2b]]
    %v393 = vstv %s392
    %v394 = vmul.f32 %v393, %v384
    %v395 = vmul.f32 %v393, %v385
    %v396 = vadd.f32 %v364, %v394
    %v397 = vadd.f32 %v365, %v395
    %s398 = sld [smem:[#allocation7 + $0x4f]]
    %v399 = vstv %s398
    %v400 = vmul.f32 %v399, %v384
    %v401 = vmul.f32 %v399, %v385
    %v402 = vadd.f32 %v370, %v400
    %v403 = vadd.f32 %v371, %v401
    %s404 = sld [smem:[#allocation7 + $0x73]]
    %v405 = vstv %s404
    %v406 = vmul.f32 %v405, %v384
    %v407 = vmul.f32 %v405, %v385
    %v408 = vadd.f32 %v376, %v406
    %v409 = vadd.f32 %v377, %v407
    %s410 = scalar_lea.vmem [#allocation12], 2
    %v411 = vld [vmem:[%s410] ss:$8 sm:$0x3]
    %412 = vrot.lane.b32.xlu0 %v109, 15
    %v413 = vpop.permute.xlu0 %412
    %414 = vrot.lane.b32.xlu0 %v110, 15
    %v415 = vpop.permute.xlu0 %414
    %vm416 = vcmp.lt.s32.totalorder %v123, 15
    %v417 = vsel %vm416, %v413, %v415
    %v418 = vsel %vm416, %v415, %v413
    %v420 = vlaneseq
    %v421 = vshrl.u32 %v420, 7
    %v422 = vsub.s32 0, %v421
    %v423 = vrot.slane %v411, %v422
    %v424 = vlaneseq
    %v425 = vshrl.u32 %v424, 7
    %v426 = vsub.s32 1, %v425
    %v427 = vrot.slane %v411, %v426
    %v430 = vmul.f32 %v418, %v423
    %v431 = vmul.f32 %v417, %v427
    %s432 = sld [smem:[#allocation7 + $0x8]]
    %v433 = vstv %s432
    %v434 = vmul.f32 %v433, %v430
    %v435 = vmul.f32 %v433, %v431
    %v436 = vadd.f32 %v390, %v434
    %v437 = vadd.f32 %v391, %v435
    %s438 = sld [smem:[#allocation7 + $0x2c]]
    %v439 = vstv %s438
    %v440 = vmul.f32 %v439, %v430
    %v441 = vmul.f32 %v439, %v431
    %v442 = vadd.f32 %v396, %v440
    %v443 = vadd.f32 %v397, %v441
    %s444 = sld [smem:[#allocation7 + $0x50]]
    %v445 = vstv %s444
    %v446 = vmul.f32 %v445, %v430
    %v447 = vmul.f32 %v445, %v431
    %v448 = vadd.f32 %v402, %v446
    %v449 = vadd.f32 %v403, %v447
    %s450 = sld [smem:[#allocation7 + $0x74]]
    %v451 = vstv %s450
    %v452 = vmul.f32 %v451, %v430
    %v453 = vmul.f32 %v451, %v431
    %v454 = vadd.f32 %v408, %v452
    %v455 = vadd.f32 %v409, %v453
    %456 = vrot.lane.b32.xlu0 %v111, 15
    %v457 = vpop.permute.xlu0 %456
    %458 = vrot.lane.b32.xlu0 %v112, 15
    %v459 = vpop.permute.xlu0 %458
    %v460 = vsel %vm416, %v457, %v459
    %v461 = vsel %vm416, %v459, %v457
    %v462 = vmul.f32 %v461, %v423
    %v463 = vmul.f32 %v460, %v427
    %s464 = sld [smem:[#allocation7 + $0x9]]
    %v465 = vstv %s464
    %v466 = vmul.f32 %v465, %v462
    %v467 = vmul.f32 %v465, %v463
    %v468 = vadd.f32 %v436, %v466
    %v469 = vadd.f32 %v437, %v467
    %s470 = sld [smem:[#allocation7 + $0x2d]]
    %v471 = vstv %s470
    %v472 = vmul.f32 %v471, %v462
    %v473 = vmul.f32 %v471, %v463
    %v474 = vadd.f32 %v442, %v472
    %v475 = vadd.f32 %v443, %v473
    %s476 = sld [smem:[#allocation7 + $0x51]]
    %v477 = vstv %s476
    %v478 = vmul.f32 %v477, %v462
    %v479 = vmul.f32 %v477, %v463
    %v480 = vadd.f32 %v448, %v478
    %v481 = vadd.f32 %v449, %v479
    %s482 = sld [smem:[#allocation7 + $0x75]]
    %v483 = vstv %s482
    %v484 = vmul.f32 %v483, %v462
    %v485 = vmul.f32 %v483, %v463
    %v486 = vadd.f32 %v454, %v484
    %v487 = vadd.f32 %v455, %v485
    %488 = vrot.lane.b32.xlu0 %v113, 15
    %v489 = vpop.permute.xlu0 %488
    %490 = vrot.lane.b32.xlu0 %v114, 15
    %v491 = vpop.permute.xlu0 %490
    %v492 = vsel %vm416, %v489, %v491
    %v493 = vsel %vm416, %v491, %v489
    %v494 = vmul.f32 %v493, %v423
    %v495 = vmul.f32 %v492, %v427
    %s496 = sld [smem:[#allocation7 + $0xa]]
    %v497 = vstv %s496
    %v498 = vmul.f32 %v497, %v494
    %v499 = vmul.f32 %v497, %v495
    %v500 = vadd.f32 %v468, %v498
    %v501 = vadd.f32 %v469, %v499
    %s502 = sld [smem:[#allocation7 + $0x2e]]
    %v503 = vstv %s502
    %v504 = vmul.f32 %v503, %v494
    %v505 = vmul.f32 %v503, %v495
    %v506 = vadd.f32 %v474, %v504
    %v507 = vadd.f32 %v475, %v505
    %s508 = sld [smem:[#allocation7 + $0x52]]
    %v509 = vstv %s508
    %v510 = vmul.f32 %v509, %v494
    %v511 = vmul.f32 %v509, %v495
    %v512 = vadd.f32 %v480, %v510
    %v513 = vadd.f32 %v481, %v511
    %s514 = sld [smem:[#allocation7 + $0x76]]
    %v515 = vstv %s514
    %v516 = vmul.f32 %v515, %v494
    %v517 = vmul.f32 %v515, %v495
    %v518 = vadd.f32 %v486, %v516
    %v519 = vadd.f32 %v487, %v517
    %520 = vrot.lane.b32.xlu0 %v115, 15
    %v521 = vpop.permute.xlu0 %520
    %522 = vrot.lane.b32.xlu0 %v116, 15
    %v523 = vpop.permute.xlu0 %522
    %v524 = vsel %vm416, %v521, %v523
    %v525 = vsel %vm416, %v523, %v521
    %v526 = vmul.f32 %v525, %v423
    %v527 = vmul.f32 %v524, %v427
    %s528 = sld [smem:[#allocation7 + $0xb]]
    %v529 = vstv %s528
    %v530 = vmul.f32 %v529, %v526
    %v531 = vmul.f32 %v529, %v527
    %v532 = vadd.f32 %v500, %v530
    %v533 = vadd.f32 %v501, %v531
    %s534 = sld [smem:[#allocation7 + $0x2f]]
    %v535 = vstv %s534
    %v536 = vmul.f32 %v535, %v526
    %v537 = vmul.f32 %v535, %v527
    %v538 = vadd.f32 %v506, %v536
    %v539 = vadd.f32 %v507, %v537
    %s540 = sld [smem:[#allocation7 + $0x53]]
    %v541 = vstv %s540
    %v542 = vmul.f32 %v541, %v526
    %v543 = vmul.f32 %v541, %v527
    %v544 = vadd.f32 %v512, %v542
    %v545 = vadd.f32 %v513, %v543
    %s546 = sld [smem:[#allocation7 + $0x77]]
    %v547 = vstv %s546
    %v548 = vmul.f32 %v547, %v526
    %v549 = vmul.f32 %v547, %v527
    %v550 = vadd.f32 %v518, %v548
    %v551 = vadd.f32 %v519, %v549
    %s552 = scalar_lea.vmem [#allocation12], 3
    %v553 = vld [vmem:[%s552] ss:$8 sm:$0x3]
    %554 = vrot.lane.b32.xlu0 %v109, 1
    %v555 = vpop.permute.xlu0 %554
    %556 = vrot.lane.b32.xlu0 %v110, 1
    %v557 = vpop.permute.xlu0 %556
    %vm558 = vcmp.lt.s32.totalorder %v123, 1
    %v559 = vsel %vm558, %v555, %v557
    %v560 = vsel %vm558, %v557, %v555
    %v562 = vlaneseq
    %v563 = vshrl.u32 %v562, 7
    %v564 = vsub.s32 0, %v563
    %v565 = vrot.slane %v553, %v564
    %v566 = vlaneseq
    %v567 = vshrl.u32 %v566, 7
    %v568 = vsub.s32 1, %v567
    %v569 = vrot.slane %v553, %v568
    %v572 = vmul.f32 %v560, %v565
    %v573 = vmul.f32 %v559, %v569
    %s574 = sld [smem:[#allocation7 + $0xc]]
    %v575 = vstv %s574
    %v576 = vmul.f32 %v575, %v572
    %v577 = vmul.f32 %v575, %v573
    %v578 = vadd.f32 %v532, %v576
    %v579 = vadd.f32 %v533, %v577
    %s580 = sld [smem:[#allocation7 + $0x30]]
    %v581 = vstv %s580
    %v582 = vmul.f32 %v581, %v572
    %v583 = vmul.f32 %v581, %v573
    %v584 = vadd.f32 %v538, %v582
    %v585 = vadd.f32 %v539, %v583
    %s586 = sld [smem:[#allocation7 + $0x54]]
    %v587 = vstv %s586
    %v588 = vmul.f32 %v587, %v572
    %v589 = vmul.f32 %v587, %v573
    %v590 = vadd.f32 %v544, %v588
    %v591 = vadd.f32 %v545, %v589
    %s592 = sld [smem:[#allocation7 + $0x78]]
    %v593 = vstv %s592
    %v594 = vmul.f32 %v593, %v572
    %v595 = vmul.f32 %v593, %v573
    %v596 = vadd.f32 %v550, %v594
    %v597 = vadd.f32 %v551, %v595
    %598 = vrot.lane.b32.xlu0 %v111, 1
    %v599 = vpop.permute.xlu0 %598
    %600 = vrot.lane.b32.xlu0 %v112, 1
    %v601 = vpop.permute.xlu0 %600
    %v602 = vsel %vm558, %v599, %v601
    %v603 = vsel %vm558, %v601, %v599
    %v604 = vmul.f32 %v603, %v565
    %v605 = vmul.f32 %v602, %v569
    %s606 = sld [smem:[#allocation7 + $0xd]]
    %v607 = vstv %s606
    %v608 = vmul.f32 %v607, %v604
    %v609 = vmul.f32 %v607, %v605
    %v610 = vadd.f32 %v578, %v608
    %v611 = vadd.f32 %v579, %v609
    %s612 = sld [smem:[#allocation7 + $0x31]]
    %v613 = vstv %s612
    %v614 = vmul.f32 %v613, %v604
    %v615 = vmul.f32 %v613, %v605
    %v616 = vadd.f32 %v584, %v614
    %v617 = vadd.f32 %v585, %v615
    %s618 = sld [smem:[#allocation7 + $0x55]]
    %v619 = vstv %s618
    %v620 = vmul.f32 %v619, %v604
    %v621 = vmul.f32 %v619, %v605
    %v622 = vadd.f32 %v590, %v620
    %v623 = vadd.f32 %v591, %v621
    %s624 = sld [smem:[#allocation7 + $0x79]]
    %v625 = vstv %s624
    %v626 = vmul.f32 %v625, %v604
    %v627 = vmul.f32 %v625, %v605
    %v628 = vadd.f32 %v596, %v626
    %v629 = vadd.f32 %v597, %v627
    %630 = vrot.lane.b32.xlu0 %v113, 1
    %v631 = vpop.permute.xlu0 %630
    %632 = vrot.lane.b32.xlu0 %v114, 1
    %v633 = vpop.permute.xlu0 %632
    %v634 = vsel %vm558, %v631, %v633
    %v635 = vsel %vm558, %v633, %v631
    %v636 = vmul.f32 %v635, %v565
    %v637 = vmul.f32 %v634, %v569
    %s638 = sld [smem:[#allocation7 + $0xe]]
    %v639 = vstv %s638
    %v640 = vmul.f32 %v639, %v636
    %v641 = vmul.f32 %v639, %v637
    %v642 = vadd.f32 %v610, %v640
    %v643 = vadd.f32 %v611, %v641
    %s644 = sld [smem:[#allocation7 + $0x32]]
    %v645 = vstv %s644
    %v646 = vmul.f32 %v645, %v636
    %v647 = vmul.f32 %v645, %v637
    %v648 = vadd.f32 %v616, %v646
    %v649 = vadd.f32 %v617, %v647
    %s650 = sld [smem:[#allocation7 + $0x56]]
    %v651 = vstv %s650
    %v652 = vmul.f32 %v651, %v636
    %v653 = vmul.f32 %v651, %v637
    %v654 = vadd.f32 %v622, %v652
    %v655 = vadd.f32 %v623, %v653
    %s656 = sld [smem:[#allocation7 + $0x7a]]
    %v657 = vstv %s656
    %v658 = vmul.f32 %v657, %v636
    %v659 = vmul.f32 %v657, %v637
    %v660 = vadd.f32 %v628, %v658
    %v661 = vadd.f32 %v629, %v659
    %662 = vrot.lane.b32.xlu0 %v115, 1
    %v663 = vpop.permute.xlu0 %662
    %664 = vrot.lane.b32.xlu0 %v116, 1
    %v665 = vpop.permute.xlu0 %664
    %v666 = vsel %vm558, %v663, %v665
    %v667 = vsel %vm558, %v665, %v663
    %v668 = vmul.f32 %v667, %v565
    %v669 = vmul.f32 %v666, %v569
    %s670 = sld [smem:[#allocation7 + $0xf]]
    %v671 = vstv %s670
    %v672 = vmul.f32 %v671, %v668
    %v673 = vmul.f32 %v671, %v669
    %v674 = vadd.f32 %v642, %v672
    %v675 = vadd.f32 %v643, %v673
    %s676 = sld [smem:[#allocation7 + $0x33]]
    %v677 = vstv %s676
    %v678 = vmul.f32 %v677, %v668
    %v679 = vmul.f32 %v677, %v669
    %v680 = vadd.f32 %v648, %v678
    %v681 = vadd.f32 %v649, %v679
    %s682 = sld [smem:[#allocation7 + $0x57]]
    %v683 = vstv %s682
    %v684 = vmul.f32 %v683, %v668
    %v685 = vmul.f32 %v683, %v669
    %v686 = vadd.f32 %v654, %v684
    %v687 = vadd.f32 %v655, %v685
    %s688 = sld [smem:[#allocation7 + $0x7b]]
    %v689 = vstv %s688
    %v690 = vmul.f32 %v689, %v668
    %v691 = vmul.f32 %v689, %v669
    %v692 = vadd.f32 %v660, %v690
    %v693 = vadd.f32 %v661, %v691
    %s694 = sld [smem:[#allocation7 + $0x10]]
    %v695 = vstv %s694
    %v696 = vmul.f32 %v695, %v109
    %v697 = vmul.f32 %v695, %v110
    %v698 = vadd.f32 %v674, %v696
    %v699 = vadd.f32 %v675, %v697
    %s700 = sld [smem:[#allocation7 + $0x34]]
    %v701 = vstv %s700
    %v702 = vmul.f32 %v701, %v109
    %v703 = vmul.f32 %v701, %v110
    %v704 = vadd.f32 %v680, %v702
    %v705 = vadd.f32 %v681, %v703
    %s706 = sld [smem:[#allocation7 + $0x58]]
    %v707 = vstv %s706
    %v708 = vmul.f32 %v707, %v109
    %v709 = vmul.f32 %v707, %v110
    %v710 = vadd.f32 %v686, %v708
    %v711 = vadd.f32 %v687, %v709
    %s712 = sld [smem:[#allocation7 + $0x7c]]
    %v713 = vstv %s712
    %v714 = vmul.f32 %v713, %v109
    %v715 = vmul.f32 %v713, %v110
    %v716 = vadd.f32 %v692, %v714
    %v717 = vadd.f32 %v693, %v715
    %s718 = sld [smem:[#allocation7 + $0x11]]
    %v719 = vstv %s718
    %v720 = vmul.f32 %v719, %v111
    %v721 = vmul.f32 %v719, %v112
    %v722 = vadd.f32 %v698, %v720
    %v723 = vadd.f32 %v699, %v721
    %s724 = sld [smem:[#allocation7 + $0x35]]
    %v725 = vstv %s724
    %v726 = vmul.f32 %v725, %v111
    %v727 = vmul.f32 %v725, %v112
    %v728 = vadd.f32 %v704, %v726
    %v729 = vadd.f32 %v705, %v727
    %s730 = sld [smem:[#allocation7 + $0x59]]
    %v731 = vstv %s730
    %v732 = vmul.f32 %v731, %v111
    %v733 = vmul.f32 %v731, %v112
    %v734 = vadd.f32 %v710, %v732
    %v735 = vadd.f32 %v711, %v733
    %s736 = sld [smem:[#allocation7 + $0x7d]]
    %v737 = vstv %s736
    %v738 = vmul.f32 %v737, %v111
    %v739 = vmul.f32 %v737, %v112
    %v740 = vadd.f32 %v716, %v738
    %v741 = vadd.f32 %v717, %v739
    %s742 = sld [smem:[#allocation7 + $0x12]]
    %v743 = vstv %s742
    %v744 = vmul.f32 %v743, %v113
    %v745 = vmul.f32 %v743, %v114
    %v746 = vadd.f32 %v722, %v744
    %v747 = vadd.f32 %v723, %v745
    %s748 = sld [smem:[#allocation7 + $0x36]]
    %v749 = vstv %s748
    %v750 = vmul.f32 %v749, %v113
    %v751 = vmul.f32 %v749, %v114
    %v752 = vadd.f32 %v728, %v750
    %v753 = vadd.f32 %v729, %v751
    %s754 = sld [smem:[#allocation7 + $0x5a]]
    %v755 = vstv %s754
    %v756 = vmul.f32 %v755, %v113
    %v757 = vmul.f32 %v755, %v114
    %v758 = vadd.f32 %v734, %v756
    %v759 = vadd.f32 %v735, %v757
    %s760 = sld [smem:[#allocation7 + $0x7e]]
    %v761 = vstv %s760
    %v762 = vmul.f32 %v761, %v113
    %v763 = vmul.f32 %v761, %v114
    %v764 = vadd.f32 %v740, %v762
    %v765 = vadd.f32 %v741, %v763
    %s766 = sld [smem:[#allocation7 + $0x13]]
    %v767 = vstv %s766
    %v768 = vmul.f32 %v767, %v115
    %v769 = vmul.f32 %v767, %v116
    %v770 = vadd.f32 %v746, %v768
    %v771 = vadd.f32 %v747, %v769
    %s772 = sld [smem:[#allocation7 + $0x37]]
    %v773 = vstv %s772
    %v774 = vmul.f32 %v773, %v115
    %v775 = vmul.f32 %v773, %v116
    %v776 = vadd.f32 %v752, %v774
    %v777 = vadd.f32 %v753, %v775
    %s778 = sld [smem:[#allocation7 + $0x5b]]
    %v779 = vstv %s778
    %v780 = vmul.f32 %v779, %v115
    %v781 = vmul.f32 %v779, %v116
    %v782 = vadd.f32 %v758, %v780
    %v783 = vadd.f32 %v759, %v781
    %s784 = sld [smem:[#allocation7 + $0x7f]]
    %v785 = vstv %s784
    %v786 = vmul.f32 %v785, %v115
    %v787 = vmul.f32 %v785, %v116
    %v788 = vadd.f32 %v764, %v786
    %v789 = vadd.f32 %v765, %v787
    %s790 = scalar_lea.vmem [#allocation12], 5
    %v791 = vld [vmem:[%s790] ss:$8 sm:$0x3]
    %792 = vrot.lane.b32.xlu0 %v109, 127
    %v793 = vpop.permute.xlu0 %792
    %794 = vrot.lane.b32.xlu0 %v110, 127
    %v795 = vpop.permute.xlu0 %794
    %vm796 = vcmp.lt.s32.totalorder %v123, 127
    %v797 = vsel %vm796, %v793, %v795
    %v798 = vsel %vm796, %v795, %v793
    %v800 = vlaneseq
    %v801 = vshrl.u32 %v800, 7
    %v802 = vsub.s32 0, %v801
    %v803 = vrot.slane %v791, %v802
    %v804 = vlaneseq
    %v805 = vshrl.u32 %v804, 7
    %v806 = vsub.s32 1, %v805
    %v807 = vrot.slane %v791, %v806
    %v810 = vmul.f32 %v797, %v803
    %v811 = vmul.f32 %v798, %v807
    %s812 = sld [smem:[#allocation7 + $0x14]]
    %v813 = vstv %s812
    %v814 = vmul.f32 %v813, %v810
    %v815 = vmul.f32 %v813, %v811
    %v816 = vadd.f32 %v770, %v814
    %v817 = vadd.f32 %v771, %v815
    %s818 = sld [smem:[#allocation7 + $0x38]]
    %v819 = vstv %s818
    %v820 = vmul.f32 %v819, %v810
    %v821 = vmul.f32 %v819, %v811
    %v822 = vadd.f32 %v776, %v820
    %v823 = vadd.f32 %v777, %v821
    %s824 = sld [smem:[#allocation7 + $0x5c]]
    %v825 = vstv %s824
    %v826 = vmul.f32 %v825, %v810
    %v827 = vmul.f32 %v825, %v811
    %v828 = vadd.f32 %v782, %v826
    %v829 = vadd.f32 %v783, %v827
    %s830 = sld [smem:[#allocation7 + $0x80]]
    %v831 = vstv %s830
    %v832 = vmul.f32 %v831, %v810
    %v833 = vmul.f32 %v831, %v811
    %v834 = vadd.f32 %v788, %v832
    %v835 = vadd.f32 %v789, %v833
    %836 = vrot.lane.b32.xlu0 %v111, 127
    %v837 = vpop.permute.xlu0 %836
    %838 = vrot.lane.b32.xlu0 %v112, 127
    %v839 = vpop.permute.xlu0 %838
    %v840 = vsel %vm796, %v837, %v839
    %v841 = vsel %vm796, %v839, %v837
    %v842 = vmul.f32 %v840, %v803
    %v843 = vmul.f32 %v841, %v807
    %s844 = sld [smem:[#allocation7 + $0x15]]
    %v845 = vstv %s844
    %v846 = vmul.f32 %v845, %v842
    %v847 = vmul.f32 %v845, %v843
    %v848 = vadd.f32 %v816, %v846
    %v849 = vadd.f32 %v817, %v847
    %s850 = sld [smem:[#allocation7 + $0x39]]
    %v851 = vstv %s850
    %v852 = vmul.f32 %v851, %v842
    %v853 = vmul.f32 %v851, %v843
    %v854 = vadd.f32 %v822, %v852
    %v855 = vadd.f32 %v823, %v853
    %s856 = sld [smem:[#allocation7 + $0x5d]]
    %v857 = vstv %s856
    %v858 = vmul.f32 %v857, %v842
    %v859 = vmul.f32 %v857, %v843
    %v860 = vadd.f32 %v828, %v858
    %v861 = vadd.f32 %v829, %v859
    %s862 = sld [smem:[#allocation7 + $0x81]]
    %v863 = vstv %s862
    %v864 = vmul.f32 %v863, %v842
    %v865 = vmul.f32 %v863, %v843
    %v866 = vadd.f32 %v834, %v864
    %v867 = vadd.f32 %v835, %v865
    %868 = vrot.lane.b32.xlu0 %v113, 127
    %v869 = vpop.permute.xlu0 %868
    %870 = vrot.lane.b32.xlu0 %v114, 127
    %v871 = vpop.permute.xlu0 %870
    %v872 = vsel %vm796, %v869, %v871
    %v873 = vsel %vm796, %v871, %v869
    %v874 = vmul.f32 %v872, %v803
    %v875 = vmul.f32 %v873, %v807
    %s876 = sld [smem:[#allocation7 + $0x16]]
    %v877 = vstv %s876
    %v878 = vmul.f32 %v877, %v874
    %v879 = vmul.f32 %v877, %v875
    %v880 = vadd.f32 %v848, %v878
    %v881 = vadd.f32 %v849, %v879
    %s882 = sld [smem:[#allocation7 + $0x3a]]
    %v883 = vstv %s882
    %v884 = vmul.f32 %v883, %v874
    %v885 = vmul.f32 %v883, %v875
    %v886 = vadd.f32 %v854, %v884
    %v887 = vadd.f32 %v855, %v885
    %s888 = sld [smem:[#allocation7 + $0x5e]]
    %v889 = vstv %s888
    %v890 = vmul.f32 %v889, %v874
    %v891 = vmul.f32 %v889, %v875
    %v892 = vadd.f32 %v860, %v890
    %v893 = vadd.f32 %v861, %v891
    %s894 = sld [smem:[#allocation7 + $0x82]]
    %v895 = vstv %s894
    %v896 = vmul.f32 %v895, %v874
    %v897 = vmul.f32 %v895, %v875
    %v898 = vadd.f32 %v866, %v896
    %v899 = vadd.f32 %v867, %v897
    %900 = vrot.lane.b32.xlu0 %v115, 127
    %v901 = vpop.permute.xlu0 %900
    %902 = vrot.lane.b32.xlu0 %v116, 127
    %v903 = vpop.permute.xlu0 %902
    %v904 = vsel %vm796, %v901, %v903
    %v905 = vsel %vm796, %v903, %v901
    %v906 = vmul.f32 %v904, %v803
    %v907 = vmul.f32 %v905, %v807
    %s908 = sld [smem:[#allocation7 + $0x17]]
    %v909 = vstv %s908
    %v910 = vmul.f32 %v909, %v906
    %v911 = vmul.f32 %v909, %v907
    %v912 = vadd.f32 %v880, %v910
    %v913 = vadd.f32 %v881, %v911
    %s914 = sld [smem:[#allocation7 + $0x3b]]
    %v915 = vstv %s914
    %v916 = vmul.f32 %v915, %v906
    %v917 = vmul.f32 %v915, %v907
    %v918 = vadd.f32 %v886, %v916
    %v919 = vadd.f32 %v887, %v917
    %s920 = sld [smem:[#allocation7 + $0x5f]]
    %v921 = vstv %s920
    %v922 = vmul.f32 %v921, %v906
    %v923 = vmul.f32 %v921, %v907
    %v924 = vadd.f32 %v892, %v922
    %v925 = vadd.f32 %v893, %v923
    %s926 = sld [smem:[#allocation7 + $0x83]]
    %v927 = vstv %s926
    %v928 = vmul.f32 %v927, %v906
    %v929 = vmul.f32 %v927, %v907
    %v930 = vadd.f32 %v898, %v928
    %v931 = vadd.f32 %v899, %v929
    %s932 = scalar_lea.vmem [#allocation12], 6
    %v933 = vld [vmem:[%s932] ss:$8 sm:$0x3]
    %934 = vrot.lane.b32.xlu0 %v109, 113
    %v935 = vpop.permute.xlu0 %934
    %936 = vrot.lane.b32.xlu0 %v110, 113
    %v937 = vpop.permute.xlu0 %936
    %vm938 = vcmp.lt.s32.totalorder %v123, 113
    %v939 = vsel %vm938, %v935, %v937
    %v940 = vsel %vm938, %v937, %v935
    %v942 = vlaneseq
    %v943 = vshrl.u32 %v942, 7
    %v944 = vsub.s32 0, %v943
    %v945 = vrot.slane %v933, %v944
    %v946 = vlaneseq
    %v947 = vshrl.u32 %v946, 7
    %v948 = vsub.s32 1, %v947
    %v949 = vrot.slane %v933, %v948
    %v952 = vmul.f32 %v939, %v945
    %v953 = vmul.f32 %v940, %v949
    %s954 = sld [smem:[#allocation7 + $0x18]]
    %v955 = vstv %s954
    %v956 = vmul.f32 %v955, %v952
    %v957 = vmul.f32 %v955, %v953
    %v958 = vadd.f32 %v912, %v956
    %v959 = vadd.f32 %v913, %v957
    %s960 = sld [smem:[#allocation7 + $0x3c]]
    %v961 = vstv %s960
    %v962 = vmul.f32 %v961, %v952
    %v963 = vmul.f32 %v961, %v953
    %v964 = vadd.f32 %v918, %v962
    %v965 = vadd.f32 %v919, %v963
    %s966 = sld [smem:[#allocation7 + $0x60]]
    %v967 = vstv %s966
    %v968 = vmul.f32 %v967, %v952
    %v969 = vmul.f32 %v967, %v953
    %v970 = vadd.f32 %v924, %v968
    %v971 = vadd.f32 %v925, %v969
    %s972 = sld [smem:[#allocation7 + $0x84]]
    %v973 = vstv %s972
    %v974 = vmul.f32 %v973, %v952
    %v975 = vmul.f32 %v973, %v953
    %v976 = vadd.f32 %v930, %v974
    %v977 = vadd.f32 %v931, %v975
    %978 = vrot.lane.b32.xlu0 %v111, 113
    %v979 = vpop.permute.xlu0 %978
    %980 = vrot.lane.b32.xlu0 %v112, 113
    %v981 = vpop.permute.xlu0 %980
    %v982 = vsel %vm938, %v979, %v981
    %v983 = vsel %vm938, %v981, %v979
    %v984 = vmul.f32 %v982, %v945
    %v985 = vmul.f32 %v983, %v949
    %s986 = sld [smem:[#allocation7 + $0x19]]
    %v987 = vstv %s986
    %v988 = vmul.f32 %v987, %v984
    %v989 = vmul.f32 %v987, %v985
    %v990 = vadd.f32 %v958, %v988
    %v991 = vadd.f32 %v959, %v989
    %s992 = sld [smem:[#allocation7 + $0x3d]]
    %v993 = vstv %s992
    %v994 = vmul.f32 %v993, %v984
    %v995 = vmul.f32 %v993, %v985
    %v996 = vadd.f32 %v964, %v994
    %v997 = vadd.f32 %v965, %v995
    %s998 = sld [smem:[#allocation7 + $0x61]]
    %v999 = vstv %s998
    %v1000 = vmul.f32 %v999, %v984
    %v1001 = vmul.f32 %v999, %v985
    %v1002 = vadd.f32 %v970, %v1000
    %v1003 = vadd.f32 %v971, %v1001
    %s1004 = sld [smem:[#allocation7 + $0x85]]
    %v1005 = vstv %s1004
    %v1006 = vmul.f32 %v1005, %v984
    %v1007 = vmul.f32 %v1005, %v985
    %v1008 = vadd.f32 %v976, %v1006
    %v1009 = vadd.f32 %v977, %v1007
    %1010 = vrot.lane.b32.xlu0 %v113, 113
    %v1011 = vpop.permute.xlu0 %1010
    %1012 = vrot.lane.b32.xlu0 %v114, 113
    %v1013 = vpop.permute.xlu0 %1012
    %v1014 = vsel %vm938, %v1011, %v1013
    %v1015 = vsel %vm938, %v1013, %v1011
    %v1016 = vmul.f32 %v1014, %v945
    %v1017 = vmul.f32 %v1015, %v949
    %s1018 = sld [smem:[#allocation7 + $0x1a]]
    %v1019 = vstv %s1018
    %v1020 = vmul.f32 %v1019, %v1016
    %v1021 = vmul.f32 %v1019, %v1017
    %v1022 = vadd.f32 %v990, %v1020
    %v1023 = vadd.f32 %v991, %v1021
    %s1024 = sld [smem:[#allocation7 + $0x3e]]
    %v1025 = vstv %s1024
    %v1026 = vmul.f32 %v1025, %v1016
    %v1027 = vmul.f32 %v1025, %v1017
    %v1028 = vadd.f32 %v996, %v1026
    %v1029 = vadd.f32 %v997, %v1027
    %s1030 = sld [smem:[#allocation7 + $0x62]]
    %v1031 = vstv %s1030
    %v1032 = vmul.f32 %v1031, %v1016
    %v1033 = vmul.f32 %v1031, %v1017
    %v1034 = vadd.f32 %v1002, %v1032
    %v1035 = vadd.f32 %v1003, %v1033
    %s1036 = sld [smem:[#allocation7 + $0x86]]
    %v1037 = vstv %s1036
    %v1038 = vmul.f32 %v1037, %v1016
    %v1039 = vmul.f32 %v1037, %v1017
    %v1040 = vadd.f32 %v1008, %v1038
    %v1041 = vadd.f32 %v1009, %v1039
    %1042 = vrot.lane.b32.xlu0 %v115, 113
    %v1043 = vpop.permute.xlu0 %1042
    %1044 = vrot.lane.b32.xlu0 %v116, 113
    %v1045 = vpop.permute.xlu0 %1044
    %v1046 = vsel %vm938, %v1043, %v1045
    %v1047 = vsel %vm938, %v1045, %v1043
    %v1048 = vmul.f32 %v1046, %v945
    %v1049 = vmul.f32 %v1047, %v949
    %s1050 = sld [smem:[#allocation7 + $0x1b]]
    %v1051 = vstv %s1050
    %v1052 = vmul.f32 %v1051, %v1048
    %v1053 = vmul.f32 %v1051, %v1049
    %v1054 = vadd.f32 %v1022, %v1052
    %v1055 = vadd.f32 %v1023, %v1053
    %s1056 = sld [smem:[#allocation7 + $0x3f]]
    %v1057 = vstv %s1056
    %v1058 = vmul.f32 %v1057, %v1048
    %v1059 = vmul.f32 %v1057, %v1049
    %v1060 = vadd.f32 %v1028, %v1058
    %v1061 = vadd.f32 %v1029, %v1059
    %s1062 = sld [smem:[#allocation7 + $0x63]]
    %v1063 = vstv %s1062
    %v1064 = vmul.f32 %v1063, %v1048
    %v1065 = vmul.f32 %v1063, %v1049
    %v1066 = vadd.f32 %v1034, %v1064
    %v1067 = vadd.f32 %v1035, %v1065
    %s1068 = sld [smem:[#allocation7 + $0x87]]
    %v1069 = vstv %s1068
    %v1070 = vmul.f32 %v1069, %v1048
    %v1071 = vmul.f32 %v1069, %v1049
    %v1072 = vadd.f32 %v1040, %v1070
    %v1073 = vadd.f32 %v1041, %v1071
    %s1074 = scalar_lea.vmem [#allocation12], 7
    %v1075 = vld [vmem:[%s1074] ss:$8 sm:$0x3]
    %1076 = vrot.lane.b32.xlu0 %v109, 112
    %v1077 = vpop.permute.xlu0 %1076
    %1078 = vrot.lane.b32.xlu0 %v110, 112
    %v1079 = vpop.permute.xlu0 %1078
    %vm1080 = vcmp.lt.s32.totalorder %v123, 112
    %v1081 = vsel %vm1080, %v1077, %v1079
    %v1082 = vsel %vm1080, %v1079, %v1077
    %v1084 = vlaneseq
    %v1085 = vshrl.u32 %v1084, 7
    %v1086 = vsub.s32 0, %v1085
    %v1087 = vrot.slane %v1075, %v1086
    %v1088 = vlaneseq
    %v1089 = vshrl.u32 %v1088, 7
    %v1090 = vsub.s32 1, %v1089
    %v1091 = vrot.slane %v1075, %v1090
    %v1094 = vmul.f32 %v1081, %v1087
    %v1095 = vmul.f32 %v1082, %v1091
    %s1096 = sld [smem:[#allocation7 + $0x1c]]
    %v1097 = vstv %s1096
    %v1098 = vmul.f32 %v1097, %v1094
    %v1099 = vmul.f32 %v1097, %v1095
    %v1100 = vadd.f32 %v1054, %v1098
    %v1101 = vadd.f32 %v1055, %v1099
    %s1102 = sld [smem:[#allocation7 + $0x40]]
    %v1103 = vstv %s1102
    %v1104 = vmul.f32 %v1103, %v1094
    %v1105 = vmul.f32 %v1103, %v1095
    %v1106 = vadd.f32 %v1060, %v1104
    %v1107 = vadd.f32 %v1061, %v1105
    %s1108 = sld [smem:[#allocation7 + $0x64]]
    %v1109 = vstv %s1108
    %v1110 = vmul.f32 %v1109, %v1094
    %v1111 = vmul.f32 %v1109, %v1095
    %v1112 = vadd.f32 %v1066, %v1110
    %v1113 = vadd.f32 %v1067, %v1111
    %s1114 = sld [smem:[#allocation7 + $0x88]]
    %v1115 = vstv %s1114
    %v1116 = vmul.f32 %v1115, %v1094
    %v1117 = vmul.f32 %v1115, %v1095
    %v1118 = vadd.f32 %v1072, %v1116
    %v1119 = vadd.f32 %v1073, %v1117
    %1120 = vrot.lane.b32.xlu0 %v111, 112
    %v1121 = vpop.permute.xlu0 %1120
    %1122 = vrot.lane.b32.xlu0 %v112, 112
    %v1123 = vpop.permute.xlu0 %1122
    %v1124 = vsel %vm1080, %v1121, %v1123
    %v1125 = vsel %vm1080, %v1123, %v1121
    %v1126 = vmul.f32 %v1124, %v1087
    %v1127 = vmul.f32 %v1125, %v1091
    %s1128 = sld [smem:[#allocation7 + $0x1d]]
    %v1129 = vstv %s1128
    %v1130 = vmul.f32 %v1129, %v1126
    %v1131 = vmul.f32 %v1129, %v1127
    %v1132 = vadd.f32 %v1100, %v1130
    %v1133 = vadd.f32 %v1101, %v1131
    %s1134 = sld [smem:[#allocation7 + $0x41]]
    %v1135 = vstv %s1134
    %v1136 = vmul.f32 %v1135, %v1126
    %v1137 = vmul.f32 %v1135, %v1127
    %v1138 = vadd.f32 %v1106, %v1136
    %v1139 = vadd.f32 %v1107, %v1137
    %s1140 = sld [smem:[#allocation7 + $0x65]]
    %v1141 = vstv %s1140
    %v1142 = vmul.f32 %v1141, %v1126
    %v1143 = vmul.f32 %v1141, %v1127
    %v1144 = vadd.f32 %v1112, %v1142
    %v1145 = vadd.f32 %v1113, %v1143
    %s1146 = sld [smem:[#allocation7 + $0x89]]
    %v1147 = vstv %s1146
    %v1148 = vmul.f32 %v1147, %v1126
    %v1149 = vmul.f32 %v1147, %v1127
    %v1150 = vadd.f32 %v1118, %v1148
    %v1151 = vadd.f32 %v1119, %v1149
    %1152 = vrot.lane.b32.xlu0 %v113, 112
    %v1153 = vpop.permute.xlu0 %1152
    %1154 = vrot.lane.b32.xlu0 %v114, 112
    %v1155 = vpop.permute.xlu0 %1154
    %v1156 = vsel %vm1080, %v1153, %v1155
    %v1157 = vsel %vm1080, %v1155, %v1153
    %v1158 = vmul.f32 %v1156, %v1087
    %v1159 = vmul.f32 %v1157, %v1091
    %s1160 = sld [smem:[#allocation7 + $0x1e]]
    %v1161 = vstv %s1160
    %v1162 = vmul.f32 %v1161, %v1158
    %v1163 = vmul.f32 %v1161, %v1159
    %v1164 = vadd.f32 %v1132, %v1162
    %v1165 = vadd.f32 %v1133, %v1163
    %s1166 = sld [smem:[#allocation7 + $0x42]]
    %v1167 = vstv %s1166
    %v1168 = vmul.f32 %v1167, %v1158
    %v1169 = vmul.f32 %v1167, %v1159
    %v1170 = vadd.f32 %v1138, %v1168
    %v1171 = vadd.f32 %v1139, %v1169
    %s1172 = sld [smem:[#allocation7 + $0x66]]
    %v1173 = vstv %s1172
    %v1174 = vmul.f32 %v1173, %v1158
    %v1175 = vmul.f32 %v1173, %v1159
    %v1176 = vadd.f32 %v1144, %v1174
    %v1177 = vadd.f32 %v1145, %v1175
    %s1178 = sld [smem:[#allocation7 + $0x8a]]
    %v1179 = vstv %s1178
    %v1180 = vmul.f32 %v1179, %v1158
    %v1181 = vmul.f32 %v1179, %v1159
    %v1182 = vadd.f32 %v1150, %v1180
    %v1183 = vadd.f32 %v1151, %v1181
    %1184 = vrot.lane.b32.xlu0 %v115, 112
    %v1185 = vpop.permute.xlu0 %1184
    %1186 = vrot.lane.b32.xlu0 %v116, 112
    %v1187 = vpop.permute.xlu0 %1186
    %v1188 = vsel %vm1080, %v1185, %v1187
    %v1189 = vsel %vm1080, %v1187, %v1185
    %v1190 = vmul.f32 %v1188, %v1087
    %v1191 = vmul.f32 %v1189, %v1091
    %s1192 = sld [smem:[#allocation7 + $0x1f]]
    %v1193 = vstv %s1192
    %v1194 = vmul.f32 %v1193, %v1190
    %v1195 = vmul.f32 %v1193, %v1191
    %v1196 = vadd.f32 %v1164, %v1194
    %v1197 = vadd.f32 %v1165, %v1195
    %s1198 = sld [smem:[#allocation7 + $0x43]]
    %v1199 = vstv %s1198
    %v1200 = vmul.f32 %v1199, %v1190
    %v1201 = vmul.f32 %v1199, %v1191
    %v1202 = vadd.f32 %v1170, %v1200
    %v1203 = vadd.f32 %v1171, %v1201
    %s1204 = sld [smem:[#allocation7 + $0x67]]
    %v1205 = vstv %s1204
    %v1206 = vmul.f32 %v1205, %v1190
    %v1207 = vmul.f32 %v1205, %v1191
    %v1208 = vadd.f32 %v1176, %v1206
    %v1209 = vadd.f32 %v1177, %v1207
    %s1210 = sld [smem:[#allocation7 + $0x8b]]
    %v1211 = vstv %s1210
    %v1212 = vmul.f32 %v1211, %v1190
    %v1213 = vmul.f32 %v1211, %v1191
    %v1214 = vadd.f32 %v1182, %v1212
    %v1215 = vadd.f32 %v1183, %v1213
    %s1216 = scalar_lea.vmem [#allocation12], 16
    %v1217 = vld [vmem:[%s1216] ss:$8 sm:$0x3]
    %1218 = vrot.lane.b32.xlu0 %v109, 111
    %v1219 = vpop.permute.xlu0 %1218
    %1220 = vrot.lane.b32.xlu0 %v110, 111
    %v1221 = vpop.permute.xlu0 %1220
    %vm1222 = vcmp.lt.s32.totalorder %v123, 111
    %v1223 = vsel %vm1222, %v1219, %v1221
    %v1224 = vsel %vm1222, %v1221, %v1219
    %v1226 = vlaneseq
    %v1227 = vshrl.u32 %v1226, 7
    %v1228 = vsub.s32 0, %v1227
    %v1229 = vrot.slane %v1217, %v1228
    %v1230 = vlaneseq
    %v1231 = vshrl.u32 %v1230, 7
    %v1232 = vsub.s32 1, %v1231
    %v1233 = vrot.slane %v1217, %v1232
    %v1236 = vmul.f32 %v1223, %v1229
    %v1237 = vmul.f32 %v1224, %v1233
    %s1238 = sld [smem:[#allocation7 + $0x20]]
    %v1239 = vstv %s1238
    %v1240 = vmul.f32 %v1239, %v1236
    %v1241 = vmul.f32 %v1239, %v1237
    %v1242 = vadd.f32 %v1196, %v1240
    %v1243 = vadd.f32 %v1197, %v1241
    %s1244 = sld [smem:[#allocation7 + $0x44]]
    %v1245 = vstv %s1244
    %v1246 = vmul.f32 %v1245, %v1236
    %v1247 = vmul.f32 %v1245, %v1237
    %v1248 = vadd.f32 %v1202, %v1246
    %v1249 = vadd.f32 %v1203, %v1247
    %s1250 = sld [smem:[#allocation7 + $0x68]]
    %v1251 = vstv %s1250
    %v1252 = vmul.f32 %v1251, %v1236
    %v1253 = vmul.f32 %v1251, %v1237
    %v1254 = vadd.f32 %v1208, %v1252
    %v1255 = vadd.f32 %v1209, %v1253
    %s1256 = sld [smem:[#allocation7 + $0x8c]]
    %v1257 = vstv %s1256
    %v1258 = vmul.f32 %v1257, %v1236
    %v1259 = vmul.f32 %v1257, %v1237
    %v1260 = vadd.f32 %v1214, %v1258
    %v1261 = vadd.f32 %v1215, %v1259
    %1262 = vrot.lane.b32.xlu0 %v111, 111
    %v1263 = vpop.permute.xlu0 %1262
    %1264 = vrot.lane.b32.xlu0 %v112, 111
    %v1265 = vpop.permute.xlu0 %1264
    %v1266 = vsel %vm1222, %v1263, %v1265
    %v1267 = vsel %vm1222, %v1265, %v1263
    %v1268 = vmul.f32 %v1266, %v1229
    %v1269 = vmul.f32 %v1267, %v1233
    %s1270 = sld [smem:[#allocation7 + $0x21]]
    %v1271 = vstv %s1270
    %v1272 = vmul.f32 %v1271, %v1268
    %v1273 = vmul.f32 %v1271, %v1269
    %v1274 = vadd.f32 %v1242, %v1272
    %v1275 = vadd.f32 %v1243, %v1273
    %s1276 = sld [smem:[#allocation7 + $0x45]]
    %v1277 = vstv %s1276
    %v1278 = vmul.f32 %v1277, %v1268
    %v1279 = vmul.f32 %v1277, %v1269
    %v1280 = vadd.f32 %v1248, %v1278
    %v1281 = vadd.f32 %v1249, %v1279
    %s1282 = sld [smem:[#allocation7 + $0x69]]
    %v1283 = vstv %s1282
    %v1284 = vmul.f32 %v1283, %v1268
    %v1285 = vmul.f32 %v1283, %v1269
    %v1286 = vadd.f32 %v1254, %v1284
    %v1287 = vadd.f32 %v1255, %v1285
    %s1288 = sld [smem:[#allocation7 + $0x8d]]
    %v1289 = vstv %s1288
    %v1290 = vmul.f32 %v1289, %v1268
    %v1291 = vmul.f32 %v1289, %v1269
    %v1292 = vadd.f32 %v1260, %v1290
    %v1293 = vadd.f32 %v1261, %v1291
    %1294 = vrot.lane.b32.xlu0 %v113, 111
    %v1295 = vpop.permute.xlu0 %1294
    %1296 = vrot.lane.b32.xlu0 %v114, 111
    %v1297 = vpop.permute.xlu0 %1296
    %v1298 = vsel %vm1222, %v1295, %v1297
    %v1299 = vsel %vm1222, %v1297, %v1295
    %v1300 = vmul.f32 %v1298, %v1229
    %v1301 = vmul.f32 %v1299, %v1233
    %s1302 = sld [smem:[#allocation7 + $0x22]]
    %v1303 = vstv %s1302
    %v1304 = vmul.f32 %v1303, %v1300
    %v1305 = vmul.f32 %v1303, %v1301
    %v1306 = vadd.f32 %v1274, %v1304
    %v1307 = vadd.f32 %v1275, %v1305
    %s1308 = sld [smem:[#allocation7 + $0x46]]
    %v1309 = vstv %s1308
    %v1310 = vmul.f32 %v1309, %v1300
    %v1311 = vmul.f32 %v1309, %v1301
    %v1312 = vadd.f32 %v1280, %v1310
    %v1313 = vadd.f32 %v1281, %v1311
    %s1314 = sld [smem:[#allocation7 + $0x6a]]
    %v1315 = vstv %s1314
    %v1316 = vmul.f32 %v1315, %v1300
    %v1317 = vmul.f32 %v1315, %v1301
    %v1318 = vadd.f32 %v1286, %v1316
    %v1319 = vadd.f32 %v1287, %v1317
    %s1320 = sld [smem:[#allocation7 + $0x8e]]
    %v1321 = vstv %s1320
    %v1322 = vmul.f32 %v1321, %v1300
    %v1323 = vmul.f32 %v1321, %v1301
    %v1324 = vadd.f32 %v1292, %v1322
    %v1325 = vadd.f32 %v1293, %v1323
    %1326 = vrot.lane.b32.xlu0 %v115, 111
    %v1327 = vpop.permute.xlu0 %1326
    %1328 = vrot.lane.b32.xlu0 %v116, 111
    %v1329 = vpop.permute.xlu0 %1328
    %v1330 = vsel %vm1222, %v1327, %v1329
    %v1331 = vsel %vm1222, %v1329, %v1327
    %v1332 = vmul.f32 %v1330, %v1229
    %v1333 = vmul.f32 %v1331, %v1233
    %s1334 = sld [smem:[#allocation7 + $0x23]]
    %v1335 = vstv %s1334
    %v1336 = vmul.f32 %v1335, %v1332
    %v1337 = vmul.f32 %v1335, %v1333
    %v1338 = vadd.f32 %v1306, %v1336
    %v1339 = vadd.f32 %v1307, %v1337
    %s1340 = sld [smem:[#allocation7 + $0x47]]
    %v1341 = vstv %s1340
    %v1342 = vmul.f32 %v1341, %v1332
    %v1343 = vmul.f32 %v1341, %v1333
    %v1344 = vadd.f32 %v1312, %v1342
    %v1345 = vadd.f32 %v1313, %v1343
    %s1346 = sld [smem:[#allocation7 + $0x6b]]
    %v1347 = vstv %s1346
    %v1348 = vmul.f32 %v1347, %v1332
    %v1349 = vmul.f32 %v1347, %v1333
    %v1350 = vadd.f32 %v1318, %v1348
    %v1351 = vadd.f32 %v1319, %v1349
    %s1352 = sld [smem:[#allocation7 + $0x8f]]
    %v1353 = vstv %s1352
    %v1354 = vmul.f32 %v1353, %v1332
    %v1355 = vmul.f32 %v1353, %v1333
    %v1356 = vadd.f32 %v1324, %v1354
    %v1357 = vadd.f32 %v1325, %v1355
    %v1358 = vmax.f32 %v1338, 0.0
    %v1359 = vmax.f32 %v1339, 0.0
    %v1360 = vmax.f32 %v1344, 0.0
    %v1361 = vmax.f32 %v1345, 0.0
    %v1362 = vmax.f32 %v1350, 0.0
    %v1363 = vmax.f32 %v1351, 0.0
    %v1364 = vmax.f32 %v1356, 0.0
    %v1365 = vmax.f32 %v1357, 0.0
    %1366 = vrot.lane.b32.xlu0 %v1358, 17
    %v1367 = vpop.permute.xlu0 %1366
    %1368 = vrot.lane.b32.xlu0 %v1359, 17
    %v1369 = vpop.permute.xlu0 %1368
    %v1370 = vsel %vm124, %v1367, %v1369
    %v1371 = vsel %vm124, %v1369, %v1367
    %v1372 = vmul.f32 %v1371, %v131
    %v1373 = vmul.f32 %v1370, %v135
    %s1374 = sld [smem:[#allocation9]]
    %v1375 = vstv %s1374
    %v1376 = vmul.f32 %v1375, %v1372
    %v1377 = vmul.f32 %v1375, %v1373
    %s1378 = sld [smem:[#allocation11]]
    %v1379 = vstv %s1378
    %v1380 = vadd.f32 %v1376, %v1379
    %v1381 = vadd.f32 %v1377, %v1379
    %s1382 = sld [smem:[#allocation9 + $0x24]]
    %v1383 = vstv %s1382
    %v1384 = vmul.f32 %v1383, %v1372
    %v1385 = vmul.f32 %v1383, %v1373
    %s1386 = sld [smem:[#allocation11 + $0x1]]
    %v1387 = vstv %s1386
    %v1388 = vadd.f32 %v1384, %v1387
    %v1389 = vadd.f32 %v1385, %v1387
    %s1390 = sld [smem:[#allocation9 + $0x48]]
    %v1391 = vstv %s1390
    %v1392 = vmul.f32 %v1391, %v1372
    %v1393 = vmul.f32 %v1391, %v1373
    %s1394 = sld [smem:[#allocation11 + $0x2]]
    %v1395 = vstv %s1394
    %v1396 = vadd.f32 %v1392, %v1395
    %v1397 = vadd.f32 %v1393, %v1395
    %s1398 = sld [smem:[#allocation9 + $0x6c]]
    %v1399 = vstv %s1398
    %v1400 = vmul.f32 %v1399, %v1372
    %v1401 = vmul.f32 %v1399, %v1373
    %s1402 = sld [smem:[#allocation11 + $0x3]]
    %v1403 = vstv %s1402
    %v1404 = vadd.f32 %v1400, %v1403
    %v1405 = vadd.f32 %v1401, %v1403
    %1406 = vrot.lane.b32.xlu0 %v1360, 17
    %v1407 = vpop.permute.xlu0 %1406
    %1408 = vrot.lane.b32.xlu0 %v1361, 17
    %v1409 = vpop.permute.xlu0 %1408
    %v1410 = vsel %vm124, %v1407, %v1409
    %v1411 = vsel %vm124, %v1409, %v1407
    %v1412 = vmul.f32 %v1411, %v131
    %v1413 = vmul.f32 %v1410, %v135
    %s1414 = sld [smem:[#allocation9 + $0x1]]
    %v1415 = vstv %s1414
    %v1416 = vmul.f32 %v1415, %v1412
    %v1417 = vmul.f32 %v1415, %v1413
    %v1418 = vadd.f32 %v1380, %v1416
    %v1419 = vadd.f32 %v1381, %v1417
    %s1420 = sld [smem:[#allocation9 + $0x25]]
    %v1421 = vstv %s1420
    %v1422 = vmul.f32 %v1421, %v1412
    %v1423 = vmul.f32 %v1421, %v1413
    %v1424 = vadd.f32 %v1388, %v1422
    %v1425 = vadd.f32 %v1389, %v1423
    %s1426 = sld [smem:[#allocation9 + $0x49]]
    %v1427 = vstv %s1426
    %v1428 = vmul.f32 %v1427, %v1412
    %v1429 = vmul.f32 %v1427, %v1413
    %v1430 = vadd.f32 %v1396, %v1428
    %v1431 = vadd.f32 %v1397, %v1429
    %s1432 = sld [smem:[#allocation9 + $0x6d]]
    %v1433 = vstv %s1432
    %v1434 = vmul.f32 %v1433, %v1412
    %v1435 = vmul.f32 %v1433, %v1413
    %v1436 = vadd.f32 %v1404, %v1434
    %v1437 = vadd.f32 %v1405, %v1435
    %1438 = vrot.lane.b32.xlu0 %v1362, 17
    %v1439 = vpop.permute.xlu0 %1438
    %1440 = vrot.lane.b32.xlu0 %v1363, 17
    %v1441 = vpop.permute.xlu0 %1440
    %v1442 = vsel %vm124, %v1439, %v1441
    %v1443 = vsel %vm124, %v1441, %v1439
    %v1444 = vmul.f32 %v1443, %v131
    %v1445 = vmul.f32 %v1442, %v135
    %s1446 = sld [smem:[#allocation9 + $0x2]]
    %v1447 = vstv %s1446
    %v1448 = vmul.f32 %v1447, %v1444
    %v1449 = vmul.f32 %v1447, %v1445
    %v1450 = vadd.f32 %v1418, %v1448
    %v1451 = vadd.f32 %v1419, %v1449
    %s1452 = sld [smem:[#allocation9 + $0x26]]
    %v1453 = vstv %s1452
    %v1454 = vmul.f32 %v1453, %v1444
    %v1455 = vmul.f32 %v1453, %v1445
    %v1456 = vadd.f32 %v1424, %v1454
    %v1457 = vadd.f32 %v1425, %v1455
    %s1458 = sld [smem:[#allocation9 + $0x4a]]
    %v1459 = vstv %s1458
    %v1460 = vmul.f32 %v1459, %v1444
    %v1461 = vmul.f32 %v1459, %v1445
    %v1462 = vadd.f32 %v1430, %v1460
    %v1463 = vadd.f32 %v1431, %v1461
    %s1464 = sld [smem:[#allocation9 + $0x6e]]
    %v1465 = vstv %s1464
    %v1466 = vmul.f32 %v1465, %v1444
    %v1467 = vmul.f32 %v1465, %v1445
    %v1468 = vadd.f32 %v1436, %v1466
    %v1469 = vadd.f32 %v1437, %v1467
    %1470 = vrot.lane.b32.xlu0 %v1364, 17
    %v1471 = vpop.permute.xlu0 %1470
    %1472 = vrot.lane.b32.xlu0 %v1365, 17
    %v1473 = vpop.permute.xlu0 %1472
    %v1474 = vsel %vm124, %v1471, %v1473
    %v1475 = vsel %vm124, %v1473, %v1471
    %v1476 = vmul.f32 %v1475, %v131
    %v1477 = vmul.f32 %v1474, %v135
    %s1478 = sld [smem:[#allocation9 + $0x3]]
    %v1479 = vstv %s1478
    %v1480 = vmul.f32 %v1479, %v1476
    %v1481 = vmul.f32 %v1479, %v1477
    %v1482 = vadd.f32 %v1450, %v1480
    %v1483 = vadd.f32 %v1451, %v1481
    %s1484 = sld [smem:[#allocation9 + $0x27]]
    %v1485 = vstv %s1484
    %v1486 = vmul.f32 %v1485, %v1476
    %v1487 = vmul.f32 %v1485, %v1477
    %v1488 = vadd.f32 %v1456, %v1486
    %v1489 = vadd.f32 %v1457, %v1487
    %s1490 = sld [smem:[#allocation9 + $0x4b]]
    %v1491 = vstv %s1490
    %v1492 = vmul.f32 %v1491, %v1476
    %v1493 = vmul.f32 %v1491, %v1477
    %v1494 = vadd.f32 %v1462, %v1492
    %v1495 = vadd.f32 %v1463, %v1493
    %s1496 = sld [smem:[#allocation9 + $0x6f]]
    %v1497 = vstv %s1496
    %v1498 = vmul.f32 %v1497, %v1476
    %v1499 = vmul.f32 %v1497, %v1477
    %v1500 = vadd.f32 %v1468, %v1498
    %v1501 = vadd.f32 %v1469, %v1499
    %1502 = vrot.lane.b32.xlu0 %v1358, 16
    %v1503 = vpop.permute.xlu0 %1502
    %1504 = vrot.lane.b32.xlu0 %v1359, 16
    %v1505 = vpop.permute.xlu0 %1504
    %v1506 = vsel %vm274, %v1503, %v1505
    %v1507 = vsel %vm274, %v1505, %v1503
    %v1508 = vmul.f32 %v1507, %v281
    %v1509 = vmul.f32 %v1506, %v285
    %s1510 = sld [smem:[#allocation9 + $0x4]]
    %v1511 = vstv %s1510
    %v1512 = vmul.f32 %v1511, %v1508
    %v1513 = vmul.f32 %v1511, %v1509
    %v1514 = vadd.f32 %v1482, %v1512
    %v1515 = vadd.f32 %v1483, %v1513
    %s1516 = sld [smem:[#allocation9 + $0x28]]
    %v1517 = vstv %s1516
    %v1518 = vmul.f32 %v1517, %v1508
    %v1519 = vmul.f32 %v1517, %v1509
    %v1520 = vadd.f32 %v1488, %v1518
    %v1521 = vadd.f32 %v1489, %v1519
    %s1522 = sld [smem:[#allocation9 + $0x4c]]
    %v1523 = vstv %s1522
    %v1524 = vmul.f32 %v1523, %v1508
    %v1525 = vmul.f32 %v1523, %v1509
    %v1526 = vadd.f32 %v1494, %v1524
    %v1527 = vadd.f32 %v1495, %v1525
    %s1528 = sld [smem:[#allocation9 + $0x70]]
    %v1529 = vstv %s1528
    %v1530 = vmul.f32 %v1529, %v1508
    %v1531 = vmul.f32 %v1529, %v1509
    %v1532 = vadd.f32 %v1500, %v1530
    %v1533 = vadd.f32 %v1501, %v1531
    %1534 = vrot.lane.b32.xlu0 %v1360, 16
    %v1535 = vpop.permute.xlu0 %1534
    %1536 = vrot.lane.b32.xlu0 %v1361, 16
    %v1537 = vpop.permute.xlu0 %1536
    %v1538 = vsel %vm274, %v1535, %v1537
    %v1539 = vsel %vm274, %v1537, %v1535
    %v1540 = vmul.f32 %v1539, %v281
    %v1541 = vmul.f32 %v1538, %v285
    %s1542 = sld [smem:[#allocation9 + $0x5]]
    %v1543 = vstv %s1542
    %v1544 = vmul.f32 %v1543, %v1540
    %v1545 = vmul.f32 %v1543, %v1541
    %v1546 = vadd.f32 %v1514, %v1544
    %v1547 = vadd.f32 %v1515, %v1545
    %s1548 = sld [smem:[#allocation9 + $0x29]]
    %v1549 = vstv %s1548
    %v1550 = vmul.f32 %v1549, %v1540
    %v1551 = vmul.f32 %v1549, %v1541
    %v1552 = vadd.f32 %v1520, %v1550
    %v1553 = vadd.f32 %v1521, %v1551
    %s1554 = sld [smem:[#allocation9 + $0x4d]]
    %v1555 = vstv %s1554
    %v1556 = vmul.f32 %v1555, %v1540
    %v1557 = vmul.f32 %v1555, %v1541
    %v1558 = vadd.f32 %v1526, %v1556
    %v1559 = vadd.f32 %v1527, %v1557
    %s1560 = sld [smem:[#allocation9 + $0x71]]
    %v1561 = vstv %s1560
    %v1562 = vmul.f32 %v1561, %v1540
    %v1563 = vmul.f32 %v1561, %v1541
    %v1564 = vadd.f32 %v1532, %v1562
    %v1565 = vadd.f32 %v1533, %v1563
    %1566 = vrot.lane.b32.xlu0 %v1362, 16
    %v1567 = vpop.permute.xlu0 %1566
    %1568 = vrot.lane.b32.xlu0 %v1363, 16
    %v1569 = vpop.permute.xlu0 %1568
    %v1570 = vsel %vm274, %v1567, %v1569
    %v1571 = vsel %vm274, %v1569, %v1567
    %v1572 = vmul.f32 %v1571, %v281
    %v1573 = vmul.f32 %v1570, %v285
    %s1574 = sld [smem:[#allocation9 + $0x6]]
    %v1575 = vstv %s1574
    %v1576 = vmul.f32 %v1575, %v1572
    %v1577 = vmul.f32 %v1575, %v1573
    %v1578 = vadd.f32 %v1546, %v1576
    %v1579 = vadd.f32 %v1547, %v1577
    %s1580 = sld [smem:[#allocation9 + $0x2a]]
    %v1581 = vstv %s1580
    %v1582 = vmul.f32 %v1581, %v1572
    %v1583 = vmul.f32 %v1581, %v1573
    %v1584 = vadd.f32 %v1552, %v1582
    %v1585 = vadd.f32 %v1553, %v1583
    %s1586 = sld [smem:[#allocation9 + $0x4e]]
    %v1587 = vstv %s1586
    %v1588 = vmul.f32 %v1587, %v1572
    %v1589 = vmul.f32 %v1587, %v1573
    %v1590 = vadd.f32 %v1558, %v1588
    %v1591 = vadd.f32 %v1559, %v1589
    %s1592 = sld [smem:[#allocation9 + $0x72]]
    %v1593 = vstv %s1592
    %v1594 = vmul.f32 %v1593, %v1572
    %v1595 = vmul.f32 %v1593, %v1573
    %v1596 = vadd.f32 %v1564, %v1594
    %v1597 = vadd.f32 %v1565, %v1595
    %1598 = vrot.lane.b32.xlu0 %v1364, 16
    %v1599 = vpop.permute.xlu0 %1598
    %1600 = vrot.lane.b32.xlu0 %v1365, 16
    %v1601 = vpop.permute.xlu0 %1600
    %v1602 = vsel %vm274, %v1599, %v1601
    %v1603 = vsel %vm274, %v1601, %v1599
    %v1604 = vmul.f32 %v1603, %v281
    %v1605 = vmul.f32 %v1602, %v285
    %s1606 = sld [smem:[#allocation9 + $0x7]]
    %v1607 = vstv %s1606
    %v1608 = vmul.f32 %v1607, %v1604
    %v1609 = vmul.f32 %v1607, %v1605
    %v1610 = vadd.f32 %v1578, %v1608
    %v1611 = vadd.f32 %v1579, %v1609
    %s1612 = sld [smem:[#allocation9 + $0x2b]]
    %v1613 = vstv %s1612
    %v1614 = vmul.f32 %v1613, %v1604
    %v1615 = vmul.f32 %v1613, %v1605
    %v1616 = vadd.f32 %v1584, %v1614
    %v1617 = vadd.f32 %v1585, %v1615
    %s1618 = sld [smem:[#allocation9 + $0x4f]]
    %v1619 = vstv %s1618
    %v1620 = vmul.f32 %v1619, %v1604
    %v1621 = vmul.f32 %v1619, %v1605
    %v1622 = vadd.f32 %v1590, %v1620
    %v1623 = vadd.f32 %v1591, %v1621
    %s1624 = sld [smem:[#allocation9 + $0x73]]
    %v1625 = vstv %s1624
    %v1626 = vmul.f32 %v1625, %v1604
    %v1627 = vmul.f32 %v1625, %v1605
    %v1628 = vadd.f32 %v1596, %v1626
    %v1629 = vadd.f32 %v1597, %v1627
    %1630 = vrot.lane.b32.xlu0 %v1358, 15
    %v1631 = vpop.permute.xlu0 %1630
    %1632 = vrot.lane.b32.xlu0 %v1359, 15
    %v1633 = vpop.permute.xlu0 %1632
    %v1634 = vsel %vm416, %v1631, %v1633
    %v1635 = vsel %vm416, %v1633, %v1631
    %v1636 = vmul.f32 %v1635, %v423
    %v1637 = vmul.f32 %v1634, %v427
    %s1638 = sld [smem:[#allocation9 + $0x8]]
    %v1639 = vstv %s1638
    %v1640 = vmul.f32 %v1639, %v1636
    %v1641 = vmul.f32 %v1639, %v1637
    %v1642 = vadd.f32 %v1610, %v1640
    %v1643 = vadd.f32 %v1611, %v1641
    %s1644 = sld [smem:[#allocation9 + $0x2c]]
    %v1645 = vstv %s1644
    %v1646 = vmul.f32 %v1645, %v1636
    %v1647 = vmul.f32 %v1645, %v1637
    %v1648 = vadd.f32 %v1616, %v1646
    %v1649 = vadd.f32 %v1617, %v1647
    %s1650 = sld [smem:[#allocation9 + $0x50]]
    %v1651 = vstv %s1650
    %v1652 = vmul.f32 %v1651, %v1636
    %v1653 = vmul.f32 %v1651, %v1637
    %v1654 = vadd.f32 %v1622, %v1652
    %v1655 = vadd.f32 %v1623, %v1653
    %s1656 = sld [smem:[#allocation9 + $0x74]]
    %v1657 = vstv %s1656
    %v1658 = vmul.f32 %v1657, %v1636
    %v1659 = vmul.f32 %v1657, %v1637
    %v1660 = vadd.f32 %v1628, %v1658
    %v1661 = vadd.f32 %v1629, %v1659
    %1662 = vrot.lane.b32.xlu0 %v1360, 15
    %v1663 = vpop.permute.xlu0 %1662
    %1664 = vrot.lane.b32.xlu0 %v1361, 15
    %v1665 = vpop.permute.xlu0 %1664
    %v1666 = vsel %vm416, %v1663, %v1665
    %v1667 = vsel %vm416, %v1665, %v1663
    %v1668 = vmul.f32 %v1667, %v423
    %v1669 = vmul.f32 %v1666, %v427
    %s1670 = sld [smem:[#allocation9 + $0x9]]
    %v1671 = vstv %s1670
    %v1672 = vmul.f32 %v1671, %v1668
    %v1673 = vmul.f32 %v1671, %v1669
    %v1674 = vadd.f32 %v1642, %v1672
    %v1675 = vadd.f32 %v1643, %v1673
    %s1676 = sld [smem:[#allocation9 + $0x2d]]
    %v1677 = vstv %s1676
    %v1678 = vmul.f32 %v1677, %v1668
    %v1679 = vmul.f32 %v1677, %v1669
    %v1680 = vadd.f32 %v1648, %v1678
    %v1681 = vadd.f32 %v1649, %v1679
    %s1682 = sld [smem:[#allocation9 + $0x51]]
    %v1683 = vstv %s1682
    %v1684 = vmul.f32 %v1683, %v1668
    %v1685 = vmul.f32 %v1683, %v1669
    %v1686 = vadd.f32 %v1654, %v1684
    %v1687 = vadd.f32 %v1655, %v1685
    %s1688 = sld [smem:[#allocation9 + $0x75]]
    %v1689 = vstv %s1688
    %v1690 = vmul.f32 %v1689, %v1668
    %v1691 = vmul.f32 %v1689, %v1669
    %v1692 = vadd.f32 %v1660, %v1690
    %v1693 = vadd.f32 %v1661, %v1691
    %1694 = vrot.lane.b32.xlu0 %v1362, 15
    %v1695 = vpop.permute.xlu0 %1694
    %1696 = vrot.lane.b32.xlu0 %v1363, 15
    %v1697 = vpop.permute.xlu0 %1696
    %v1698 = vsel %vm416, %v1695, %v1697
    %v1699 = vsel %vm416, %v1697, %v1695
    %v1700 = vmul.f32 %v1699, %v423
    %v1701 = vmul.f32 %v1698, %v427
    %s1702 = sld [smem:[#allocation9 + $0xa]]
    %v1703 = vstv %s1702
    %v1704 = vmul.f32 %v1703, %v1700
    %v1705 = vmul.f32 %v1703, %v1701
    %v1706 = vadd.f32 %v1674, %v1704
    %v1707 = vadd.f32 %v1675, %v1705
    %s1708 = sld [smem:[#allocation9 + $0x2e]]
    %v1709 = vstv %s1708
    %v1710 = vmul.f32 %v1709, %v1700
    %v1711 = vmul.f32 %v1709, %v1701
    %v1712 = vadd.f32 %v1680, %v1710
    %v1713 = vadd.f32 %v1681, %v1711
    %s1714 = sld [smem:[#allocation9 + $0x52]]
    %v1715 = vstv %s1714
    %v1716 = vmul.f32 %v1715, %v1700
    %v1717 = vmul.f32 %v1715, %v1701
    %v1718 = vadd.f32 %v1686, %v1716
    %v1719 = vadd.f32 %v1687, %v1717
    %s1720 = sld [smem:[#allocation9 + $0x76]]
    %v1721 = vstv %s1720
    %v1722 = vmul.f32 %v1721, %v1700
    %v1723 = vmul.f32 %v1721, %v1701
    %v1724 = vadd.f32 %v1692, %v1722
    %v1725 = vadd.f32 %v1693, %v1723
    %1726 = vrot.lane.b32.xlu0 %v1364, 15
    %v1727 = vpop.permute.xlu0 %1726
    %1728 = vrot.lane.b32.xlu0 %v1365, 15
    %v1729 = vpop.permute.xlu0 %1728
    %v1730 = vsel %vm416, %v1727, %v1729
    %v1731 = vsel %vm416, %v1729, %v1727
    %v1732 = vmul.f32 %v1731, %v423
    %v1733 = vmul.f32 %v1730, %v427
    %s1734 = sld [smem:[#allocation9 + $0xb]]
    %v1735 = vstv %s1734
    %v1736 = vmul.f32 %v1735, %v1732
    %v1737 = vmul.f32 %v1735, %v1733
    %v1738 = vadd.f32 %v1706, %v1736
    %v1739 = vadd.f32 %v1707, %v1737
    %s1740 = sld [smem:[#allocation9 + $0x2f]]
    %v1741 = vstv %s1740
    %v1742 = vmul.f32 %v1741, %v1732
    %v1743 = vmul.f32 %v1741, %v1733
    %v1744 = vadd.f32 %v1712, %v1742
    %v1745 = vadd.f32 %v1713, %v1743
    %s1746 = sld [smem:[#allocation9 + $0x53]]
    %v1747 = vstv %s1746
    %v1748 = vmul.f32 %v1747, %v1732
    %v1749 = vmul.f32 %v1747, %v1733
    %v1750 = vadd.f32 %v1718, %v1748
    %v1751 = vadd.f32 %v1719, %v1749
    %s1752 = sld [smem:[#allocation9 + $0x77]]
    %v1753 = vstv %s1752
    %v1754 = vmul.f32 %v1753, %v1732
    %v1755 = vmul.f32 %v1753, %v1733
    %v1756 = vadd.f32 %v1724, %v1754
    %v1757 = vadd.f32 %v1725, %v1755
    %1758 = vrot.lane.b32.xlu0 %v1358, 1
    %v1759 = vpop.permute.xlu0 %1758
    %1760 = vrot.lane.b32.xlu0 %v1359, 1
    %v1761 = vpop.permute.xlu0 %1760
    %v1762 = vsel %vm558, %v1759, %v1761
    %v1763 = vsel %vm558, %v1761, %v1759
    %v1764 = vmul.f32 %v1763, %v565
    %v1765 = vmul.f32 %v1762, %v569
    %s1766 = sld [smem:[#allocation9 + $0xc]]
    %v1767 = vstv %s1766
    %v1768 = vmul.f32 %v1767, %v1764
    %v1769 = vmul.f32 %v1767, %v1765
    %v1770 = vadd.f32 %v1738, %v1768
    %v1771 = vadd.f32 %v1739, %v1769
    %s1772 = sld [smem:[#allocation9 + $0x30]]
    %v1773 = vstv %s1772
    %v1774 = vmul.f32 %v1773, %v1764
    %v1775 = vmul.f32 %v1773, %v1765
    %v1776 = vadd.f32 %v1744, %v1774
    %v1777 = vadd.f32 %v1745, %v1775
    %s1778 = sld [smem:[#allocation9 + $0x54]]
    %v1779 = vstv %s1778
    %v1780 = vmul.f32 %v1779, %v1764
    %v1781 = vmul.f32 %v1779, %v1765
    %v1782 = vadd.f32 %v1750, %v1780
    %v1783 = vadd.f32 %v1751, %v1781
    %s1784 = sld [smem:[#allocation9 + $0x78]]
    %v1785 = vstv %s1784
    %v1786 = vmul.f32 %v1785, %v1764
    %v1787 = vmul.f32 %v1785, %v1765
    %v1788 = vadd.f32 %v1756, %v1786
    %v1789 = vadd.f32 %v1757, %v1787
    %1790 = vrot.lane.b32.xlu0 %v1360, 1
    %v1791 = vpop.permute.xlu0 %1790
    %1792 = vrot.lane.b32.xlu0 %v1361, 1
    %v1793 = vpop.permute.xlu0 %1792
    %v1794 = vsel %vm558, %v1791, %v1793
    %v1795 = vsel %vm558, %v1793, %v1791
    %v1796 = vmul.f32 %v1795, %v565
    %v1797 = vmul.f32 %v1794, %v569
    %s1798 = sld [smem:[#allocation9 + $0xd]]
    %v1799 = vstv %s1798
    %v1800 = vmul.f32 %v1799, %v1796
    %v1801 = vmul.f32 %v1799, %v1797
    %v1802 = vadd.f32 %v1770, %v1800
    %v1803 = vadd.f32 %v1771, %v1801
    %s1804 = sld [smem:[#allocation9 + $0x31]]
    %v1805 = vstv %s1804
    %v1806 = vmul.f32 %v1805, %v1796
    %v1807 = vmul.f32 %v1805, %v1797
    %v1808 = vadd.f32 %v1776, %v1806
    %v1809 = vadd.f32 %v1777, %v1807
    %s1810 = sld [smem:[#allocation9 + $0x55]]
    %v1811 = vstv %s1810
    %v1812 = vmul.f32 %v1811, %v1796
    %v1813 = vmul.f32 %v1811, %v1797
    %v1814 = vadd.f32 %v1782, %v1812
    %v1815 = vadd.f32 %v1783, %v1813
    %s1816 = sld [smem:[#allocation9 + $0x79]]
    %v1817 = vstv %s1816
    %v1818 = vmul.f32 %v1817, %v1796
    %v1819 = vmul.f32 %v1817, %v1797
    %v1820 = vadd.f32 %v1788, %v1818
    %v1821 = vadd.f32 %v1789, %v1819
    %1822 = vrot.lane.b32.xlu0 %v1362, 1
    %v1823 = vpop.permute.xlu0 %1822
    %1824 = vrot.lane.b32.xlu0 %v1363, 1
    %v1825 = vpop.permute.xlu0 %1824
    %v1826 = vsel %vm558, %v1823, %v1825
    %v1827 = vsel %vm558, %v1825, %v1823
    %v1828 = vmul.f32 %v1827, %v565
    %v1829 = vmul.f32 %v1826, %v569
    %s1830 = sld [smem:[#allocation9 + $0xe]]
    %v1831 = vstv %s1830
    %v1832 = vmul.f32 %v1831, %v1828
    %v1833 = vmul.f32 %v1831, %v1829
    %v1834 = vadd.f32 %v1802, %v1832
    %v1835 = vadd.f32 %v1803, %v1833
    %s1836 = sld [smem:[#allocation9 + $0x32]]
    %v1837 = vstv %s1836
    %v1838 = vmul.f32 %v1837, %v1828
    %v1839 = vmul.f32 %v1837, %v1829
    %v1840 = vadd.f32 %v1808, %v1838
    %v1841 = vadd.f32 %v1809, %v1839
    %s1842 = sld [smem:[#allocation9 + $0x56]]
    %v1843 = vstv %s1842
    %v1844 = vmul.f32 %v1843, %v1828
    %v1845 = vmul.f32 %v1843, %v1829
    %v1846 = vadd.f32 %v1814, %v1844
    %v1847 = vadd.f32 %v1815, %v1845
    %s1848 = sld [smem:[#allocation9 + $0x7a]]
    %v1849 = vstv %s1848
    %v1850 = vmul.f32 %v1849, %v1828
    %v1851 = vmul.f32 %v1849, %v1829
    %v1852 = vadd.f32 %v1820, %v1850
    %v1853 = vadd.f32 %v1821, %v1851
    %1854 = vrot.lane.b32.xlu0 %v1364, 1
    %v1855 = vpop.permute.xlu0 %1854
    %1856 = vrot.lane.b32.xlu0 %v1365, 1
    %v1857 = vpop.permute.xlu0 %1856
    %v1858 = vsel %vm558, %v1855, %v1857
    %v1859 = vsel %vm558, %v1857, %v1855
    %v1860 = vmul.f32 %v1859, %v565
    %v1861 = vmul.f32 %v1858, %v569
    %s1862 = sld [smem:[#allocation9 + $0xf]]
    %v1863 = vstv %s1862
    %v1864 = vmul.f32 %v1863, %v1860
    %v1865 = vmul.f32 %v1863, %v1861
    %v1866 = vadd.f32 %v1834, %v1864
    %v1867 = vadd.f32 %v1835, %v1865
    %s1868 = sld [smem:[#allocation9 + $0x33]]
    %v1869 = vstv %s1868
    %v1870 = vmul.f32 %v1869, %v1860
    %v1871 = vmul.f32 %v1869, %v1861
    %v1872 = vadd.f32 %v1840, %v1870
    %v1873 = vadd.f32 %v1841, %v1871
    %s1874 = sld [smem:[#allocation9 + $0x57]]
    %v1875 = vstv %s1874
    %v1876 = vmul.f32 %v1875, %v1860
    %v1877 = vmul.f32 %v1875, %v1861
    %v1878 = vadd.f32 %v1846, %v1876
    %v1879 = vadd.f32 %v1847, %v1877
    %s1880 = sld [smem:[#allocation9 + $0x7b]]
    %v1881 = vstv %s1880
    %v1882 = vmul.f32 %v1881, %v1860
    %v1883 = vmul.f32 %v1881, %v1861
    %v1884 = vadd.f32 %v1852, %v1882
    %v1885 = vadd.f32 %v1853, %v1883
    %s1886 = sld [smem:[#allocation9 + $0x10]]
    %v1887 = vstv %s1886
    %v1888 = vmul.f32 %v1887, %v1358
    %v1889 = vmul.f32 %v1887, %v1359
    %v1890 = vadd.f32 %v1866, %v1888
    %v1891 = vadd.f32 %v1867, %v1889
    %s1892 = sld [smem:[#allocation9 + $0x34]]
    %v1893 = vstv %s1892
    %v1894 = vmul.f32 %v1893, %v1358
    %v1895 = vmul.f32 %v1893, %v1359
    %v1896 = vadd.f32 %v1872, %v1894
    %v1897 = vadd.f32 %v1873, %v1895
    %s1898 = sld [smem:[#allocation9 + $0x58]]
    %v1899 = vstv %s1898
    %v1900 = vmul.f32 %v1899, %v1358
    %v1901 = vmul.f32 %v1899, %v1359
    %v1902 = vadd.f32 %v1878, %v1900
    %v1903 = vadd.f32 %v1879, %v1901
    %s1904 = sld [smem:[#allocation9 + $0x7c]]
    %v1905 = vstv %s1904
    %v1906 = vmul.f32 %v1905, %v1358
    %v1907 = vmul.f32 %v1905, %v1359
    %v1908 = vadd.f32 %v1884, %v1906
    %v1909 = vadd.f32 %v1885, %v1907
    %s1910 = sld [smem:[#allocation9 + $0x11]]
    %v1911 = vstv %s1910
    %v1912 = vmul.f32 %v1911, %v1360
    %v1913 = vmul.f32 %v1911, %v1361
    %v1914 = vadd.f32 %v1890, %v1912
    %v1915 = vadd.f32 %v1891, %v1913
    %s1916 = sld [smem:[#allocation9 + $0x35]]
    %v1917 = vstv %s1916
    %v1918 = vmul.f32 %v1917, %v1360
    %v1919 = vmul.f32 %v1917, %v1361
    %v1920 = vadd.f32 %v1896, %v1918
    %v1921 = vadd.f32 %v1897, %v1919
    %s1922 = sld [smem:[#allocation9 + $0x59]]
    %v1923 = vstv %s1922
    %v1924 = vmul.f32 %v1923, %v1360
    %v1925 = vmul.f32 %v1923, %v1361
    %v1926 = vadd.f32 %v1902, %v1924
    %v1927 = vadd.f32 %v1903, %v1925
    %s1928 = sld [smem:[#allocation9 + $0x7d]]
    %v1929 = vstv %s1928
    %v1930 = vmul.f32 %v1929, %v1360
    %v1931 = vmul.f32 %v1929, %v1361
    %v1932 = vadd.f32 %v1908, %v1930
    %v1933 = vadd.f32 %v1909, %v1931
    %s1934 = sld [smem:[#allocation9 + $0x12]]
    %v1935 = vstv %s1934
    %v1936 = vmul.f32 %v1935, %v1362
    %v1937 = vmul.f32 %v1935, %v1363
    %v1938 = vadd.f32 %v1914, %v1936
    %v1939 = vadd.f32 %v1915, %v1937
    %s1940 = sld [smem:[#allocation9 + $0x36]]
    %v1941 = vstv %s1940
    %v1942 = vmul.f32 %v1941, %v1362
    %v1943 = vmul.f32 %v1941, %v1363
    %v1944 = vadd.f32 %v1920, %v1942
    %v1945 = vadd.f32 %v1921, %v1943
    %s1946 = sld [smem:[#allocation9 + $0x5a]]
    %v1947 = vstv %s1946
    %v1948 = vmul.f32 %v1947, %v1362
    %v1949 = vmul.f32 %v1947, %v1363
    %v1950 = vadd.f32 %v1926, %v1948
    %v1951 = vadd.f32 %v1927, %v1949
    %s1952 = sld [smem:[#allocation9 + $0x7e]]
    %v1953 = vstv %s1952
    %v1954 = vmul.f32 %v1953, %v1362
    %v1955 = vmul.f32 %v1953, %v1363
    %v1956 = vadd.f32 %v1932, %v1954
    %v1957 = vadd.f32 %v1933, %v1955
    %s1958 = sld [smem:[#allocation9 + $0x13]]
    %v1959 = vstv %s1958
    %v1960 = vmul.f32 %v1959, %v1364
    %v1961 = vmul.f32 %v1959, %v1365
    %v1962 = vadd.f32 %v1938, %v1960
    %v1963 = vadd.f32 %v1939, %v1961
    %s1964 = sld [smem:[#allocation9 + $0x37]]
    %v1965 = vstv %s1964
    %v1966 = vmul.f32 %v1965, %v1364
    %v1967 = vmul.f32 %v1965, %v1365
    %v1968 = vadd.f32 %v1944, %v1966
    %v1969 = vadd.f32 %v1945, %v1967
    %s1970 = sld [smem:[#allocation9 + $0x5b]]
    %v1971 = vstv %s1970
    %v1972 = vmul.f32 %v1971, %v1364
    %v1973 = vmul.f32 %v1971, %v1365
    %v1974 = vadd.f32 %v1950, %v1972
    %v1975 = vadd.f32 %v1951, %v1973
    %s1976 = sld [smem:[#allocation9 + $0x7f]]
    %v1977 = vstv %s1976
    %v1978 = vmul.f32 %v1977, %v1364
    %v1979 = vmul.f32 %v1977, %v1365
    %v1980 = vadd.f32 %v1956, %v1978
    %v1981 = vadd.f32 %v1957, %v1979
    %1982 = vrot.lane.b32.xlu0 %v1358, 127
    %v1983 = vpop.permute.xlu0 %1982
    %1984 = vrot.lane.b32.xlu0 %v1359, 127
    %v1985 = vpop.permute.xlu0 %1984
    %v1986 = vsel %vm796, %v1983, %v1985
    %v1987 = vsel %vm796, %v1985, %v1983
    %v1988 = vmul.f32 %v1986, %v803
    %v1989 = vmul.f32 %v1987, %v807
    %s1990 = sld [smem:[#allocation9 + $0x14]]
    %v1991 = vstv %s1990
    %v1992 = vmul.f32 %v1991, %v1988
    %v1993 = vmul.f32 %v1991, %v1989
    %v1994 = vadd.f32 %v1962, %v1992
    %v1995 = vadd.f32 %v1963, %v1993
    %s1996 = sld [smem:[#allocation9 + $0x38]]
    %v1997 = vstv %s1996
    %v1998 = vmul.f32 %v1997, %v1988
    %v1999 = vmul.f32 %v1997, %v1989
    %v2000 = vadd.f32 %v1968, %v1998
    %v2001 = vadd.f32 %v1969, %v1999
    %s2002 = sld [smem:[#allocation9 + $0x5c]]
    %v2003 = vstv %s2002
    %v2004 = vmul.f32 %v2003, %v1988
    %v2005 = vmul.f32 %v2003, %v1989
    %v2006 = vadd.f32 %v1974, %v2004
    %v2007 = vadd.f32 %v1975, %v2005
    %s2008 = sld [smem:[#allocation9 + $0x80]]
    %v2009 = vstv %s2008
    %v2010 = vmul.f32 %v2009, %v1988
    %v2011 = vmul.f32 %v2009, %v1989
    %v2012 = vadd.f32 %v1980, %v2010
    %v2013 = vadd.f32 %v1981, %v2011
    %2014 = vrot.lane.b32.xlu0 %v1360, 127
    %v2015 = vpop.permute.xlu0 %2014
    %2016 = vrot.lane.b32.xlu0 %v1361, 127
    %v2017 = vpop.permute.xlu0 %2016
    %v2018 = vsel %vm796, %v2015, %v2017
    %v2019 = vsel %vm796, %v2017, %v2015
    %v2020 = vmul.f32 %v2018, %v803
    %v2021 = vmul.f32 %v2019, %v807
    %s2022 = sld [smem:[#allocation9 + $0x15]]
    %v2023 = vstv %s2022
    %v2024 = vmul.f32 %v2023, %v2020
    %v2025 = vmul.f32 %v2023, %v2021
    %v2026 = vadd.f32 %v1994, %v2024
    %v2027 = vadd.f32 %v1995, %v2025
    %s2028 = sld [smem:[#allocation9 + $0x39]]
    %v2029 = vstv %s2028
    %v2030 = vmul.f32 %v2029, %v2020
    %v2031 = vmul.f32 %v2029, %v2021
    %v2032 = vadd.f32 %v2000, %v2030
    %v2033 = vadd.f32 %v2001, %v2031
    %s2034 = sld [smem:[#allocation9 + $0x5d]]
    %v2035 = vstv %s2034
    %v2036 = vmul.f32 %v2035, %v2020
    %v2037 = vmul.f32 %v2035, %v2021
    %v2038 = vadd.f32 %v2006, %v2036
    %v2039 = vadd.f32 %v2007, %v2037
    %s2040 = sld [smem:[#allocation9 + $0x81]]
    %v2041 = vstv %s2040
    %v2042 = vmul.f32 %v2041, %v2020
    %v2043 = vmul.f32 %v2041, %v2021
    %v2044 = vadd.f32 %v2012, %v2042
    %v2045 = vadd.f32 %v2013, %v2043
    %2046 = vrot.lane.b32.xlu0 %v1362, 127
    %v2047 = vpop.permute.xlu0 %2046
    %2048 = vrot.lane.b32.xlu0 %v1363, 127
    %v2049 = vpop.permute.xlu0 %2048
    %v2050 = vsel %vm796, %v2047, %v2049
    %v2051 = vsel %vm796, %v2049, %v2047
    %v2052 = vmul.f32 %v2050, %v803
    %v2053 = vmul.f32 %v2051, %v807
    %s2054 = sld [smem:[#allocation9 + $0x16]]
    %v2055 = vstv %s2054
    %v2056 = vmul.f32 %v2055, %v2052
    %v2057 = vmul.f32 %v2055, %v2053
    %v2058 = vadd.f32 %v2026, %v2056
    %v2059 = vadd.f32 %v2027, %v2057
    %s2060 = sld [smem:[#allocation9 + $0x3a]]
    %v2061 = vstv %s2060
    %v2062 = vmul.f32 %v2061, %v2052
    %v2063 = vmul.f32 %v2061, %v2053
    %v2064 = vadd.f32 %v2032, %v2062
    %v2065 = vadd.f32 %v2033, %v2063
    %s2066 = sld [smem:[#allocation9 + $0x5e]]
    %v2067 = vstv %s2066
    %v2068 = vmul.f32 %v2067, %v2052
    %v2069 = vmul.f32 %v2067, %v2053
    %v2070 = vadd.f32 %v2038, %v2068
    %v2071 = vadd.f32 %v2039, %v2069
    %s2072 = sld [smem:[#allocation9 + $0x82]]
    %v2073 = vstv %s2072
    %v2074 = vmul.f32 %v2073, %v2052
    %v2075 = vmul.f32 %v2073, %v2053
    %v2076 = vadd.f32 %v2044, %v2074
    %v2077 = vadd.f32 %v2045, %v2075
    %2078 = vrot.lane.b32.xlu0 %v1364, 127
    %v2079 = vpop.permute.xlu0 %2078
    %2080 = vrot.lane.b32.xlu0 %v1365, 127
    %v2081 = vpop.permute.xlu0 %2080
    %v2082 = vsel %vm796, %v2079, %v2081
    %v2083 = vsel %vm796, %v2081, %v2079
    %v2084 = vmul.f32 %v2082, %v803
    %v2085 = vmul.f32 %v2083, %v807
    %s2086 = sld [smem:[#allocation9 + $0x17]]
    %v2087 = vstv %s2086
    %v2088 = vmul.f32 %v2087, %v2084
    %v2089 = vmul.f32 %v2087, %v2085
    %v2090 = vadd.f32 %v2058, %v2088
    %v2091 = vadd.f32 %v2059, %v2089
    %s2092 = sld [smem:[#allocation9 + $0x3b]]
    %v2093 = vstv %s2092
    %v2094 = vmul.f32 %v2093, %v2084
    %v2095 = vmul.f32 %v2093, %v2085
    %v2096 = vadd.f32 %v2064, %v2094
    %v2097 = vadd.f32 %v2065, %v2095
    %s2098 = sld [smem:[#allocation9 + $0x5f]]
    %v2099 = vstv %s2098
    %v2100 = vmul.f32 %v2099, %v2084
    %v2101 = vmul.f32 %v2099, %v2085
    %v2102 = vadd.f32 %v2070, %v2100
    %v2103 = vadd.f32 %v2071, %v2101
    %s2104 = sld [smem:[#allocation9 + $0x83]]
    %v2105 = vstv %s2104
    %v2106 = vmul.f32 %v2105, %v2084
    %v2107 = vmul.f32 %v2105, %v2085
    %v2108 = vadd.f32 %v2076, %v2106
    %v2109 = vadd.f32 %v2077, %v2107
    %2110 = vrot.lane.b32.xlu0 %v1358, 113
    %v2111 = vpop.permute.xlu0 %2110
    %2112 = vrot.lane.b32.xlu0 %v1359, 113
    %v2113 = vpop.permute.xlu0 %2112
    %v2114 = vsel %vm938, %v2111, %v2113
    %v2115 = vsel %vm938, %v2113, %v2111
    %v2116 = vmul.f32 %v2114, %v945
    %v2117 = vmul.f32 %v2115, %v949
    %s2118 = sld [smem:[#allocation9 + $0x18]]
    %v2119 = vstv %s2118
    %v2120 = vmul.f32 %v2119, %v2116
    %v2121 = vmul.f32 %v2119, %v2117
    %v2122 = vadd.f32 %v2090, %v2120
    %v2123 = vadd.f32 %v2091, %v2121
    %s2124 = sld [smem:[#allocation9 + $0x3c]]
    %v2125 = vstv %s2124
    %v2126 = vmul.f32 %v2125, %v2116
    %v2127 = vmul.f32 %v2125, %v2117
    %v2128 = vadd.f32 %v2096, %v2126
    %v2129 = vadd.f32 %v2097, %v2127
    %s2130 = sld [smem:[#allocation9 + $0x60]]
    %v2131 = vstv %s2130
    %v2132 = vmul.f32 %v2131, %v2116
    %v2133 = vmul.f32 %v2131, %v2117
    %v2134 = vadd.f32 %v2102, %v2132
    %v2135 = vadd.f32 %v2103, %v2133
    %s2136 = sld [smem:[#allocation9 + $0x84]]
    %v2137 = vstv %s2136
    %v2138 = vmul.f32 %v2137, %v2116
    %v2139 = vmul.f32 %v2137, %v2117
    %v2140 = vadd.f32 %v2108, %v2138
    %v2141 = vadd.f32 %v2109, %v2139
    %2142 = vrot.lane.b32.xlu0 %v1360, 113
    %v2143 = vpop.permute.xlu0 %2142
    %2144 = vrot.lane.b32.xlu0 %v1361, 113
    %v2145 = vpop.permute.xlu0 %2144
    %v2146 = vsel %vm938, %v2143, %v2145
    %v2147 = vsel %vm938, %v2145, %v2143
    %v2148 = vmul.f32 %v2146, %v945
    %v2149 = vmul.f32 %v2147, %v949
    %s2150 = sld [smem:[#allocation9 + $0x19]]
    %v2151 = vstv %s2150
    %v2152 = vmul.f32 %v2151, %v2148
    %v2153 = vmul.f32 %v2151, %v2149
    %v2154 = vadd.f32 %v2122, %v2152
    %v2155 = vadd.f32 %v2123, %v2153
    %s2156 = sld [smem:[#allocation9 + $0x3d]]
    %v2157 = vstv %s2156
    %v2158 = vmul.f32 %v2157, %v2148
    %v2159 = vmul.f32 %v2157, %v2149
    %v2160 = vadd.f32 %v2128, %v2158
    %v2161 = vadd.f32 %v2129, %v2159
    %s2162 = sld [smem:[#allocation9 + $0x61]]
    %v2163 = vstv %s2162
    %v2164 = vmul.f32 %v2163, %v2148
    %v2165 = vmul.f32 %v2163, %v2149
    %v2166 = vadd.f32 %v2134, %v2164
    %v2167 = vadd.f32 %v2135, %v2165
    %s2168 = sld [smem:[#allocation9 + $0x85]]
    %v2169 = vstv %s2168
    %v2170 = vmul.f32 %v2169, %v2148
    %v2171 = vmul.f32 %v2169, %v2149
    %v2172 = vadd.f32 %v2140, %v2170
    %v2173 = vadd.f32 %v2141, %v2171
    %2174 = vrot.lane.b32.xlu0 %v1362, 113
    %v2175 = vpop.permute.xlu0 %2174
    %2176 = vrot.lane.b32.xlu0 %v1363, 113
    %v2177 = vpop.permute.xlu0 %2176
    %v2178 = vsel %vm938, %v2175, %v2177
    %v2179 = vsel %vm938, %v2177, %v2175
    %v2180 = vmul.f32 %v2178, %v945
    %v2181 = vmul.f32 %v2179, %v949
    %s2182 = sld [smem:[#allocation9 + $0x1a]]
    %v2183 = vstv %s2182
    %v2184 = vmul.f32 %v2183, %v2180
    %v2185 = vmul.f32 %v2183, %v2181
    %v2186 = vadd.f32 %v2154, %v2184
    %v2187 = vadd.f32 %v2155, %v2185
    %s2188 = sld [smem:[#allocation9 + $0x3e]]
    %v2189 = vstv %s2188
    %v2190 = vmul.f32 %v2189, %v2180
    %v2191 = vmul.f32 %v2189, %v2181
    %v2192 = vadd.f32 %v2160, %v2190
    %v2193 = vadd.f32 %v2161, %v2191
    %s2194 = sld [smem:[#allocation9 + $0x62]]
    %v2195 = vstv %s2194
    %v2196 = vmul.f32 %v2195, %v2180
    %v2197 = vmul.f32 %v2195, %v2181
    %v2198 = vadd.f32 %v2166, %v2196
    %v2199 = vadd.f32 %v2167, %v2197
    %s2200 = sld [smem:[#allocation9 + $0x86]]
    %v2201 = vstv %s2200
    %v2202 = vmul.f32 %v2201, %v2180
    %v2203 = vmul.f32 %v2201, %v2181
    %v2204 = vadd.f32 %v2172, %v2202
    %v2205 = vadd.f32 %v2173, %v2203
    %2206 = vrot.lane.b32.xlu0 %v1364, 113
    %v2207 = vpop.permute.xlu0 %2206
    %2208 = vrot.lane.b32.xlu0 %v1365, 113
    %v2209 = vpop.permute.xlu0 %2208
    %v2210 = vsel %vm938, %v2207, %v2209
    %v2211 = vsel %vm938, %v2209, %v2207
    %v2212 = vmul.f32 %v2210, %v945
    %v2213 = vmul.f32 %v2211, %v949
    %s2214 = sld [smem:[#allocation9 + $0x1b]]
    %v2215 = vstv %s2214
    %v2216 = vmul.f32 %v2215, %v2212
    %v2217 = vmul.f32 %v2215, %v2213
    %v2218 = vadd.f32 %v2186, %v2216
    %v2219 = vadd.f32 %v2187, %v2217
    %s2220 = sld [smem:[#allocation9 + $0x3f]]
    %v2221 = vstv %s2220
    %v2222 = vmul.f32 %v2221, %v2212
    %v2223 = vmul.f32 %v2221, %v2213
    %v2224 = vadd.f32 %v2192, %v2222
    %v2225 = vadd.f32 %v2193, %v2223
    %s2226 = sld [smem:[#allocation9 + $0x63]]
    %v2227 = vstv %s2226
    %v2228 = vmul.f32 %v2227, %v2212
    %v2229 = vmul.f32 %v2227, %v2213
    %v2230 = vadd.f32 %v2198, %v2228
    %v2231 = vadd.f32 %v2199, %v2229
    %s2232 = sld [smem:[#allocation9 + $0x87]]
    %v2233 = vstv %s2232
    %v2234 = vmul.f32 %v2233, %v2212
    %v2235 = vmul.f32 %v2233, %v2213
    %v2236 = vadd.f32 %v2204, %v2234
    %v2237 = vadd.f32 %v2205, %v2235
    %2238 = vrot.lane.b32.xlu0 %v1358, 112
    %v2239 = vpop.permute.xlu0 %2238
    %2240 = vrot.lane.b32.xlu0 %v1359, 112
    %v2241 = vpop.permute.xlu0 %2240
    %v2242 = vsel %vm1080, %v2239, %v2241
    %v2243 = vsel %vm1080, %v2241, %v2239
    %v2244 = vmul.f32 %v2242, %v1087
    %v2245 = vmul.f32 %v2243, %v1091
    %s2246 = sld [smem:[#allocation9 + $0x1c]]
    %v2247 = vstv %s2246
    %v2248 = vmul.f32 %v2247, %v2244
    %v2249 = vmul.f32 %v2247, %v2245
    %v2250 = vadd.f32 %v2218, %v2248
    %v2251 = vadd.f32 %v2219, %v2249
    %s2252 = sld [smem:[#allocation9 + $0x40]]
    %v2253 = vstv %s2252
    %v2254 = vmul.f32 %v2253, %v2244
    %v2255 = vmul.f32 %v2253, %v2245
    %v2256 = vadd.f32 %v2224, %v2254
    %v2257 = vadd.f32 %v2225, %v2255
    %s2258 = sld [smem:[#allocation9 + $0x64]]
    %v2259 = vstv %s2258
    %v2260 = vmul.f32 %v2259, %v2244
    %v2261 = vmul.f32 %v2259, %v2245
    %v2262 = vadd.f32 %v2230, %v2260
    %v2263 = vadd.f32 %v2231, %v2261
    %s2264 = sld [smem:[#allocation9 + $0x88]]
    %v2265 = vstv %s2264
    %v2266 = vmul.f32 %v2265, %v2244
    %v2267 = vmul.f32 %v2265, %v2245
    %v2268 = vadd.f32 %v2236, %v2266
    %v2269 = vadd.f32 %v2237, %v2267
    %2270 = vrot.lane.b32.xlu0 %v1360, 112
    %v2271 = vpop.permute.xlu0 %2270
    %2272 = vrot.lane.b32.xlu0 %v1361, 112
    %v2273 = vpop.permute.xlu0 %2272
    %v2274 = vsel %vm1080, %v2271, %v2273
    %v2275 = vsel %vm1080, %v2273, %v2271
    %v2276 = vmul.f32 %v2274, %v1087
    %v2277 = vmul.f32 %v2275, %v1091
    %s2278 = sld [smem:[#allocation9 + $0x1d]]
    %v2279 = vstv %s2278
    %v2280 = vmul.f32 %v2279, %v2276
    %v2281 = vmul.f32 %v2279, %v2277
    %v2282 = vadd.f32 %v2250, %v2280
    %v2283 = vadd.f32 %v2251, %v2281
    %s2284 = sld [smem:[#allocation9 + $0x41]]
    %v2285 = vstv %s2284
    %v2286 = vmul.f32 %v2285, %v2276
    %v2287 = vmul.f32 %v2285, %v2277
    %v2288 = vadd.f32 %v2256, %v2286
    %v2289 = vadd.f32 %v2257, %v2287
    %s2290 = sld [smem:[#allocation9 + $0x65]]
    %v2291 = vstv %s2290
    %v2292 = vmul.f32 %v2291, %v2276
    %v2293 = vmul.f32 %v2291, %v2277
    %v2294 = vadd.f32 %v2262, %v2292
    %v2295 = vadd.f32 %v2263, %v2293
    %s2296 = sld [smem:[#allocation9 + $0x89]]
    %v2297 = vstv %s2296
    %v2298 = vmul.f32 %v2297, %v2276
    %v2299 = vmul.f32 %v2297, %v2277
    %v2300 = vadd.f32 %v2268, %v2298
    %v2301 = vadd.f32 %v2269, %v2299
    %2302 = vrot.lane.b32.xlu0 %v1362, 112
    %v2303 = vpop.permute.xlu0 %2302
    %2304 = vrot.lane.b32.xlu0 %v1363, 112
    %v2305 = vpop.permute.xlu0 %2304
    %v2306 = vsel %vm1080, %v2303, %v2305
    %v2307 = vsel %vm1080, %v2305, %v2303
    %v2308 = vmul.f32 %v2306, %v1087
    %v2309 = vmul.f32 %v2307, %v1091
    %s2310 = sld [smem:[#allocation9 + $0x1e]]
    %v2311 = vstv %s2310
    %v2312 = vmul.f32 %v2311, %v2308
    %v2313 = vmul.f32 %v2311, %v2309
    %v2314 = vadd.f32 %v2282, %v2312
    %v2315 = vadd.f32 %v2283, %v2313
    %s2316 = sld [smem:[#allocation9 + $0x42]]
    %v2317 = vstv %s2316
    %v2318 = vmul.f32 %v2317, %v2308
    %v2319 = vmul.f32 %v2317, %v2309
    %v2320 = vadd.f32 %v2288, %v2318
    %v2321 = vadd.f32 %v2289, %v2319
    %s2322 = sld [smem:[#allocation9 + $0x66]]
    %v2323 = vstv %s2322
    %v2324 = vmul.f32 %v2323, %v2308
    %v2325 = vmul.f32 %v2323, %v2309
    %v2326 = vadd.f32 %v2294, %v2324
    %v2327 = vadd.f32 %v2295, %v2325
    %s2328 = sld [smem:[#allocation9 + $0x8a]]
    %v2329 = vstv %s2328
    %v2330 = vmul.f32 %v2329, %v2308
    %v2331 = vmul.f32 %v2329, %v2309
    %v2332 = vadd.f32 %v2300, %v2330
    %v2333 = vadd.f32 %v2301, %v2331
    %2334 = vrot.lane.b32.xlu0 %v1364, 112
    %v2335 = vpop.permute.xlu0 %2334
    %2336 = vrot.lane.b32.xlu0 %v1365, 112
    %v2337 = vpop.permute.xlu0 %2336
    %v2338 = vsel %vm1080, %v2335, %v2337
    %v2339 = vsel %vm1080, %v2337, %v2335
    %v2340 = vmul.f32 %v2338, %v1087
    %v2341 = vmul.f32 %v2339, %v1091
    %s2342 = sld [smem:[#allocation9 + $0x1f]]
    %v2343 = vstv %s2342
    %v2344 = vmul.f32 %v2343, %v2340
    %v2345 = vmul.f32 %v2343, %v2341
    %v2346 = vadd.f32 %v2314, %v2344
    %v2347 = vadd.f32 %v2315, %v2345
    %s2348 = sld [smem:[#allocation9 + $0x43]]
    %v2349 = vstv %s2348
    %v2350 = vmul.f32 %v2349, %v2340
    %v2351 = vmul.f32 %v2349, %v2341
    %v2352 = vadd.f32 %v2320, %v2350
    %v2353 = vadd.f32 %v2321, %v2351
    %s2354 = sld [smem:[#allocation9 + $0x67]]
    %v2355 = vstv %s2354
    %v2356 = vmul.f32 %v2355, %v2340
    %v2357 = vmul.f32 %v2355, %v2341
    %v2358 = vadd.f32 %v2326, %v2356
    %v2359 = vadd.f32 %v2327, %v2357
    %s2360 = sld [smem:[#allocation9 + $0x8b]]
    %v2361 = vstv %s2360
    %v2362 = vmul.f32 %v2361, %v2340
    %v2363 = vmul.f32 %v2361, %v2341
    %v2364 = vadd.f32 %v2332, %v2362
    %v2365 = vadd.f32 %v2333, %v2363
    %2366 = vrot.lane.b32.xlu0 %v1358, 111
    %v2367 = vpop.permute.xlu0 %2366
    %2368 = vrot.lane.b32.xlu0 %v1359, 111
    %v2369 = vpop.permute.xlu0 %2368
    %v2370 = vsel %vm1222, %v2367, %v2369
    %v2371 = vsel %vm1222, %v2369, %v2367
    %v2372 = vmul.f32 %v2370, %v1229
    %v2373 = vmul.f32 %v2371, %v1233
    %s2374 = sld [smem:[#allocation9 + $0x20]]
    %v2375 = vstv %s2374
    %v2376 = vmul.f32 %v2375, %v2372
    %v2377 = vmul.f32 %v2375, %v2373
    %v2378 = vadd.f32 %v2346, %v2376
    %v2379 = vadd.f32 %v2347, %v2377
    %s2380 = sld [smem:[#allocation9 + $0x44]]
    %v2381 = vstv %s2380
    %v2382 = vmul.f32 %v2381, %v2372
    %v2383 = vmul.f32 %v2381, %v2373
    %v2384 = vadd.f32 %v2352, %v2382
    %v2385 = vadd.f32 %v2353, %v2383
    %s2386 = sld [smem:[#allocation9 + $0x68]]
    %v2387 = vstv %s2386
    %v2388 = vmul.f32 %v2387, %v2372
    %v2389 = vmul.f32 %v2387, %v2373
    %v2390 = vadd.f32 %v2358, %v2388
    %v2391 = vadd.f32 %v2359, %v2389
    %s2392 = sld [smem:[#allocation9 + $0x8c]]
    %v2393 = vstv %s2392
    %v2394 = vmul.f32 %v2393, %v2372
    %v2395 = vmul.f32 %v2393, %v2373
    %v2396 = vadd.f32 %v2364, %v2394
    %v2397 = vadd.f32 %v2365, %v2395
    %2398 = vrot.lane.b32.xlu0 %v1360, 111
    %v2399 = vpop.permute.xlu0 %2398
    %2400 = vrot.lane.b32.xlu0 %v1361, 111
    %v2401 = vpop.permute.xlu0 %2400
    %v2402 = vsel %vm1222, %v2399, %v2401
    %v2403 = vsel %vm1222, %v2401, %v2399
    %v2404 = vmul.f32 %v2402, %v1229
    %v2405 = vmul.f32 %v2403, %v1233
    %s2406 = sld [smem:[#allocation9 + $0x21]]
    %v2407 = vstv %s2406
    %v2408 = vmul.f32 %v2407, %v2404
    %v2409 = vmul.f32 %v2407, %v2405
    %v2410 = vadd.f32 %v2378, %v2408
    %v2411 = vadd.f32 %v2379, %v2409
    %s2412 = sld [smem:[#allocation9 + $0x45]]
    %v2413 = vstv %s2412
    %v2414 = vmul.f32 %v2413, %v2404
    %v2415 = vmul.f32 %v2413, %v2405
    %v2416 = vadd.f32 %v2384, %v2414
    %v2417 = vadd.f32 %v2385, %v2415
    %s2418 = sld [smem:[#allocation9 + $0x69]]
    %v2419 = vstv %s2418
    %v2420 = vmul.f32 %v2419, %v2404
    %v2421 = vmul.f32 %v2419, %v2405
    %v2422 = vadd.f32 %v2390, %v2420
    %v2423 = vadd.f32 %v2391, %v2421
    %s2424 = sld [smem:[#allocation9 + $0x8d]]
    %v2425 = vstv %s2424
    %v2426 = vmul.f32 %v2425, %v2404
    %v2427 = vmul.f32 %v2425, %v2405
    %v2428 = vadd.f32 %v2396, %v2426
    %v2429 = vadd.f32 %v2397, %v2427
    %2430 = vrot.lane.b32.xlu0 %v1362, 111
    %v2431 = vpop.permute.xlu0 %2430
    %2432 = vrot.lane.b32.xlu0 %v1363, 111
    %v2433 = vpop.permute.xlu0 %2432
    %v2434 = vsel %vm1222, %v2431, %v2433
    %v2435 = vsel %vm1222, %v2433, %v2431
    %v2436 = vmul.f32 %v2434, %v1229
    %v2437 = vmul.f32 %v2435, %v1233
    %s2438 = sld [smem:[#allocation9 + $0x22]]
    %v2439 = vstv %s2438
    %v2440 = vmul.f32 %v2439, %v2436
    %v2441 = vmul.f32 %v2439, %v2437
    %v2442 = vadd.f32 %v2410, %v2440
    %v2443 = vadd.f32 %v2411, %v2441
    %s2444 = sld [smem:[#allocation9 + $0x46]]
    %v2445 = vstv %s2444
    %v2446 = vmul.f32 %v2445, %v2436
    %v2447 = vmul.f32 %v2445, %v2437
    %v2448 = vadd.f32 %v2416, %v2446
    %v2449 = vadd.f32 %v2417, %v2447
    %s2450 = sld [smem:[#allocation9 + $0x6a]]
    %v2451 = vstv %s2450
    %v2452 = vmul.f32 %v2451, %v2436
    %v2453 = vmul.f32 %v2451, %v2437
    %v2454 = vadd.f32 %v2422, %v2452
    %v2455 = vadd.f32 %v2423, %v2453
    %s2456 = sld [smem:[#allocation9 + $0x8e]]
    %v2457 = vstv %s2456
    %v2458 = vmul.f32 %v2457, %v2436
    %v2459 = vmul.f32 %v2457, %v2437
    %v2460 = vadd.f32 %v2428, %v2458
    %v2461 = vadd.f32 %v2429, %v2459
    %2462 = vrot.lane.b32.xlu0 %v1364, 111
    %v2463 = vpop.permute.xlu0 %2462
    %2464 = vrot.lane.b32.xlu0 %v1365, 111
    %v2465 = vpop.permute.xlu0 %2464
    %v2466 = vsel %vm1222, %v2463, %v2465
    %v2467 = vsel %vm1222, %v2465, %v2463
    %v2468 = vmul.f32 %v2466, %v1229
    %v2469 = vmul.f32 %v2467, %v1233
    %s2470 = sld [smem:[#allocation9 + $0x23]]
    %v2471 = vstv %s2470
    %v2472 = vmul.f32 %v2471, %v2468
    %v2473 = vmul.f32 %v2471, %v2469
    %v2474 = vadd.f32 %v2442, %v2472
    %v2475 = vadd.f32 %v2443, %v2473
    %s2476 = sld [smem:[#allocation9 + $0x47]]
    %v2477 = vstv %s2476
    %v2478 = vmul.f32 %v2477, %v2468
    %v2479 = vmul.f32 %v2477, %v2469
    %v2480 = vadd.f32 %v2448, %v2478
    %v2481 = vadd.f32 %v2449, %v2479
    %s2482 = sld [smem:[#allocation9 + $0x6b]]
    %v2483 = vstv %s2482
    %v2484 = vmul.f32 %v2483, %v2468
    %v2485 = vmul.f32 %v2483, %v2469
    %v2486 = vadd.f32 %v2454, %v2484
    %v2487 = vadd.f32 %v2455, %v2485
    %s2488 = sld [smem:[#allocation9 + $0x8f]]
    %v2489 = vstv %s2488
    %v2490 = vmul.f32 %v2489, %v2468
    %v2491 = vmul.f32 %v2489, %v2469
    %v2492 = vadd.f32 %v2460, %v2490
    %v2493 = vadd.f32 %v2461, %v2491
    %v2494 = vadd.f32 %v2474, %v98
    %v2495 = vadd.f32 %v2475, %v99
    %2496 = vst [vmem:[#allocation14] sm:$0xff] %v2494
    %2497 = vst [vmem:[#allocation14 + $0x8] sm:$0xff] %v2495
    %v2498 = vadd.f32 %v2480, %v101
    %v2499 = vadd.f32 %v2481, %v102
    %s2500 = scalar_lea.vmem [#allocation14], 16
    %2501 = vst [vmem:[%s2500] sm:$0xff] %v2498
    %2502 = vst [vmem:[%s2500 + $0x8] sm:$0xff] %v2499
    %v2503 = vadd.f32 %v2486, %v104
    %v2504 = vadd.f32 %v2487, %v105
    %s2505 = scalar_lea.vmem [#allocation14], 32
    %2506 = vst [vmem:[%s2505] sm:$0xff] %v2503
    %2507 = vst [vmem:[%s2505 + $0x8] sm:$0xff] %v2504
    %v2508 = vadd.f32 %v2492, %v107
    %v2509 = vadd.f32 %v2493, %v108
    %s2510 = scalar_lea.vmem [#allocation14], 48
    %2511 = vst [vmem:[%s2510] sm:$0xff] %v2508
    %2512 = vst [vmem:[%s2510 + $0x8] sm:$0xff] %v2509
    // Predicated region
    $region50: #{tpu_custom_call.1} parent=1 // pred_check
      _
    $region51: #{tpu_custom_call.1} parent=1 // pred_check_branch
      %2514 = sbr.rel (0) target = $region53
    $region52: #{tpu_custom_call.1} parent=1 // pred_region
      %s2516 = ssub.s32 1024, 1024
      %2517 = vsyncadd [#allocation4], %s2516
      %s2518 = sshll.u32 [#allocation14], 4
      %s2519 = int_to_ptr.vmem [resolvable:$true] %s2518
      %2524 = dma.vmem_to_hbm [thread:$0]  %s2519, 1024, %s6, [#allocation4], 256, 256, 16
    $region53: #{tpu_custom_call.1} parent=1 // pred_fallthru
      _
    // Predicated region
    $region54: #{tpu_custom_call.1} parent=1 // pred_check
      _
    $region55: #{tpu_custom_call.1} parent=1 // pred_check_branch
      %2526 = sbr.rel (0) target = $region57
    $region56: #{tpu_custom_call.1} parent=1 // pred_region
      %2527 = dma.done [#allocation4], 1024
    $region57: #{tpu_custom_call.1} parent=1 // pred_fallthru
      _
    %2528 = vsyncpa [#allocation3], 1
    %2529 = vsyncpa [#allocation13], 1
    %2530 = vsyncpa [#allocation4], 1
    %2531 = vsyncpa [#allocation5], 1
    %2532 = vsyncpa [#allocation6], 1
    %2533 = vsyncpa [#allocation10], 1

</llo_original>
